<compile_context>
chip_gen: v6e
topology: v6e:2x2x1
jax: 0.10.0
libtpu: 0.0.40
codegen_flags: <defaults>
</compile_context>

<pallas_src>
import functools

import jax
import jax.numpy as jnp
from jax import lax
from jax.experimental import pallas as pl
from jax.experimental.pallas import tpu as pltpu

_VMEM_LIMIT = 48 * 1024 * 1024  # safe on v5e/v6e (128 MiB) and v7x (64 MiB)


# ----------------------------------------------------------------------------- pooling epilogue
def _pool_and_store(y, o_ref, yh_scr, *, pad_out):
    """MaxPool2d(2,2) of y=(TB, H, W, C) f32 value, then one store to o_ref.

    H-pool is done on the value (pairwise max over the major H axis); W-pool
    uses one small scratch + stride-2 sublane loads.  If pad_out, the pooled
    result is written into the interior of a zero halo so the next conv block
    needs no glue jnp.pad.
    """
    TB, H, W, C = y.shape
    hh, wh = H // 2, W // 2
    # H-pool (major axis): pairwise max, then stack the pooled rows.
    rows = [jnp.maximum(y[:, 2 * i:2 * i + 1], y[:, 2 * i + 1:2 * i + 2])
            for i in range(hh)]
    yh_scr[...] = jnp.concatenate(rows, axis=1)                  # (TB, hh, W, C)
    # W-pool (sublane axis): stride-2 loads from the scratch ref.
    pooled = jnp.maximum(yh_scr[:, :, pl.ds(0, wh, 2), :],
                         yh_scr[:, :, pl.ds(1, wh, 2), :])       # (TB, hh, wh, C)
    pooled = pooled.astype(o_ref.dtype)
    if pad_out:
        o_ref[...] = jnp.zeros(o_ref.shape, o_ref.dtype)         # zero halo
        o_ref[:, 1:hh + 1, 1:wh + 1, :] = pooled
    else:
        o_ref[...] = pooled


# ----------------------------------------------------------------------------- conv block 1 (cin=1)
def _conv1_kernel(pad_out, p_ref, w_ref, s_ref, b_ref, o_ref, yh_scr):
    """im2col conv (K=9) + folded BN + ReLU + MaxPool2d(2,2).

    p_ref : (TB, H, W, 9)  3x3 patches of the single-channel input (f32)
    w_ref : (9, 64)        bf16 weights, tap order (dy, dx)
    """
    TB, H, W, _ = p_ref.shape
    Cout = w_ref.shape[-1]
    n = TB * H * W
    lhs = p_ref[...].astype(jnp.bfloat16).reshape(n, 9)
    acc = jnp.dot(lhs, w_ref[...], preferred_element_type=jnp.float32)
    y = jnp.maximum(acc * s_ref[...] + b_ref[...], 0.0)          # BN(eval) + ReLU, f32
    _pool_and_store(y.reshape(TB, H, W, Cout), o_ref, yh_scr, pad_out=pad_out)


def conv1_block(patches, w, scale, bias, *, batch_tile=1, pad_out=True):
    B, H, W, _ = patches.shape
    Cout = w.shape[-1]
    tb = batch_tile
    assert B % tb == 0 and H % 2 == 0 and W % 2 == 0
    hh, wh = H // 2, W // 2
    ho, wo = (hh + 2, wh + 2) if pad_out else (hh, wh)
    kern = functools.partial(_conv1_kernel, pad_out)
    return pl.pallas_call(
        kern,
        out_shape=jax.ShapeDtypeStruct((B, ho, wo, Cout), jnp.float32),
        grid=(B // tb,),
        in_specs=[pl.BlockSpec((tb, H, W, 9), lambda i: (i, 0, 0, 0)),
                  pl.BlockSpec((9, Cout), lambda i: (0, 0)),
                  pl.BlockSpec((1, Cout), lambda i: (0, 0)),
                  pl.BlockSpec((1, Cout), lambda i: (0, 0))],
        out_specs=pl.BlockSpec((tb, ho, wo, Cout), lambda i: (i, 0, 0, 0)),
        scratch_shapes=[pltpu.VMEM((tb, hh, W, Cout), jnp.float32)],
        compiler_params=pltpu.CompilerParams(
            dimension_semantics=("parallel",),
            vmem_limit_bytes=_VMEM_LIMIT),
    )(patches, w, scale, bias)


# ----------------------------------------------------------------------------- conv blocks 2/3 (cin=64)
def _conv_block_kernel(pad_out, x_ref, w_ref, s_ref, b_ref, o_ref, yh_scr):
    """Conv2d(3x3, pad=1) + folded BN + ReLU + MaxPool2d(2,2), dx-fused matmuls.

    x_ref : (TB, H+2, W+2, C)   activation with zero halo (written by prev block)
    w_ref : (3, 3*C, Cout)      bf16 weights; w_ref[dy] rows ordered (dx, cin)
    """
    TB, Hp, Wp, C = x_ref.shape
    H, W = Hp - 2, Wp - 2
    Cout = w_ref.shape[-1]
    n = TB * H * W
    acc = None
    for dy in range(3):
        taps = [x_ref[:, dy:dy + H, dx:dx + W, :] for dx in range(3)]
        lhs = jnp.concatenate(taps, axis=-1)                     # (TB, H, W, 3C)
        lhs = lhs.astype(jnp.bfloat16).reshape(n, 3 * C)
        part = jnp.dot(lhs, w_ref[dy], preferred_element_type=jnp.float32)
        acc = part if acc is None else acc + part
    y = jnp.maximum(acc * s_ref[...] + b_ref[...], 0.0)          # BN(eval) + ReLU, f32
    _pool_and_store(y.reshape(TB, H, W, Cout), o_ref, yh_scr, pad_out=pad_out)


def conv_block(x_pad, w_fused, scale, bias, *, batch_tile=1, pad_out=True):
    B, Hp, Wp, C = x_pad.shape
    H, W = Hp - 2, Wp - 2
    Cout = w_fused.shape[-1]
    tb = batch_tile
    assert B % tb == 0 and H % 2 == 0 and W % 2 == 0
    hh, wh = H // 2, W // 2
    ho, wo = (hh + 2, wh + 2) if pad_out else (hh, wh)
    kern = functools.partial(_conv_block_kernel, pad_out)
    return pl.pallas_call(
        kern,
        out_shape=jax.ShapeDtypeStruct((B, ho, wo, Cout), jnp.float32),
        grid=(B // tb,),
        in_specs=[pl.BlockSpec((tb, Hp, Wp, C), lambda i: (i, 0, 0, 0)),
                  pl.BlockSpec((3, 3 * C, Cout), lambda i: (0, 0, 0)),
                  pl.BlockSpec((1, Cout), lambda i: (0, 0)),
                  pl.BlockSpec((1, Cout), lambda i: (0, 0))],
        out_specs=pl.BlockSpec((tb, ho, wo, Cout), lambda i: (i, 0, 0, 0)),
        scratch_shapes=[pltpu.VMEM((tb, hh, W, Cout), jnp.float32)],
        compiler_params=pltpu.CompilerParams(
            dimension_semantics=("parallel",),
            vmem_limit_bytes=_VMEM_LIMIT),
    )(x_pad, w_fused, scale, bias)


# ----------------------------------------------------------------------------- fc + pooling head
def _fc_head_kernel(B, T, z_ref, w1_ref, b1_ref, w2_ref, b2_ref, o_ref):
    """fc = Linear+ReLU+[Dropout eval]+Linear+ReLU on (B*T, F), then mean+amax over T."""
    z = z_ref[...].astype(jnp.bfloat16)                          # (B*T, F)
    h1 = jnp.maximum(
        jnp.dot(z, w1_ref[...], preferred_element_type=jnp.float32) + b1_ref[...],
        0.0)
    # Dropout(p=0.3) is identity in eval mode.
    h2 = jnp.maximum(
        jnp.dot(h1.astype(jnp.bfloat16), w2_ref[...],
                preferred_element_type=jnp.float32) + b2_ref[...],
        0.0)                                                     # (B*T, d) f32
    rows = []
    for b in range(B):
        hb = h2[b * T:(b + 1) * T]                               # (T, d)
        rows.append(jnp.mean(hb, axis=0, keepdims=True)
                    + jnp.max(hb, axis=0, keepdims=True))
    o_ref[...] = jnp.concatenate(rows, axis=0)                   # (B, d)


def fc_head(z, w1, b1, w2, b2, B, T):
    d = w1.shape[1]
    kern = functools.partial(_fc_head_kernel, B, T)
    return pl.pallas_call(
        kern,
        out_shape=jax.ShapeDtypeStruct((B, d), jnp.float32),
        in_specs=[pl.BlockSpec(memory_space=pltpu.MemorySpace.VMEM)] * 5,
        out_specs=pl.BlockSpec(memory_space=pltpu.MemorySpace.VMEM),
        compiler_params=pltpu.CompilerParams(vmem_limit_bytes=_VMEM_LIMIT),
    )(z, w1, b1, w2, b2)


# ----------------------------------------------------------------------------- full forward
def audio_ntt2020_forward(x_nchw, params, *, batch_tile=1):
    """AudioNTT2020 forward. x_nchw: (B, 1, n_mels, T) float32 -> (B, d)."""
    B, _, H, W = x_nchw.shape
    assert H % 8 == 0 and W % 8 == 0, "n_mels and T must be divisible by 8"

    # Block 1: im2col patches in glue (single-channel input; avoids a C=1 lane
    # layout entering the kernel), then one (B*H*W, 9) x (9, 64) MXU matmul.
    x0 = x_nchw[:, 0]
    xp = jnp.pad(x0, ((0, 0), (1, 1), (1, 1)))
    patches = jnp.stack([xp[:, dy:dy + H, dx:dx + W]
                         for dy in range(3) for dx in range(3)], axis=-1)

    w1c, s1, c1 = params["conv"][0]
    a = conv1_block(patches, w1c, s1, c1, batch_tile=batch_tile, pad_out=True)
    w2c, s2, c2 = params["conv"][1]
    a = conv_block(a, w2c, s2, c2, batch_tile=batch_tile, pad_out=True)
    w3c, s3, c3 = params["conv"][2]
    a = conv_block(a, w3c, s3, c3, batch_tile=batch_tile, pad_out=False)

    # a: (B, D3=n_mels/8, T3=T/8, 64).  PyTorch: permute(0,3,2,1) + reshape(B,T,D*C).
    Bo, D3, T3, C = a.shape
    z = jnp.transpose(a, (0, 2, 1, 3)).reshape(Bo * T3, D3 * C)   # small glue op
    w1, b1, w2, b2 = params["fc"]
    return fc_head(z, w1, b1, w2, b2, Bo, T3)


# ----------------------------------------------------------------------------- params & reference
def make_params(key, n_mels, d):
    keys = iter(jax.random.split(key, 32))
    conv_k, conv_r = [], []
    cin = 1
    for blk in range(3):
        cout = 64
        wf = 0.1 * jax.random.normal(next(keys), (3, 3, cin, cout), jnp.float32)
        b_conv = 0.1 * jax.random.normal(next(keys), (cout,), jnp.float32)
        gamma = 1.0 + 0.1 * jax.random.normal(next(keys), (cout,), jnp.float32)
        beta = 0.1 * jax.random.normal(next(keys), (cout,), jnp.float32)
        r_mean = 0.1 * jax.random.normal(next(keys), (cout,), jnp.float32)
        r_var = jax.random.uniform(next(keys), (cout,), jnp.float32, 0.5, 1.5)
        scale = gamma / jnp.sqrt(r_var + 1e-5)                    # folded BN (eval)
        bias = scale * (b_conv - r_mean) + beta
        if blk == 0:
            wk = wf.reshape(9, cout).astype(jnp.bfloat16)         # tap order (dy, dx)
        else:
            wk = wf.reshape(3, 3 * cin, cout).astype(jnp.bfloat16)  # per-dy, (dx, cin)
        conv_k.append((wk, scale.reshape(1, cout), bias.reshape(1, cout)))
        conv_r.append((wf, scale, bias))
        cin = cout
    feat = 64 * (n_mels // 8)
    w1 = 0.1 * jax.random.normal(next(keys), (feat, d), jnp.float32)
    b1 = 0.1 * jax.random.normal(next(keys), (1, d), jnp.float32)
    w2 = 0.1 * jax.random.normal(next(keys), (d, d), jnp.float32)
    b2 = 0.1 * jax.random.normal(next(keys), (1, d), jnp.float32)
    return {"conv": conv_k, "conv_ref": conv_r,
            "fc": (w1.astype(jnp.bfloat16), b1, w2.astype(jnp.bfloat16), b2),
            "fc_ref": (w1, b1, w2, b2)}


def reference_forward(x, params):
    """Pure-JAX (XLA) reference mirroring the PyTorch module in eval mode,
    with the same bf16-matmul-input / f32-accumulation precision as the kernels."""
    bf16 = jnp.bfloat16
    y = x                                                         # (B, 1, H, W) NCHW
    for (wf, scale, bias) in params["conv_ref"]:
        cout = wf.shape[-1]
        y = lax.conv_general_dilated(
            y.astype(bf16), wf.astype(bf16), (1, 1), ((1, 1), (1, 1)),
            dimension_numbers=("NCHW", "HWIO", "NCHW"),
            preferred_element_type=jnp.float32)
        y = jnp.maximum(y * scale.reshape(1, cout, 1, 1)
                        + bias.reshape(1, cout, 1, 1), 0.0)
        y = lax.reduce_window(y, -jnp.inf, lax.max,
                              (1, 1, 2, 2), (1, 1, 2, 2), "VALID")
    y = jnp.transpose(y, (0, 3, 2, 1))                            # (B, T, D, C)
    B, T, D, C = y.shape
    w1, b1, w2, b2 = params["fc_ref"]
    h = jnp.maximum(
        jnp.dot(y.reshape(B * T, D * C).astype(bf16), w1.astype(bf16),
                preferred_element_type=jnp.float32) + b1, 0.0)
    h = jnp.maximum(
        jnp.dot(h.astype(bf16), w2.astype(bf16),
                preferred_element_type=jnp.float32) + b2, 0.0)
    h = h.reshape(B, T, -1)
    return jnp.mean(h, axis=1) + jnp.max(h, axis=1)


if __name__ == "__main__":
    B, n_mels, T, d = 2, 16, 32, 64                               # small AudioNTT2020(n_mels=16, d=64)
    key = jax.random.PRNGKey(0)
    kx, kp = jax.random.split(key)
    x = jax.random.normal(kx, (B, 1, n_mels, T), jnp.float32)     # NCHW like PyTorch
    params = make_params(kp, n_mels, d)

    fwd = jax.jit(functools.partial(audio_ntt2020_forward, batch_tile=1))
    out = jax.block_until_ready(fwd(x, params))
    assert out.ndim == 2 and out.shape == (B, d), out.shape

    ref = jax.block_until_ready(reference_forward(x, params))
    max_err = float(jnp.max(jnp.abs(out - ref)))
    assert jnp.allclose(out, ref, atol=5e-3, rtol=5e-3), f"max_err={max_err}"

    print("KERNEL_OK")
</pallas_src>

<mosaic_0001>
module attributes {stable_mosaic.version = 11 : i64} {
  func.func @_conv1_kernel(%arg0: i32, %arg1: memref<1x16x32x9xf32, #tpu.memory_space<vmem>>, %arg2: memref<9x64xbf16, #tpu.memory_space<vmem>>, %arg3: memref<1x64xf32, #tpu.memory_space<vmem>>, %arg4: memref<1x64xf32, #tpu.memory_space<vmem>>, %arg5: memref<1x10x18x64xf32, #tpu.memory_space<vmem>>, %arg6: memref<1x8x32x64xf32, #tpu.memory_space<vmem>>) attributes {dimension_semantics = [#tpu.dimension_semantics<parallel>], iteration_bounds = array<i64: 2>, scalar_prefetch = 0 : i64, scratch_operands = 1 : i64, tpu.core_type = #tpu.core_type<tc>, window_params = [{transform_indices = @transform_0, window_bounds = array<i64: 1, 16, 32, 9>}, {pipeline_mode = #tpu.pipeline_mode<synchronous>, transform_indices = @transform_1, window_bounds = array<i64: 9, 64>}, {pipeline_mode = #tpu.pipeline_mode<synchronous>, transform_indices = @transform_2, window_bounds = array<i64: 1, 64>}, {pipeline_mode = #tpu.pipeline_mode<synchronous>, transform_indices = @transform_3, window_bounds = array<i64: 1, 64>}, {transform_indices = @transform_4, window_bounds = array<i64: 1, 10, 18, 64>}]} {
    %c0 = arith.constant 0 : index
    %c0_0 = arith.constant 0 : index
    %c0_1 = arith.constant 0 : index
    %c0_2 = arith.constant 0 : index
    %0 = vector.load %arg1[%c0, %c0_0, %c0_1, %c0_2] : memref<1x16x32x9xf32, #tpu.memory_space<vmem>>, vector<1x16x32x9xf32>
    %1 = arith.truncf %0 : vector<1x16x32x9xf32> to vector<1x16x32x9xbf16>
    %2 = vector.shape_cast %1 : vector<1x16x32x9xbf16> to vector<512x9xbf16>
    %c0_3 = arith.constant 0 : index
    %c0_4 = arith.constant 0 : index
    %3 = vector.load %arg2[%c0_3, %c0_4] : memref<9x64xbf16, #tpu.memory_space<vmem>>, vector<9x64xbf16>
    %cst = arith.constant dense<0.000000e+00> : vector<512x64xf32>
    %4 = tpu.matmul %2, %3, %cst {dimension_numbers = #tpu.dot_dimension_numbers<[1], [0], [0], [1], [0, 0, 1, 1], [], []>} : vector<512x9xbf16>, vector<9x64xbf16>, vector<512x64xf32> -> vector<512x64xf32>
    %c0_5 = arith.constant 0 : index
    %c0_6 = arith.constant 0 : index
    %5 = vector.load %arg3[%c0_5, %c0_6] : memref<1x64xf32, #tpu.memory_space<vmem>>, vector<1x64xf32>
    %6 = vector.broadcast %5 : vector<1x64xf32> to vector<512x64xf32>
    %7 = arith.mulf %4, %6 : vector<512x64xf32>
    %c0_7 = arith.constant 0 : index
    %c0_8 = arith.constant 0 : index
    %8 = vector.load %arg4[%c0_7, %c0_8] : memref<1x64xf32, #tpu.memory_space<vmem>>, vector<1x64xf32>
    %9 = vector.broadcast %8 : vector<1x64xf32> to vector<512x64xf32>
    %10 = arith.addf %7, %9 : vector<512x64xf32>
    %cst_9 = arith.constant 0.000000e+00 : f32
    %11 = vector.broadcast %cst_9 : f32 to vector<512x64xf32>
    %12 = arith.maximumf %10, %11 : vector<512x64xf32>
    %13 = vector.shape_cast %12 : vector<512x64xf32> to vector<1x16x32x64xf32>
    %14 = vector.extract_strided_slice %13 {offsets = [0, 0, 0, 0], sizes = [1, 1, 32, 64], strides = [1, 1, 1, 1]} : vector<1x16x32x64xf32> to vector<1x1x32x64xf32>
    %15 = vector.extract_strided_slice %13 {offsets = [0, 1, 0, 0], sizes = [1, 1, 32, 64], strides = [1, 1, 1, 1]} : vector<1x16x32x64xf32> to vector<1x1x32x64xf32>
    %16 = arith.maximumf %14, %15 : vector<1x1x32x64xf32>
    %17 = vector.extract_strided_slice %13 {offsets = [0, 2, 0, 0], sizes = [1, 1, 32, 64], strides = [1, 1, 1, 1]} : vector<1x16x32x64xf32> to vector<1x1x32x64xf32>
    %18 = vector.extract_strided_slice %13 {offsets = [0, 3, 0, 0], sizes = [1, 1, 32, 64], strides = [1, 1, 1, 1]} : vector<1x16x32x64xf32> to vector<1x1x32x64xf32>
    %19 = arith.maximumf %17, %18 : vector<1x1x32x64xf32>
    %20 = vector.extract_strided_slice %13 {offsets = [0, 4, 0, 0], sizes = [1, 1, 32, 64], strides = [1, 1, 1, 1]} : vector<1x16x32x64xf32> to vector<1x1x32x64xf32>
    %21 = vector.extract_strided_slice %13 {offsets = [0, 5, 0, 0], sizes = [1, 1, 32, 64], strides = [1, 1, 1, 1]} : vector<1x16x32x64xf32> to vector<1x1x32x64xf32>
    %22 = arith.maximumf %20, %21 : vector<1x1x32x64xf32>
    %23 = vector.extract_strided_slice %13 {offsets = [0, 6, 0, 0], sizes = [1, 1, 32, 64], strides = [1, 1, 1, 1]} : vector<1x16x32x64xf32> to vector<1x1x32x64xf32>
    %24 = vector.extract_strided_slice %13 {offsets = [0, 7, 0, 0], sizes = [1, 1, 32, 64], strides = [1, 1, 1, 1]} : vector<1x16x32x64xf32> to vector<1x1x32x64xf32>
    %25 = arith.maximumf %23, %24 : vector<1x1x32x64xf32>
    %26 = vector.extract_strided_slice %13 {offsets = [0, 8, 0, 0], sizes = [1, 1, 32, 64], strides = [1, 1, 1, 1]} : vector<1x16x32x64xf32> to vector<1x1x32x64xf32>
    %27 = vector.extract_strided_slice %13 {offsets = [0, 9, 0, 0], sizes = [1, 1, 32, 64], strides = [1, 1, 1, 1]} : vector<1x16x32x64xf32> to vector<1x1x32x64xf32>
    %28 = arith.maximumf %26, %27 : vector<1x1x32x64xf32>
    %29 = vector.extract_strided_slice %13 {offsets = [0, 10, 0, 0], sizes = [1, 1, 32, 64], strides = [1, 1, 1, 1]} : vector<1x16x32x64xf32> to vector<1x1x32x64xf32>
    %30 = vector.extract_strided_slice %13 {offsets = [0, 11, 0, 0], sizes = [1, 1, 32, 64], strides = [1, 1, 1, 1]} : vector<1x16x32x64xf32> to vector<1x1x32x64xf32>
    %31 = arith.maximumf %29, %30 : vector<1x1x32x64xf32>
    %32 = vector.extract_strided_slice %13 {offsets = [0, 12, 0, 0], sizes = [1, 1, 32, 64], strides = [1, 1, 1, 1]} : vector<1x16x32x64xf32> to vector<1x1x32x64xf32>
    %33 = vector.extract_strided_slice %13 {offsets = [0, 13, 0, 0], sizes = [1, 1, 32, 64], strides = [1, 1, 1, 1]} : vector<1x16x32x64xf32> to vector<1x1x32x64xf32>
    %34 = arith.maximumf %32, %33 : vector<1x1x32x64xf32>
    %35 = vector.extract_strided_slice %13 {offsets = [0, 14, 0, 0], sizes = [1, 1, 32, 64], strides = [1, 1, 1, 1]} : vector<1x16x32x64xf32> to vector<1x1x32x64xf32>
    %36 = vector.extract_strided_slice %13 {offsets = [0, 15, 0, 0], sizes = [1, 1, 32, 64], strides = [1, 1, 1, 1]} : vector<1x16x32x64xf32> to vector<1x1x32x64xf32>
    %37 = arith.maximumf %35, %36 : vector<1x1x32x64xf32>
    %38 = tpu.concatenate %16, %19, %22, %25, %28, %31, %34, %37 in 1 : vector<1x1x32x64xf32>, vector<1x1x32x64xf32>, vector<1x1x32x64xf32>, vector<1x1x32x64xf32>, vector<1x1x32x64xf32>, vector<1x1x32x64xf32>, vector<1x1x32x64xf32>, vector<1x1x32x64xf32> -> vector<1x8x32x64xf32>
    %c0_10 = arith.constant 0 : index
    %c0_11 = arith.constant 0 : index
    %c0_12 = arith.constant 0 : index
    %c0_13 = arith.constant 0 : index
    %39 = vector.load %arg6[%c0_10, %c0_11, %c0_12, %c0_13] : memref<1x8x32x64xf32, #tpu.memory_space<vmem>>, vector<1x8x32x64xf32>
    tpu.vector_store %arg6[%c0_10, %c0_11, %c0_12, %c0_13], %38 {strides = array<i32>} : memref<1x8x32x64xf32, #tpu.memory_space<vmem>>, vector<1x8x32x64xf32>,
    %c0_14 = arith.constant 0 : index
    %c0_15 = arith.constant 0 : index
    %c0_16 = arith.constant 0 : index
    %c0_17 = arith.constant 0 : index
    %40 = tpu.strided_load %arg6[%c0_14, %c0_15, %c0_16, %c0_17] {strides = array<i32: 1, 1, 2, 1>} : memref<1x8x32x64xf32, #tpu.memory_space<vmem>>, vector<1x8x16x64xf32>
    %c0_18 = arith.constant 0 : index
    %c0_19 = arith.constant 0 : index
    %c1 = arith.constant 1 : index
    %c0_20 = arith.constant 0 : index
    %41 = tpu.strided_load %arg6[%c0_18, %c0_19, %c1, %c0_20] {strides = array<i32: 1, 1, 2, 1>} : memref<1x8x32x64xf32, #tpu.memory_space<vmem>>, vector<1x8x16x64xf32>
    %42 = arith.maximumf %40, %41 : vector<1x8x16x64xf32>
    %cst_21 = arith.constant 0.000000e+00 : f32
    %43 = vector.broadcast %cst_21 : f32 to vector<1x10x18x64xf32>
    %c0_22 = arith.constant 0 : index
    %c0_23 = arith.constant 0 : index
    %c0_24 = arith.constant 0 : index
    %c0_25 = arith.constant 0 : index
    %44 = vector.load %arg5[%c0_22, %c0_23, %c0_24, %c0_25] : memref<1x10x18x64xf32, #tpu.memory_space<vmem>>, vector<1x10x18x64xf32>
    tpu.vector_store %arg5[%c0_22, %c0_23, %c0_24, %c0_25], %43 {strides = array<i32>} : memref<1x10x18x64xf32, #tpu.memory_space<vmem>>, vector<1x10x18x64xf32>,
    %c0_26 = arith.constant 0 : index
    %c1_27 = arith.constant 1 : index
    %c1_28 = arith.constant 1 : index
    %c0_29 = arith.constant 0 : index
    %45 = vector.load %arg5[%c0_26, %c1_27, %c1_28, %c0_29] : memref<1x10x18x64xf32, #tpu.memory_space<vmem>>, vector<1x8x16x64xf32>
    tpu.vector_store %arg5[%c0_26, %c1_27, %c1_28, %c0_29], %42 {strides = array<i32>} : memref<1x10x18x64xf32, #tpu.memory_space<vmem>>, vector<1x8x16x64xf32>,
    return
  }
  func.func @transform_0(%arg0: i32) -> (i32, i32, i32, i32) {
    %c0_i32 = arith.constant 0 : i32
    %c0_i32_0 = arith.constant 0 : i32
    %c0_i32_1 = arith.constant 0 : i32
    %c0_i32_2 = arith.constant 0 : i32
    return %arg0, %c0_i32, %c0_i32_0, %c0_i32_1 : i32, i32, i32, i32
  }
  func.func @transform_1(%arg0: i32) -> (i32, i32) {
    %c0_i32 = arith.constant 0 : i32
    %c0_i32_0 = arith.constant 0 : i32
    %c0_i32_1 = arith.constant 0 : i32
    return %c0_i32, %c0_i32_0 : i32, i32
  }
  func.func @transform_2(%arg0: i32) -> (i32, i32) {
    %c0_i32 = arith.constant 0 : i32
    %c0_i32_0 = arith.constant 0 : i32
    %c0_i32_1 = arith.constant 0 : i32
    return %c0_i32, %c0_i32_0 : i32, i32
  }
  func.func @transform_3(%arg0: i32) -> (i32, i32) {
    %c0_i32 = arith.constant 0 : i32
    %c0_i32_0 = arith.constant 0 : i32
    %c0_i32_1 = arith.constant 0 : i32
    return %c0_i32, %c0_i32_0 : i32, i32
  }
  func.func @transform_4(%arg0: i32) -> (i32, i32, i32, i32) {
    %c0_i32 = arith.constant 0 : i32
    %c0_i32_0 = arith.constant 0 : i32
    %c0_i32_1 = arith.constant 0 : i32
    %c0_i32_2 = arith.constant 0 : i32
    return %arg0, %c0_i32, %c0_i32_0, %c0_i32_1 : i32, i32, i32, i32
  }
}

module attributes {stable_mosaic.version = 11 : i64} {
  func.func @_conv_block_kernel(%arg0: i32, %arg1: memref<1x10x18x64xf32, #tpu.memory_space<vmem>>, %arg2: memref<3x192x64xbf16, #tpu.memory_space<vmem>>, %arg3: memref<1x64xf32, #tpu.memory_space<vmem>>, %arg4: memref<1x64xf32, #tpu.memory_space<vmem>>, %arg5: memref<1x6x10x64xf32, #tpu.memory_space<vmem>>, %arg6: memref<1x4x16x64xf32, #tpu.memory_space<vmem>>) attributes {dimension_semantics = [#tpu.dimension_semantics<parallel>], iteration_bounds = array<i64: 2>, scalar_prefetch = 0 : i64, scratch_operands = 1 : i64, tpu.core_type = #tpu.core_type<tc>, window_params = [{transform_indices = @transform_0, window_bounds = array<i64: 1, 10, 18, 64>}, {pipeline_mode = #tpu.pipeline_mode<synchronous>, transform_indices = @transform_1, window_bounds = array<i64: 3, 192, 64>}, {pipeline_mode = #tpu.pipeline_mode<synchronous>, transform_indices = @transform_2, window_bounds = array<i64: 1, 64>}, {pipeline_mode = #tpu.pipeline_mode<synchronous>, transform_indices = @transform_3, window_bounds = array<i64: 1, 64>}, {transform_indices = @transform_4, window_bounds = array<i64: 1, 6, 10, 64>}]} {
    %c0 = arith.constant 0 : index
    %c0_0 = arith.constant 0 : index
    %c0_1 = arith.constant 0 : index
    %c0_2 = arith.constant 0 : index
    %0 = vector.load %arg1[%c0, %c0_0, %c0_1, %c0_2] : memref<1x10x18x64xf32, #tpu.memory_space<vmem>>, vector<1x8x16x64xf32>
    %c0_3 = arith.constant 0 : index
    %c0_4 = arith.constant 0 : index
    %c1 = arith.constant 1 : index
    %c0_5 = arith.constant 0 : index
    %1 = vector.load %arg1[%c0_3, %c0_4, %c1, %c0_5] : memref<1x10x18x64xf32, #tpu.memory_space<vmem>>, vector<1x8x16x64xf32>
    %c0_6 = arith.constant 0 : index
    %c0_7 = arith.constant 0 : index
    %c2 = arith.constant 2 : index
    %c0_8 = arith.constant 0 : index
    %2 = vector.load %arg1[%c0_6, %c0_7, %c2, %c0_8] : memref<1x10x18x64xf32, #tpu.memory_space<vmem>>, vector<1x8x16x64xf32>
    %3 = tpu.concatenate %0, %1, %2 in 3 : vector<1x8x16x64xf32>, vector<1x8x16x64xf32>, vector<1x8x16x64xf32> -> vector<1x8x16x192xf32>
    %4 = arith.truncf %3 : vector<1x8x16x192xf32> to vector<1x8x16x192xbf16>
    %5 = vector.shape_cast %4 : vector<1x8x16x192xbf16> to vector<128x192xbf16>
    %c0_9 = arith.constant 0 : index
    %c0_10 = arith.constant 0 : index
    %c0_11 = arith.constant 0 : index
    %6 = vector.load %arg2[%c0_9, %c0_10, %c0_11] : memref<3x192x64xbf16, #tpu.memory_space<vmem>>, vector<1x192x64xbf16>
    %7 = vector.shape_cast %6 : vector<1x192x64xbf16> to vector<192x64xbf16>
    %cst = arith.constant dense<0.000000e+00> : vector<128x64xf32>
    %8 = tpu.matmul %5, %7, %cst {dimension_numbers = #tpu.dot_dimension_numbers<[1], [0], [0], [1], [0, 0, 1, 1], [], []>} : vector<128x192xbf16>, vector<192x64xbf16>, vector<128x64xf32> -> vector<128x64xf32>
    %c0_12 = arith.constant 0 : index
    %c1_13 = arith.constant 1 : index
    %c0_14 = arith.constant 0 : index
    %c0_15 = arith.constant 0 : index
    %9 = vector.load %arg1[%c0_12, %c1_13, %c0_14, %c0_15] : memref<1x10x18x64xf32, #tpu.memory_space<vmem>>, vector<1x8x16x64xf32>
    %c0_16 = arith.constant 0 : index
    %c1_17 = arith.constant 1 : index
    %c1_18 = arith.constant 1 : index
    %c0_19 = arith.constant 0 : index
    %10 = vector.load %arg1[%c0_16, %c1_17, %c1_18, %c0_19] : memref<1x10x18x64xf32, #tpu.memory_space<vmem>>, vector<1x8x16x64xf32>
    %c0_20 = arith.constant 0 : index
    %c1_21 = arith.constant 1 : index
    %c2_22 = arith.constant 2 : index
    %c0_23 = arith.constant 0 : index
    %11 = vector.load %arg1[%c0_20, %c1_21, %c2_22, %c0_23] : memref<1x10x18x64xf32, #tpu.memory_space<vmem>>, vector<1x8x16x64xf32>
    %12 = tpu.concatenate %9, %10, %11 in 3 : vector<1x8x16x64xf32>, vector<1x8x16x64xf32>, vector<1x8x16x64xf32> -> vector<1x8x16x192xf32>
    %13 = arith.truncf %12 : vector<1x8x16x192xf32> to vector<1x8x16x192xbf16>
    %14 = vector.shape_cast %13 : vector<1x8x16x192xbf16> to vector<128x192xbf16>
    %c1_24 = arith.constant 1 : index
    %c0_25 = arith.constant 0 : index
    %c0_26 = arith.constant 0 : index
    %15 = vector.load %arg2[%c1_24, %c0_25, %c0_26] : memref<3x192x64xbf16, #tpu.memory_space<vmem>>, vector<1x192x64xbf16>
    %16 = vector.shape_cast %15 : vector<1x192x64xbf16> to vector<192x64xbf16>
    %cst_27 = arith.constant dense<0.000000e+00> : vector<128x64xf32>
    %17 = tpu.matmul %14, %16, %cst_27 {dimension_numbers = #tpu.dot_dimension_numbers<[1], [0], [0], [1], [0, 0, 1, 1], [], []>} : vector<128x192xbf16>, vector<192x64xbf16>, vector<128x64xf32> -> vector<128x64xf32>
    %18 = arith.addf %8, %17 : vector<128x64xf32>
    %c0_28 = arith.constant 0 : index
    %c2_29 = arith.constant 2 : index
    %c0_30 = arith.constant 0 : index
    %c0_31 = arith.constant 0 : index
    %19 = vector.load %arg1[%c0_28, %c2_29, %c0_30, %c0_31] : memref<1x10x18x64xf32, #tpu.memory_space<vmem>>, vector<1x8x16x64xf32>
    %c0_32 = arith.constant 0 : index
    %c2_33 = arith.constant 2 : index
    %c1_34 = arith.constant 1 : index
    %c0_35 = arith.constant 0 : index
    %20 = vector.load %arg1[%c0_32, %c2_33, %c1_34, %c0_35] : memref<1x10x18x64xf32, #tpu.memory_space<vmem>>, vector<1x8x16x64xf32>
    %c0_36 = arith.constant 0 : index
    %c2_37 = arith.constant 2 : index
    %c2_38 = arith.constant 2 : index
    %c0_39 = arith.constant 0 : index
    %21 = vector.load %arg1[%c0_36, %c2_37, %c2_38, %c0_39] : memref<1x10x18x64xf32, #tpu.memory_space<vmem>>, vector<1x8x16x64xf32>
    %22 = tpu.concatenate %19, %20, %21 in 3 : vector<1x8x16x64xf32>, vector<1x8x16x64xf32>, vector<1x8x16x64xf32> -> vector<1x8x16x192xf32>
    %23 = arith.truncf %22 : vector<1x8x16x192xf32> to vector<1x8x16x192xbf16>
    %24 = vector.shape_cast %23 : vector<1x8x16x192xbf16> to vector<128x192xbf16>
    %c2_40 = arith.constant 2 : index
    %c0_41 = arith.constant 0 : index
    %c0_42 = arith.constant 0 : index
    %25 = vector.load %arg2[%c2_40, %c0_41, %c0_42] : memref<3x192x64xbf16, #tpu.memory_space<vmem>>, vector<1x192x64xbf16>
    %26 = vector.shape_cast %25 : vector<1x192x64xbf16> to vector<192x64xbf16>
    %cst_43 = arith.constant dense<0.000000e+00> : vector<128x64xf32>
    %27 = tpu.matmul %24, %26, %cst_43 {dimension_numbers = #tpu.dot_dimension_numbers<[1], [0], [0], [1], [0, 0, 1, 1], [], []>} : vector<128x192xbf16>, vector<192x64xbf16>, vector<128x64xf32> -> vector<128x64xf32>
    %28 = arith.addf %18, %27 : vector<128x64xf32>
    %c0_44 = arith.constant 0 : index
    %c0_45 = arith.constant 0 : index
    %29 = vector.load %arg3[%c0_44, %c0_45] : memref<1x64xf32, #tpu.memory_space<vmem>>, vector<1x64xf32>
    %30 = vector.broadcast %29 : vector<1x64xf32> to vector<128x64xf32>
    %31 = arith.mulf %28, %30 : vector<128x64xf32>
    %c0_46 = arith.constant 0 : index
    %c0_47 = arith.constant 0 : index
    %32 = vector.load %arg4[%c0_46, %c0_47] : memref<1x64xf32, #tpu.memory_space<vmem>>, vector<1x64xf32>
    %33 = vector.broadcast %32 : vector<1x64xf32> to vector<128x64xf32>
    %34 = arith.addf %31, %33 : vector<128x64xf32>
    %cst_48 = arith.constant 0.000000e+00 : f32
    %35 = vector.broadcast %cst_48 : f32 to vector<128x64xf32>
    %36 = arith.maximumf %34, %35 : vector<128x64xf32>
    %37 = vector.shape_cast %36 : vector<128x64xf32> to vector<1x8x16x64xf32>
    %38 = vector.extract_strided_slice %37 {offsets = [0, 0, 0, 0], sizes = [1, 1, 16, 64], strides = [1, 1, 1, 1]} : vector<1x8x16x64xf32> to vector<1x1x16x64xf32>
    %39 = vector.extract_strided_slice %37 {offsets = [0, 1, 0, 0], sizes = [1, 1, 16, 64], strides = [1, 1, 1, 1]} : vector<1x8x16x64xf32> to vector<1x1x16x64xf32>
    %40 = arith.maximumf %38, %39 : vector<1x1x16x64xf32>
    %41 = vector.extract_strided_slice %37 {offsets = [0, 2, 0, 0], sizes = [1, 1, 16, 64], strides = [1, 1, 1, 1]} : vector<1x8x16x64xf32> to vector<1x1x16x64xf32>
    %42 = vector.extract_strided_slice %37 {offsets = [0, 3, 0, 0], sizes = [1, 1, 16, 64], strides = [1, 1, 1, 1]} : vector<1x8x16x64xf32> to vector<1x1x16x64xf32>
    %43 = arith.maximumf %41, %42 : vector<1x1x16x64xf32>
    %44 = vector.extract_strided_slice %37 {offsets = [0, 4, 0, 0], sizes = [1, 1, 16, 64], strides = [1, 1, 1, 1]} : vector<1x8x16x64xf32> to vector<1x1x16x64xf32>
    %45 = vector.extract_strided_slice %37 {offsets = [0, 5, 0, 0], sizes = [1, 1, 16, 64], strides = [1, 1, 1, 1]} : vector<1x8x16x64xf32> to vector<1x1x16x64xf32>
    %46 = arith.maximumf %44, %45 : vector<1x1x16x64xf32>
    %47 = vector.extract_strided_slice %37 {offsets = [0, 6, 0, 0], sizes = [1, 1, 16, 64], strides = [1, 1, 1, 1]} : vector<1x8x16x64xf32> to vector<1x1x16x64xf32>
    %48 = vector.extract_strided_slice %37 {offsets = [0, 7, 0, 0], sizes = [1, 1, 16, 64], strides = [1, 1, 1, 1]} : vector<1x8x16x64xf32> to vector<1x1x16x64xf32>
    %49 = arith.maximumf %47, %48 : vector<1x1x16x64xf32>
    %50 = tpu.concatenate %40, %43, %46, %49 in 1 : vector<1x1x16x64xf32>, vector<1x1x16x64xf32>, vector<1x1x16x64xf32>, vector<1x1x16x64xf32> -> vector<1x4x16x64xf32>
    %c0_49 = arith.constant 0 : index
    %c0_50 = arith.constant 0 : index
    %c0_51 = arith.constant 0 : index
    %c0_52 = arith.constant 0 : index
    %51 = vector.load %arg6[%c0_49, %c0_50, %c0_51, %c0_52] : memref<1x4x16x64xf32, #tpu.memory_space<vmem>>, vector<1x4x16x64xf32>
    tpu.vector_store %arg6[%c0_49, %c0_50, %c0_51, %c0_52], %50 {strides = array<i32>} : memref<1x4x16x64xf32, #tpu.memory_space<vmem>>, vector<1x4x16x64xf32>,
    %c0_53 = arith.constant 0 : index
    %c0_54 = arith.constant 0 : index
    %c0_55 = arith.constant 0 : index
    %c0_56 = arith.constant 0 : index
    %52 = tpu.strided_load %arg6[%c0_53, %c0_54, %c0_55, %c0_56] {strides = array<i32: 1, 1, 2, 1>} : memref<1x4x16x64xf32, #tpu.memory_space<vmem>>, vector<1x4x8x64xf32>
    %c0_57 = arith.constant 0 : index
    %c0_58 = arith.constant 0 : index
    %c1_59 = arith.constant 1 : index
    %c0_60 = arith.constant 0 : index
    %53 = tpu.strided_load %arg6[%c0_57, %c0_58, %c1_59, %c0_60] {strides = array<i32: 1, 1, 2, 1>} : memref<1x4x16x64xf32, #tpu.memory_space<vmem>>, vector<1x4x8x64xf32>
    %54 = arith.maximumf %52, %53 : vector<1x4x8x64xf32>
    %cst_61 = arith.constant 0.000000e+00 : f32
    %55 = vector.broadcast %cst_61 : f32 to vector<1x6x10x64xf32>
    %c0_62 = arith.constant 0 : index
    %c0_63 = arith.constant 0 : index
    %c0_64 = arith.constant 0 : index
    %c0_65 = arith.constant 0 : index
    %56 = vector.load %arg5[%c0_62, %c0_63, %c0_64, %c0_65] : memref<1x6x10x64xf32, #tpu.memory_space<vmem>>, vector<1x6x10x64xf32>
    tpu.vector_store %arg5[%c0_62, %c0_63, %c0_64, %c0_65], %55 {strides = array<i32>} : memref<1x6x10x64xf32, #tpu.memory_space<vmem>>, vector<1x6x10x64xf32>,
    %c0_66 = arith.constant 0 : index
    %c1_67 = arith.constant 1 : index
    %c1_68 = arith.constant 1 : index
    %c0_69 = arith.constant 0 : index
    %57 = vector.load %arg5[%c0_66, %c1_67, %c1_68, %c0_69] : memref<1x6x10x64xf32, #tpu.memory_space<vmem>>, vector<1x4x8x64xf32>
    tpu.vector_store %arg5[%c0_66, %c1_67, %c1_68, %c0_69], %54 {strides = array<i32>} : memref<1x6x10x64xf32, #tpu.memory_space<vmem>>, vector<1x4x8x64xf32>,
    return
  }
  func.func @transform_0(%arg0: i32) -> (i32, i32, i32, i32) {
    %c0_i32 = arith.constant 0 : i32
    %c0_i32_0 = arith.constant 0 : i32
    %c0_i32_1 = arith.constant 0 : i32
    %c0_i32_2 = arith.constant 0 : i32
    return %arg0, %c0_i32, %c0_i32_0, %c0_i32_1 : i32, i32, i32, i32
  }
  func.func @transform_1(%arg0: i32) -> (i32, i32, i32) {
    %c0_i32 = arith.constant 0 : i32
    %c0_i32_0 = arith.constant 0 : i32
    %c0_i32_1 = arith.constant 0 : i32
    %c0_i32_2 = arith.constant 0 : i32
    return %c0_i32, %c0_i32_0, %c0_i32_1 : i32, i32, i32
  }
  func.func @transform_2(%arg0: i32) -> (i32, i32) {
    %c0_i32 = arith.constant 0 : i32
    %c0_i32_0 = arith.constant 0 : i32
    %c0_i32_1 = arith.constant 0 : i32
    return %c0_i32, %c0_i32_0 : i32, i32
  }
  func.func @transform_3(%arg0: i32) -> (i32, i32) {
    %c0_i32 = arith.constant 0 : i32
    %c0_i32_0 = arith.constant 0 : i32
    %c0_i32_1 = arith.constant 0 : i32
    return %c0_i32, %c0_i32_0 : i32, i32
  }
  func.func @transform_4(%arg0: i32) -> (i32, i32, i32, i32) {
    %c0_i32 = arith.constant 0 : i32
    %c0_i32_0 = arith.constant 0 : i32
    %c0_i32_1 = arith.constant 0 : i32
    %c0_i32_2 = arith.constant 0 : i32
    return %arg0, %c0_i32, %c0_i32_0, %c0_i32_1 : i32, i32, i32, i32
  }
}

module attributes {stable_mosaic.version = 11 : i64} {
  func.func @_conv_block_kernel(%arg0: i32, %arg1: memref<1x6x10x64xf32, #tpu.memory_space<vmem>>, %arg2: memref<3x192x64xbf16, #tpu.memory_space<vmem>>, %arg3: memref<1x64xf32, #tpu.memory_space<vmem>>, %arg4: memref<1x64xf32, #tpu.memory_space<vmem>>, %arg5: memref<1x2x4x64xf32, #tpu.memory_space<vmem>>, %arg6: memref<1x2x8x64xf32, #tpu.memory_space<vmem>>) attributes {dimension_semantics = [#tpu.dimension_semantics<parallel>], iteration_bounds = array<i64: 2>, scalar_prefetch = 0 : i64, scratch_operands = 1 : i64, tpu.core_type = #tpu.core_type<tc>, window_params = [{transform_indices = @transform_0, window_bounds = array<i64: 1, 6, 10, 64>}, {pipeline_mode = #tpu.pipeline_mode<synchronous>, transform_indices = @transform_1, window_bounds = array<i64: 3, 192, 64>}, {pipeline_mode = #tpu.pipeline_mode<synchronous>, transform_indices = @transform_2, window_bounds = array<i64: 1, 64>}, {pipeline_mode = #tpu.pipeline_mode<synchronous>, transform_indices = @transform_3, window_bounds = array<i64: 1, 64>}, {transform_indices = @transform_4, window_bounds = array<i64: 1, 2, 4, 64>}]} {
    %c0 = arith.constant 0 : index
    %c0_0 = arith.constant 0 : index
    %c0_1 = arith.constant 0 : index
    %c0_2 = arith.constant 0 : index
    %0 = vector.load %arg1[%c0, %c0_0, %c0_1, %c0_2] : memref<1x6x10x64xf32, #tpu.memory_space<vmem>>, vector<1x4x8x64xf32>
    %c0_3 = arith.constant 0 : index
    %c0_4 = arith.constant 0 : index
    %c1 = arith.constant 1 : index
    %c0_5 = arith.constant 0 : index
    %1 = vector.load %arg1[%c0_3, %c0_4, %c1, %c0_5] : memref<1x6x10x64xf32, #tpu.memory_space<vmem>>, vector<1x4x8x64xf32>
    %c0_6 = arith.constant 0 : index
    %c0_7 = arith.constant 0 : index
    %c2 = arith.constant 2 : index
    %c0_8 = arith.constant 0 : index
    %2 = vector.load %arg1[%c0_6, %c0_7, %c2, %c0_8] : memref<1x6x10x64xf32, #tpu.memory_space<vmem>>, vector<1x4x8x64xf32>
    %3 = tpu.concatenate %0, %1, %2 in 3 : vector<1x4x8x64xf32>, vector<1x4x8x64xf32>, vector<1x4x8x64xf32> -> vector<1x4x8x192xf32>
    %4 = arith.truncf %3 : vector<1x4x8x192xf32> to vector<1x4x8x192xbf16>
    %5 = vector.shape_cast %4 : vector<1x4x8x192xbf16> to vector<32x192xbf16>
    %c0_9 = arith.constant 0 : index
    %c0_10 = arith.constant 0 : index
    %c0_11 = arith.constant 0 : index
    %6 = vector.load %arg2[%c0_9, %c0_10, %c0_11] : memref<3x192x64xbf16, #tpu.memory_space<vmem>>, vector<1x192x64xbf16>
    %7 = vector.shape_cast %6 : vector<1x192x64xbf16> to vector<192x64xbf16>
    %cst = arith.constant dense<0.000000e+00> : vector<32x64xf32>
    %8 = tpu.matmul %5, %7, %cst {dimension_numbers = #tpu.dot_dimension_numbers<[1], [0], [0], [1], [0, 0, 1, 1], [], []>} : vector<32x192xbf16>, vector<192x64xbf16>, vector<32x64xf32> -> vector<32x64xf32>
    %c0_12 = arith.constant 0 : index
    %c1_13 = arith.constant 1 : index
    %c0_14 = arith.constant 0 : index
    %c0_15 = arith.constant 0 : index
    %9 = vector.load %arg1[%c0_12, %c1_13, %c0_14, %c0_15] : memref<1x6x10x64xf32, #tpu.memory_space<vmem>>, vector<1x4x8x64xf32>
    %c0_16 = arith.constant 0 : index
    %c1_17 = arith.constant 1 : index
    %c1_18 = arith.constant 1 : index
    %c0_19 = arith.constant 0 : index
    %10 = vector.load %arg1[%c0_16, %c1_17, %c1_18, %c0_19] : memref<1x6x10x64xf32, #tpu.memory_space<vmem>>, vector<1x4x8x64xf32>
    %c0_20 = arith.constant 0 : index
    %c1_21 = arith.constant 1 : index
    %c2_22 = arith.constant 2 : index
    %c0_23 = arith.constant 0 : index
    %11 = vector.load %arg1[%c0_20, %c1_21, %c2_22, %c0_23] : memref<1x6x10x64xf32, #tpu.memory_space<vmem>>, vector<1x4x8x64xf32>
    %12 = tpu.concatenate %9, %10, %11 in 3 : vector<1x4x8x64xf32>, vector<1x4x8x64xf32>, vector<1x4x8x64xf32> -> vector<1x4x8x192xf32>
    %13 = arith.truncf %12 : vector<1x4x8x192xf32> to vector<1x4x8x192xbf16>
    %14 = vector.shape_cast %13 : vector<1x4x8x192xbf16> to vector<32x192xbf16>
    %c1_24 = arith.constant 1 : index
    %c0_25 = arith.constant 0 : index
    %c0_26 = arith.constant 0 : index
    %15 = vector.load %arg2[%c1_24, %c0_25, %c0_26] : memref<3x192x64xbf16, #tpu.memory_space<vmem>>, vector<1x192x64xbf16>
    %16 = vector.shape_cast %15 : vector<1x192x64xbf16> to vector<192x64xbf16>
    %cst_27 = arith.constant dense<0.000000e+00> : vector<32x64xf32>
    %17 = tpu.matmul %14, %16, %cst_27 {dimension_numbers = #tpu.dot_dimension_numbers<[1], [0], [0], [1], [0, 0, 1, 1], [], []>} : vector<32x192xbf16>, vector<192x64xbf16>, vector<32x64xf32> -> vector<32x64xf32>
    %18 = arith.addf %8, %17 : vector<32x64xf32>
    %c0_28 = arith.constant 0 : index
    %c2_29 = arith.constant 2 : index
    %c0_30 = arith.constant 0 : index
    %c0_31 = arith.constant 0 : index
    %19 = vector.load %arg1[%c0_28, %c2_29, %c0_30, %c0_31] : memref<1x6x10x64xf32, #tpu.memory_space<vmem>>, vector<1x4x8x64xf32>
    %c0_32 = arith.constant 0 : index
    %c2_33 = arith.constant 2 : index
    %c1_34 = arith.constant 1 : index
    %c0_35 = arith.constant 0 : index
    %20 = vector.load %arg1[%c0_32, %c2_33, %c1_34, %c0_35] : memref<1x6x10x64xf32, #tpu.memory_space<vmem>>, vector<1x4x8x64xf32>
    %c0_36 = arith.constant 0 : index
    %c2_37 = arith.constant 2 : index
    %c2_38 = arith.constant 2 : index
    %c0_39 = arith.constant 0 : index
    %21 = vector.load %arg1[%c0_36, %c2_37, %c2_38, %c0_39] : memref<1x6x10x64xf32, #tpu.memory_space<vmem>>, vector<1x4x8x64xf32>
    %22 = tpu.concatenate %19, %20, %21 in 3 : vector<1x4x8x64xf32>, vector<1x4x8x64xf32>, vector<1x4x8x64xf32> -> vector<1x4x8x192xf32>
    %23 = arith.truncf %22 : vector<1x4x8x192xf32> to vector<1x4x8x192xbf16>
    %24 = vector.shape_cast %23 : vector<1x4x8x192xbf16> to vector<32x192xbf16>
    %c2_40 = arith.constant 2 : index
    %c0_41 = arith.constant 0 : index
    %c0_42 = arith.constant 0 : index
    %25 = vector.load %arg2[%c2_40, %c0_41, %c0_42] : memref<3x192x64xbf16, #tpu.memory_space<vmem>>, vector<1x192x64xbf16>
    %26 = vector.shape_cast %25 : vector<1x192x64xbf16> to vector<192x64xbf16>
    %cst_43 = arith.constant dense<0.000000e+00> : vector<32x64xf32>
    %27 = tpu.matmul %24, %26, %cst_43 {dimension_numbers = #tpu.dot_dimension_numbers<[1], [0], [0], [1], [0, 0, 1, 1], [], []>} : vector<32x192xbf16>, vector<192x64xbf16>, vector<32x64xf32> -> vector<32x64xf32>
    %28 = arith.addf %18, %27 : vector<32x64xf32>
    %c0_44 = arith.constant 0 : index
    %c0_45 = arith.constant 0 : index
    %29 = vector.load %arg3[%c0_44, %c0_45] : memref<1x64xf32, #tpu.memory_space<vmem>>, vector<1x64xf32>
    %30 = vector.broadcast %29 : vector<1x64xf32> to vector<32x64xf32>
    %31 = arith.mulf %28, %30 : vector<32x64xf32>
    %c0_46 = arith.constant 0 : index
    %c0_47 = arith.constant 0 : index
    %32 = vector.load %arg4[%c0_46, %c0_47] : memref<1x64xf32, #tpu.memory_space<vmem>>, vector<1x64xf32>
    %33 = vector.broadcast %32 : vector<1x64xf32> to vector<32x64xf32>
    %34 = arith.addf %31, %33 : vector<32x64xf32>
    %cst_48 = arith.constant 0.000000e+00 : f32
    %35 = vector.broadcast %cst_48 : f32 to vector<32x64xf32>
    %36 = arith.maximumf %34, %35 : vector<32x64xf32>
    %37 = vector.shape_cast %36 : vector<32x64xf32> to vector<1x4x8x64xf32>
    %38 = vector.extract_strided_slice %37 {offsets = [0, 0, 0, 0], sizes = [1, 1, 8, 64], strides = [1, 1, 1, 1]} : vector<1x4x8x64xf32> to vector<1x1x8x64xf32>
    %39 = vector.extract_strided_slice %37 {offsets = [0, 1, 0, 0], sizes = [1, 1, 8, 64], strides = [1, 1, 1, 1]} : vector<1x4x8x64xf32> to vector<1x1x8x64xf32>
    %40 = arith.maximumf %38, %39 : vector<1x1x8x64xf32>
    %41 = vector.extract_strided_slice %37 {offsets = [0, 2, 0, 0], sizes = [1, 1, 8, 64], strides = [1, 1, 1, 1]} : vector<1x4x8x64xf32> to vector<1x1x8x64xf32>
    %42 = vector.extract_strided_slice %37 {offsets = [0, 3, 0, 0], sizes = [1, 1, 8, 64], strides = [1, 1, 1, 1]} : vector<1x4x8x64xf32> to vector<1x1x8x64xf32>
    %43 = arith.maximumf %41, %42 : vector<1x1x8x64xf32>
    %44 = tpu.concatenate %40, %43 in 1 : vector<1x1x8x64xf32>, vector<1x1x8x64xf32> -> vector<1x2x8x64xf32>
    %c0_49 = arith.constant 0 : index
    %c0_50 = arith.constant 0 : index
    %c0_51 = arith.constant 0 : index
    %c0_52 = arith.constant 0 : index
    %45 = vector.load %arg6[%c0_49, %c0_50, %c0_51, %c0_52] : memref<1x2x8x64xf32, #tpu.memory_space<vmem>>, vector<1x2x8x64xf32>
    tpu.vector_store %arg6[%c0_49, %c0_50, %c0_51, %c0_52], %44 {strides = array<i32>} : memref<1x2x8x64xf32, #tpu.memory_space<vmem>>, vector<1x2x8x64xf32>,
    %c0_53 = arith.constant 0 : index
    %c0_54 = arith.constant 0 : index
    %c0_55 = arith.constant 0 : index
    %c0_56 = arith.constant 0 : index
    %46 = tpu.strided_load %arg6[%c0_53, %c0_54, %c0_55, %c0_56] {strides = array<i32: 1, 1, 2, 1>} : memref<1x2x8x64xf32, #tpu.memory_space<vmem>>, vector<1x2x4x64xf32>
    %c0_57 = arith.constant 0 : index
    %c0_58 = arith.constant 0 : index
    %c1_59 = arith.constant 1 : index
    %c0_60 = arith.constant 0 : index
    %47 = tpu.strided_load %arg6[%c0_57, %c0_58, %c1_59, %c0_60] {strides = array<i32: 1, 1, 2, 1>} : memref<1x2x8x64xf32, #tpu.memory_space<vmem>>, vector<1x2x4x64xf32>
    %48 = arith.maximumf %46, %47 : vector<1x2x4x64xf32>
    %c0_61 = arith.constant 0 : index
    %c0_62 = arith.constant 0 : index
    %c0_63 = arith.constant 0 : index
    %c0_64 = arith.constant 0 : index
    %49 = vector.load %arg5[%c0_61, %c0_62, %c0_63, %c0_64] : memref<1x2x4x64xf32, #tpu.memory_space<vmem>>, vector<1x2x4x64xf32>
    tpu.vector_store %arg5[%c0_61, %c0_62, %c0_63, %c0_64], %48 {strides = array<i32>} : memref<1x2x4x64xf32, #tpu.memory_space<vmem>>, vector<1x2x4x64xf32>,
    return
  }
  func.func @transform_0(%arg0: i32) -> (i32, i32, i32, i32) {
    %c0_i32 = arith.constant 0 : i32
    %c0_i32_0 = arith.constant 0 : i32
    %c0_i32_1 = arith.constant 0 : i32
    %c0_i32_2 = arith.constant 0 : i32
    return %arg0, %c0_i32, %c0_i32_0, %c0_i32_1 : i32, i32, i32, i32
  }
  func.func @transform_1(%arg0: i32) -> (i32, i32, i32) {
    %c0_i32 = arith.constant 0 : i32
    %c0_i32_0 = arith.constant 0 : i32
    %c0_i32_1 = arith.constant 0 : i32
    %c0_i32_2 = arith.constant 0 : i32
    return %c0_i32, %c0_i32_0, %c0_i32_1 : i32, i32, i32
  }
  func.func @transform_2(%arg0: i32) -> (i32, i32) {
    %c0_i32 = arith.constant 0 : i32
    %c0_i32_0 = arith.constant 0 : i32
    %c0_i32_1 = arith.constant 0 : i32
    return %c0_i32, %c0_i32_0 : i32, i32
  }
  func.func @transform_3(%arg0: i32) -> (i32, i32) {
    %c0_i32 = arith.constant 0 : i32
    %c0_i32_0 = arith.constant 0 : i32
    %c0_i32_1 = arith.constant 0 : i32
    return %c0_i32, %c0_i32_0 : i32, i32
  }
  func.func @transform_4(%arg0: i32) -> (i32, i32, i32, i32) {
    %c0_i32 = arith.constant 0 : i32
    %c0_i32_0 = arith.constant 0 : i32
    %c0_i32_1 = arith.constant 0 : i32
    %c0_i32_2 = arith.constant 0 : i32
    return %arg0, %c0_i32, %c0_i32_0, %c0_i32_1 : i32, i32, i32, i32
  }
}

module attributes {stable_mosaic.version = 11 : i64} {
  func.func @_fc_head_kernel(%arg0: memref<8x128xf32, #tpu.memory_space<vmem>>, %arg1: memref<128x64xbf16, #tpu.memory_space<vmem>>, %arg2: memref<1x64xf32, #tpu.memory_space<vmem>>, %arg3: memref<64x64xbf16, #tpu.memory_space<vmem>>, %arg4: memref<1x64xf32, #tpu.memory_space<vmem>>, %arg5: memref<2x64xf32, #tpu.memory_space<vmem>>) attributes {dimension_semantics = [], scalar_prefetch = 0 : i64, scratch_operands = 0 : i64, tpu.core_type = #tpu.core_type<tc>} {
    %c0 = arith.constant 0 : index
    %c0_0 = arith.constant 0 : index
    %0 = vector.load %arg0[%c0, %c0_0] : memref<8x128xf32, #tpu.memory_space<vmem>>, vector<8x128xf32>
    %1 = arith.truncf %0 : vector<8x128xf32> to vector<8x128xbf16>
    %c0_1 = arith.constant 0 : index
    %c0_2 = arith.constant 0 : index
    %2 = vector.load %arg1[%c0_1, %c0_2] : memref<128x64xbf16, #tpu.memory_space<vmem>>, vector<128x64xbf16>
    %cst = arith.constant dense<0.000000e+00> : vector<8x64xf32>
    %3 = tpu.matmul %1, %2, %cst {dimension_numbers = #tpu.dot_dimension_numbers<[1], [0], [0], [1], [0, 0, 1, 1], [], []>} : vector<8x128xbf16>, vector<128x64xbf16>, vector<8x64xf32> -> vector<8x64xf32>
    %c0_3 = arith.constant 0 : index
    %c0_4 = arith.constant 0 : index
    %4 = vector.load %arg2[%c0_3, %c0_4] : memref<1x64xf32, #tpu.memory_space<vmem>>, vector<1x64xf32>
    %5 = vector.broadcast %4 : vector<1x64xf32> to vector<8x64xf32>
    %6 = arith.addf %3, %5 : vector<8x64xf32>
    %cst_5 = arith.constant 0.000000e+00 : f32
    %7 = vector.broadcast %cst_5 : f32 to vector<8x64xf32>
    %8 = arith.maximumf %6, %7 : vector<8x64xf32>
    %9 = arith.truncf %8 : vector<8x64xf32> to vector<8x64xbf16>
    %c0_6 = arith.constant 0 : index
    %c0_7 = arith.constant 0 : index
    %10 = vector.load %arg3[%c0_6, %c0_7] : memref<64x64xbf16, #tpu.memory_space<vmem>>, vector<64x64xbf16>
    %cst_8 = arith.constant dense<0.000000e+00> : vector<8x64xf32>
    %11 = tpu.matmul %9, %10, %cst_8 {dimension_numbers = #tpu.dot_dimension_numbers<[1], [0], [0], [1], [0, 0, 1, 1], [], []>} : vector<8x64xbf16>, vector<64x64xbf16>, vector<8x64xf32> -> vector<8x64xf32>
    %c0_9 = arith.constant 0 : index
    %c0_10 = arith.constant 0 : index
    %12 = vector.load %arg4[%c0_9, %c0_10] : memref<1x64xf32, #tpu.memory_space<vmem>>, vector<1x64xf32>
    %13 = vector.broadcast %12 : vector<1x64xf32> to vector<8x64xf32>
    %14 = arith.addf %11, %13 : vector<8x64xf32>
    %cst_11 = arith.constant 0.000000e+00 : f32
    %15 = vector.broadcast %cst_11 : f32 to vector<8x64xf32>
    %16 = arith.maximumf %14, %15 : vector<8x64xf32>
    %17 = vector.extract_strided_slice %16 {offsets = [0, 0], sizes = [4, 64], strides = [1, 1]} : vector<8x64xf32> to vector<4x64xf32>
    %cst_12 = arith.constant dense<0.000000e+00> : vector<64xf32>
    %18 = vector.multi_reduction <add>, %17, %cst_12 [0] : vector<4x64xf32> to vector<64xf32>
    %19 = vector.shape_cast %18 : vector<64xf32> to vector<1x64xf32>
    %cst_13 = arith.constant 4.000000e+00 : f32
    %20 = vector.broadcast %cst_13 : f32 to vector<1x64xf32>
    %21 = arith.divf %19, %20 : vector<1x64xf32>
    %cst_14 = arith.constant dense<0xFF800000> : vector<64xf32>
    %22 = vector.multi_reduction <maximumf>, %17, %cst_14 [0] : vector<4x64xf32> to vector<64xf32>
    %23 = vector.shape_cast %22 : vector<64xf32> to vector<1x64xf32>
    %24 = arith.addf %21, %23 : vector<1x64xf32>
    %25 = vector.extract_strided_slice %16 {offsets = [4, 0], sizes = [4, 64], strides = [1, 1]} : vector<8x64xf32> to vector<4x64xf32>
    %cst_15 = arith.constant dense<0.000000e+00> : vector<64xf32>
    %26 = vector.multi_reduction <add>, %25, %cst_15 [0] : vector<4x64xf32> to vector<64xf32>
    %27 = vector.shape_cast %26 : vector<64xf32> to vector<1x64xf32>
    %cst_16 = arith.constant 4.000000e+00 : f32
    %28 = vector.broadcast %cst_16 : f32 to vector<1x64xf32>
    %29 = arith.divf %27, %28 : vector<1x64xf32>
    %cst_17 = arith.constant dense<0xFF800000> : vector<64xf32>
    %30 = vector.multi_reduction <maximumf>, %25, %cst_17 [0] : vector<4x64xf32> to vector<64xf32>
    %31 = vector.shape_cast %30 : vector<64xf32> to vector<1x64xf32>
    %32 = arith.addf %29, %31 : vector<1x64xf32>
    %33 = tpu.concatenate %24, %32 in 0 : vector<1x64xf32>, vector<1x64xf32> -> vector<2x64xf32>
    %c0_18 = arith.constant 0 : index
    %c0_19 = arith.constant 0 : index
    %34 = vector.load %arg5[%c0_18, %c0_19] : memref<2x64xf32, #tpu.memory_space<vmem>>, vector<2x64xf32>
    tpu.vector_store %arg5[%c0_18, %c0_19], %33 {strides = array<i32>} : memref<2x64xf32, #tpu.memory_space<vmem>>, vector<2x64xf32>,
    return
  }
}

</mosaic_0001>

<llo_original>
// kernel: audio_ntt2020_forward.4
$region0: #{audio_ntt2020_forward.4}
  #allocation0 [shape = 'u32[]', space=smem, size = 0x4, offset = 0x4, fixed_abs, tag = 'smem constant byte address 0x4 - core index']
  #allocation1 [shape = 'u32[144,128]{1,0:T(1,128)}', space=vmem, size = 0x12000, scoped, tag = 'internal scratch']
  #allocation2 [shape = 'f32[1,8,32,64]{3,2,1,0:T(8,128)}', space=vmem, size = 0x20000, scoped, tag = 'scratch operand']
  %s0 = inlined_call_operand.vmem [shape: f32[2,16,32,9], index: 0, kind: input, shape index: {}]
  %s1 = inlined_call_operand.vmem [shape: bf16[9,64], index: 1, kind: input, shape index: {}]
  %s2 = inlined_call_operand.vmem [shape: f32[1,64], index: 2, kind: input, shape index: {}]
  %s3 = inlined_call_operand.vmem [shape: f32[1,64], index: 3, kind: input, shape index: {}]
  %s4 = inlined_call_operand.vmem [shape: f32[2,10,18,64], index: 4, kind: output, shape index: {}]
  %s5 = sld [smem:[#allocation0]]
  $region49: #{audio_ntt2020_forward.4} parent=0
    _
  %s7 = ssub.s32 1, %s5
  %s8 = scalar_select 0, %s7, %s5
  loop: start=0, step=1, limit=4
  $region2: #{audio_ntt2020_forward.4} parent=0 // loop_pre_header
    _
  $region3: #{audio_ntt2020_forward.4} parent=0 // loop_header
    %s10 = sphi 0, %s14
    %p11 = scmp.ge.s32.totalorder %s10, 4
    %s20 = sphi 0, %s22
    %s23 = sphi 0, %s20
    %s24 = sphi 0, %s23
    %s40 = sphi 0, %s24
    %s44 = sphi 0, %s44
    %s46 = sphi 0, %s44
    %s47 = sphi 0, %s46
    %s61 = sphi 0, %s47
    %s65 = sphi 0, %s65
    %s67 = sphi 0, %s65
    %s68 = sphi 0, %s67
    %s82 = sphi 0, %s68
    %s86 = sphi 0, %s86
    %s88 = sphi 0, %s86
    %s89 = sphi 0, %s88
    %s103 = sphi 0, %s89
    %s109 = sphi 0, %s111
    %s112 = sphi 0, %s109
    %s113 = sphi 0, %s112
    %s129 = sphi 0, %s113
  $region4: #{audio_ntt2020_forward.4} parent=0 // loop_header_branch
    %13 = sbr.rel (%p11) target = $region8
  $region5: #{audio_ntt2020_forward.4} parent=0 // loop_body
    %s15 = ssub.s32 %s10, 1
    %s16 = ssub.s32 %s10, 2
    %s17 = sadd.s32 %s10, 1
    %s18 = ssub.s32 %s10, %s17
    %p19 = scmp.eq.s32.totalorder %s18, 0
    %s21 = sadd.s32 %s20, 1
    %s22 = scalar_select %p19, %s20, %s21
    %p25 = pneg %p19
    %p26 = scmp.eq.s32.totalorder %s10, 1
    %p27 = por %p25, %p26
    %p28 = scmp.ne.s32.totalorder %s20, %s23
    %p29 = scmp.eq.s32.totalorder %s10, 0
    %p30 = por %p28, %p29
    %p31 = scmp.ne.s32.totalorder %s20, %s23
    %p32 = scmp.eq.s32.totalorder %s15, 1
    %p33 = por %p31, %p32
    %p34 = scmp.ne.s32.totalorder %s23, %s24
    %p35 = scmp.eq.s32.totalorder %s15, 0
    %p36 = por %p34, %p35
    %p37 = scmp.ne.s32.totalorder %s23, %s24
    %p38 = scmp.eq.s32.totalorder %s16, 1
    %p39 = por %p37, %p38
    %p41 = scmp.ne.s32.totalorder %s24, %s40
    %p42 = scmp.eq.s32.totalorder %s16, 0
    %p43 = por %p41, %p42
    %s45 = sadd.s32 %s44, 1
    %p48 = scmp.eq.s32.totalorder %s10, 1
    %p49 = scmp.ne.s32.totalorder %s44, %s46
    %p50 = scmp.eq.s32.totalorder %s10, 0
    %p51 = por %p49, %p50
    %p52 = scmp.ne.s32.totalorder %s44, %s46
    %p53 = scmp.eq.s32.totalorder %s15, 1
    %p54 = por %p52, %p53
    %p55 = scmp.ne.s32.totalorder %s46, %s47
    %p56 = scmp.eq.s32.totalorder %s15, 0
    %p57 = por %p55, %p56
    %p58 = scmp.ne.s32.totalorder %s46, %s47
    %p59 = scmp.eq.s32.totalorder %s16, 1
    %p60 = por %p58, %p59
    %p62 = scmp.ne.s32.totalorder %s47, %s61
    %p63 = scmp.eq.s32.totalorder %s16, 0
    %p64 = por %p62, %p63
    %s66 = sadd.s32 %s65, 1
    %p69 = scmp.eq.s32.totalorder %s10, 1
    %p70 = scmp.ne.s32.totalorder %s65, %s67
    %p71 = scmp.eq.s32.totalorder %s10, 0
    %p72 = por %p70, %p71
    %p73 = scmp.ne.s32.totalorder %s65, %s67
    %p74 = scmp.eq.s32.totalorder %s15, 1
    %p75 = por %p73, %p74
    %p76 = scmp.ne.s32.totalorder %s67, %s68
    %p77 = scmp.eq.s32.totalorder %s15, 0
    %p78 = por %p76, %p77
    %p79 = scmp.ne.s32.totalorder %s67, %s68
    %p80 = scmp.eq.s32.totalorder %s16, 1
    %p81 = por %p79, %p80
    %p83 = scmp.ne.s32.totalorder %s68, %s82
    %p84 = scmp.eq.s32.totalorder %s16, 0
    %p85 = por %p83, %p84
    %s87 = sadd.s32 %s86, 1
    %p90 = scmp.eq.s32.totalorder %s10, 1
    %p91 = scmp.ne.s32.totalorder %s86, %s88
    %p92 = scmp.eq.s32.totalorder %s10, 0
    %p93 = por %p91, %p92
    %p94 = scmp.ne.s32.totalorder %s86, %s88
    %p95 = scmp.eq.s32.totalorder %s15, 1
    %p96 = por %p94, %p95
    %p97 = scmp.ne.s32.totalorder %s88, %s89
    %p98 = scmp.eq.s32.totalorder %s15, 0
    %p99 = por %p97, %p98
    %p100 = scmp.ne.s32.totalorder %s88, %s89
    %p101 = scmp.eq.s32.totalorder %s16, 1
    %p102 = por %p100, %p101
    %p104 = scmp.ne.s32.totalorder %s89, %s103
    %p105 = scmp.eq.s32.totalorder %s16, 0
    %p106 = por %p104, %p105
    %s107 = ssub.s32 %s10, %s17
    %p108 = scmp.eq.s32.totalorder %s107, 0
    %s110 = sadd.s32 %s109, 1
    %s111 = scalar_select %p108, %s109, %s110
    %p114 = pneg %p108
    %p115 = scmp.eq.s32.totalorder %s10, 1
    %p116 = por %p114, %p115
    %p117 = scmp.ne.s32.totalorder %s109, %s112
    %p118 = scmp.eq.s32.totalorder %s10, 0
    %p119 = por %p117, %p118
    %p120 = scmp.ne.s32.totalorder %s109, %s112
    %p121 = scmp.eq.s32.totalorder %s15, 1
    %p122 = por %p120, %p121
    %p123 = scmp.ne.s32.totalorder %s112, %s113
    %p124 = scmp.eq.s32.totalorder %s15, 0
    %p125 = por %p123, %p124
    %p126 = scmp.ne.s32.totalorder %s112, %s113
    %p127 = scmp.eq.s32.totalorder %s16, 1
    %p128 = por %p126, %p127
    %p130 = scmp.ne.s32.totalorder %s113, %s129
    %p131 = scmp.eq.s32.totalorder %s16, 0
    %p132 = por %p130, %p131
    %p133 = scmp.le.s32.totalorder 1, %s10
    %p134 = scmp.lt.s32.totalorder %s10, 3
    %p135 = pnand %p133, %p134
    %p136 = pneg %p135
    // Predicated region
    $region9: #{audio_ntt2020_forward.4} parent=5 // pred_check
      _
    $region10: #{audio_ntt2020_forward.4} parent=5 // pred_check_branch
      %138 = sbr.rel (%p135) target = $region12
    $region11: #{audio_ntt2020_forward.4} parent=5 // pred_region
      %s139 = ssub.s32 %s10, 1
      // Predicated region
      $region13: #{audio_ntt2020_forward.4} parent=11 // pred_check
        %p140 = pneg %p57
      $region14: #{audio_ntt2020_forward.4} parent=11 // pred_check_branch
        %142 = sbr.rel (%p140) target = $region16
      $region15: #{audio_ntt2020_forward.4} parent=11 // pred_region
        _
      $region16: #{audio_ntt2020_forward.4} parent=11 // pred_fallthru
        _
      // Predicated region
      $region17: #{audio_ntt2020_forward.4} parent=11 // pred_check
        %p143 = pneg %p78
      $region18: #{audio_ntt2020_forward.4} parent=11 // pred_check_branch
        %145 = sbr.rel (%p143) target = $region20
      $region19: #{audio_ntt2020_forward.4} parent=11 // pred_region
        _
      $region20: #{audio_ntt2020_forward.4} parent=11 // pred_fallthru
        _
      // Predicated region
      $region21: #{audio_ntt2020_forward.4} parent=11 // pred_check
        %p146 = pneg %p99
      $region22: #{audio_ntt2020_forward.4} parent=11 // pred_check_branch
        %148 = sbr.rel (%p146) target = $region24
      $region23: #{audio_ntt2020_forward.4} parent=11 // pred_region
        _
      $region24: #{audio_ntt2020_forward.4} parent=11 // pred_fallthru
        _
    $region12: #{audio_ntt2020_forward.4} parent=5 // pred_fallthru
      _
    %p149 = scmp.lt.s32.totalorder %s10, 2
    // Predicated region
    $region25: #{audio_ntt2020_forward.4} parent=5 // pred_check
      %p150 = pneg %p149
    $region26: #{audio_ntt2020_forward.4} parent=5 // pred_check_branch
      %152 = sbr.rel (%p150) target = $region28
    $region27: #{audio_ntt2020_forward.4} parent=5 // pred_region
      // Predicated region
      $region29: #{audio_ntt2020_forward.4} parent=27 // pred_check
        %p153 = pneg %p30
      $region30: #{audio_ntt2020_forward.4} parent=27 // pred_check_branch
        %155 = sbr.rel (%p153) target = $region32
      $region31: #{audio_ntt2020_forward.4} parent=27 // pred_region
        %p156 = scmp.lt.s32.totalorder %s10, 1
        %s157 = scalar_select %p156, %s10, 1
        %s158 = smul.addr %s157, 64
        %s159 = smul.addr %s158, 8
        %s160 = scalar_lea.vmem %s0, %s159
      $region32: #{audio_ntt2020_forward.4} parent=27 // pred_fallthru
        _
    $region28: #{audio_ntt2020_forward.4} parent=5 // pred_fallthru
      _
    %p161 = scmp.le.s32.totalorder 1, %s10
    %p162 = scmp.lt.s32.totalorder %s10, 3
    %p163 = pnand %p161, %p162
    %p164 = pneg %p163
    // Predicated region
    $region33: #{audio_ntt2020_forward.4} parent=5 // pred_check
      _
    $region34: #{audio_ntt2020_forward.4} parent=5 // pred_check_branch
      %166 = sbr.rel (%p163) target = $region36
    $region35: #{audio_ntt2020_forward.4} parent=5 // pred_region
      %s167 = ssub.s32 %s10, 1
      %p168 = scmp.lt.s32.totalorder %s15, 1
      %s169 = scalar_select %p168, %s15, 1
      %s170 = smul.addr %s169, 64
      %s171 = smul.addr %s170, 8
      %s172 = scalar_lea.vmem %s0, %s171
      %p173 = pneg %p36
      %p174 = pneg %p33
      %p175 = pneg %p57
      %p176 = pneg %p54
      %p177 = pneg %p78
      %p178 = pneg %p75
      %p179 = pneg %p99
      %p180 = pneg %p96
      %p181 = pneg %p125
      %p182 = pneg %p122
      %p183 = scmp.lt.s32.totalorder %s15, 1
      %s184 = scalar_select %p183, %s15, 1
      %s185 = smul.addr %s184, 30
      %s186 = smul.addr %s185, 8
      %s187 = scalar_lea.vmem %s4, %s186
      %p188 = scmp.lt.s32.totalorder %s15, 1
      %s189 = scalar_select %p188, %s15, 1
      %s190 = smul.addr %s189, 64
      %s191 = smul.addr %s190, 8
      %s192 = scalar_lea.vmem %s0, %s191
      %p193 = scmp.lt.s32.totalorder %s15, 1
      %s194 = scalar_select %p193, %s15, 1
      %s195 = smul.addr %s194, 30
      %s196 = smul.addr %s195, 8
      %s197 = scalar_lea.vmem %s4, %s196
      %v199 = vld [vmem:[%s192] sm:$0xff]
      %v200 = vld [vmem:[%s192 + $0x8] sm:$0xff]
      %v201 = vld [vmem:[%s192 + $0x10] sm:$0xff]
      %v202 = vld [vmem:[%s192 + $0x18] sm:$0xff]
      %v203 = vld [vmem:[%s192 + $0x20] sm:$0xff]
      %v204 = vld [vmem:[%s192 + $0x28] sm:$0xff]
      %v205 = vld [vmem:[%s192 + $0x30] sm:$0xff]
      %v206 = vld [vmem:[%s192 + $0x38] sm:$0xff]
      %v207 = vld [vmem:[%s192 + $0x40] sm:$0xff]
      %v208 = vld [vmem:[%s192 + $0x48] sm:$0xff]
      %v209 = vld [vmem:[%s192 + $0x50] sm:$0xff]
      %v210 = vld [vmem:[%s192 + $0x58] sm:$0xff]
      %v211 = vld [vmem:[%s192 + $0x60] sm:$0xff]
      %v212 = vld [vmem:[%s192 + $0x68] sm:$0xff]
      %v213 = vld [vmem:[%s192 + $0x70] sm:$0xff]
      %v214 = vld [vmem:[%s192 + $0x78] sm:$0xff]
      %v215 = vld [vmem:[%s192 + $0x80] sm:$0xff]
      %v216 = vld [vmem:[%s192 + $0x88] sm:$0xff]
      %v217 = vld [vmem:[%s192 + $0x90] sm:$0xff]
      %v218 = vld [vmem:[%s192 + $0x98] sm:$0xff]
      %v219 = vld [vmem:[%s192 + $0xa0] sm:$0xff]
      %v220 = vld [vmem:[%s192 + $0xa8] sm:$0xff]
      %v221 = vld [vmem:[%s192 + $0xb0] sm:$0xff]
      %v222 = vld [vmem:[%s192 + $0xb8] sm:$0xff]
      %v223 = vld [vmem:[%s192 + $0xc0] sm:$0xff]
      %v224 = vld [vmem:[%s192 + $0xc8] sm:$0xff]
      %v225 = vld [vmem:[%s192 + $0xd0] sm:$0xff]
      %v226 = vld [vmem:[%s192 + $0xd8] sm:$0xff]
      %v227 = vld [vmem:[%s192 + $0xe0] sm:$0xff]
      %v228 = vld [vmem:[%s192 + $0xe8] sm:$0xff]
      %v229 = vld [vmem:[%s192 + $0xf0] sm:$0xff]
      %v230 = vld [vmem:[%s192 + $0xf8] sm:$0xff]
      %v231 = vld [vmem:[%s192 + $0x100] sm:$0xff]
      %v232 = vld [vmem:[%s192 + $0x108] sm:$0xff]
      %v233 = vld [vmem:[%s192 + $0x110] sm:$0xff]
      %v234 = vld [vmem:[%s192 + $0x118] sm:$0xff]
      %v235 = vld [vmem:[%s192 + $0x120] sm:$0xff]
      %v236 = vld [vmem:[%s192 + $0x128] sm:$0xff]
      %v237 = vld [vmem:[%s192 + $0x130] sm:$0xff]
      %v238 = vld [vmem:[%s192 + $0x138] sm:$0xff]
      %v239 = vld [vmem:[%s192 + $0x140] sm:$0xff]
      %v240 = vld [vmem:[%s192 + $0x148] sm:$0xff]
      %v241 = vld [vmem:[%s192 + $0x150] sm:$0xff]
      %v242 = vld [vmem:[%s192 + $0x158] sm:$0xff]
      %v243 = vld [vmem:[%s192 + $0x160] sm:$0xff]
      %v244 = vld [vmem:[%s192 + $0x168] sm:$0xff]
      %v245 = vld [vmem:[%s192 + $0x170] sm:$0xff]
      %v246 = vld [vmem:[%s192 + $0x178] sm:$0xff]
      %v247 = vld [vmem:[%s192 + $0x180] sm:$0xff]
      %v248 = vld [vmem:[%s192 + $0x188] sm:$0xff]
      %v249 = vld [vmem:[%s192 + $0x190] sm:$0xff]
      %v250 = vld [vmem:[%s192 + $0x198] sm:$0xff]
      %v251 = vld [vmem:[%s192 + $0x1a0] sm:$0xff]
      %v252 = vld [vmem:[%s192 + $0x1a8] sm:$0xff]
      %v253 = vld [vmem:[%s192 + $0x1b0] sm:$0xff]
      %v254 = vld [vmem:[%s192 + $0x1b8] sm:$0xff]
      %v255 = vld [vmem:[%s192 + $0x1c0] sm:$0xff]
      %v256 = vld [vmem:[%s192 + $0x1c8] sm:$0xff]
      %v257 = vld [vmem:[%s192 + $0x1d0] sm:$0xff]
      %v258 = vld [vmem:[%s192 + $0x1d8] sm:$0xff]
      %v259 = vld [vmem:[%s192 + $0x1e0] sm:$0xff]
      %v260 = vld [vmem:[%s192 + $0x1e8] sm:$0xff]
      %v261 = vld [vmem:[%s192 + $0x1f0] sm:$0xff]
      %v262 = vld [vmem:[%s192 + $0x1f8] sm:$0xff]
      %v263 = vpack.c.bf16 %v200, %v199
      %v264 = vpack.c.bf16 %v202, %v201
      %v265 = vpack.c.bf16 %v204, %v203
      %v266 = vpack.c.bf16 %v206, %v205
      %v267 = vpack.c.bf16 %v208, %v207
      %v268 = vpack.c.bf16 %v210, %v209
      %v269 = vpack.c.bf16 %v212, %v211
      %v270 = vpack.c.bf16 %v214, %v213
      %v271 = vpack.c.bf16 %v216, %v215
      %v272 = vpack.c.bf16 %v218, %v217
      %v273 = vpack.c.bf16 %v220, %v219
      %v274 = vpack.c.bf16 %v222, %v221
      %v275 = vpack.c.bf16 %v224, %v223
      %v276 = vpack.c.bf16 %v226, %v225
      %v277 = vpack.c.bf16 %v228, %v227
      %v278 = vpack.c.bf16 %v230, %v229
      %v279 = vpack.c.bf16 %v232, %v231
      %v280 = vpack.c.bf16 %v234, %v233
      %v281 = vpack.c.bf16 %v236, %v235
      %v282 = vpack.c.bf16 %v238, %v237
      %v283 = vpack.c.bf16 %v240, %v239
      %v284 = vpack.c.bf16 %v242, %v241
      %v285 = vpack.c.bf16 %v244, %v243
      %v286 = vpack.c.bf16 %v246, %v245
      %v287 = vpack.c.bf16 %v248, %v247
      %v288 = vpack.c.bf16 %v250, %v249
      %v289 = vpack.c.bf16 %v252, %v251
      %v290 = vpack.c.bf16 %v254, %v253
      %v291 = vpack.c.bf16 %v256, %v255
      %v292 = vpack.c.bf16 %v258, %v257
      %v293 = vpack.c.bf16 %v260, %v259
      %v294 = vpack.c.bf16 %v262, %v261
      %v295 = vld [vmem:[%s1] sm:$0xf]
      %v296 = vld [vmem:[%s1 + $0x4] sm:$0x1]
      %v299 = vunpack.c.l.b16 %v295
      %v300 = vunpack.c.l.b16 %v296
      %v301 = vpack.c.b16 %v300, %v299
      %vm302 = vcmask 72704
      %v304 = vsel %vm302, %v263, 0
      %v307 = vsel %vm302, %v264, 0
      %v310 = vsel %vm302, %v265, 0
      %v313 = vsel %vm302, %v266, 0
      %v316 = vsel %vm302, %v267, 0
      %v319 = vsel %vm302, %v268, 0
      %v322 = vsel %vm302, %v269, 0
      %v325 = vsel %vm302, %v270, 0
      %v328 = vsel %vm302, %v271, 0
      %v331 = vsel %vm302, %v272, 0
      %v334 = vsel %vm302, %v273, 0
      %v337 = vsel %vm302, %v274, 0
      %v340 = vsel %vm302, %v275, 0
      %v343 = vsel %vm302, %v276, 0
      %v346 = vsel %vm302, %v277, 0
      %v349 = vsel %vm302, %v278, 0
      %v352 = vsel %vm302, %v279, 0
      %v355 = vsel %vm302, %v280, 0
      %v358 = vsel %vm302, %v281, 0
      %v361 = vsel %vm302, %v282, 0
      %v364 = vsel %vm302, %v283, 0
      %v367 = vsel %vm302, %v284, 0
      %v370 = vsel %vm302, %v285, 0
      %v373 = vsel %vm302, %v286, 0
      %v376 = vsel %vm302, %v287, 0
      %v379 = vsel %vm302, %v288, 0
      %v382 = vsel %vm302, %v289, 0
      %v385 = vsel %vm302, %v290, 0
      %v388 = vsel %vm302, %v291, 0
      %v391 = vsel %vm302, %v292, 0
      %v394 = vsel %vm302, %v293, 0
      %v397 = vsel %vm302, %v294, 0
      %vm399 = vcmask 1043456
      %vm400 = vcmask 1044480
      %v401 = vsel %vm399, 4294967295, 65535
      %v402 = vsel %vm400, %v401, 0
      %v404 = vand.u32 %v301, %v402
      %406 = vmatprep.subr.bf16.mxu0 0
      %407 = vmatpush1.bf16.msra.mxu0 0
      %408 = vmatprep.subr.bf16.mxu0 0
      %409 = vmatpush1.bf16.msra.mxu0 0
      %410 = vmatprep.subr.bf16.mxu0 0
      %411 = vmatpush1.bf16.msra.mxu0 0
      %412 = vmatprep.subr.bf16.mxu0 0
      %413 = vmatpush1.bf16.msra.mxu0 0
      %414 = vmatprep.subr.bf16.mxu0 0
      %415 = vmatpush1.bf16.msra.mxu0 0
      %416 = vmatprep.subr.bf16.mxu0 0
      %417 = vmatpush1.bf16.msra.mxu0 0
      %418 = vmatprep.subr.bf16.mxu0 0
      %419 = vmatpush1.bf16.msra.mxu0 0
      %420 = vmatprep.subr.bf16.mxu0 0
      %421 = vmatpush1.bf16.msra.mxu0 %v404
      %422 = vmatprep.subr.bf16.mxu0 0
      %423 = vmatpush2.bf16.msra.mxu0 0
      %424 = vmatprep.subr.bf16.mxu0 0
      %425 = vmatpush2.bf16.msra.mxu0 0
      %426 = vmatprep.subr.bf16.mxu0 0
      %427 = vmatpush2.bf16.msra.mxu0 0
      %428 = vmatprep.subr.bf16.mxu0 0
      %429 = vmatpush2.bf16.msra.mxu0 0
      %430 = vmatprep.subr.bf16.mxu0 0
      %431 = vmatpush2.bf16.msra.mxu0 0
      %432 = vmatprep.subr.bf16.mxu0 0
      %433 = vmatpush2.bf16.msra.mxu0 0
      %434 = vmatprep.subr.bf16.mxu0 0
      %435 = vmatpush2.bf16.msra.mxu0 0
      %436 = vmatprep.subr.bf16.mxu0 0
      %437 = vmatpush2.bf16.msra.mxu0 0
      %438 = vmatprep.mubr.bf16.mxu0 0
      %439 = vmatmul.mubr.bf16.gmra.mxu0 %v304
      %v440 = vpop.f32.mrf.mxu0
      %v441 = vadd.f32 0.0, %v440
      %v442 = vpop.f32.mrf.mxu0
      %v443 = vpop.f32.mrf.mxu0
      %v444 = vadd.f32 0.0, %v443
      %v445 = vpop.f32.mrf.mxu0
      %446 = vmatprep.mubr.bf16.mxu0 0
      %447 = vmatmul.mubr.bf16.gmra.mxu0 %v307
      %v448 = vpop.f32.mrf.mxu0
      %v449 = vadd.f32 0.0, %v448
      %v450 = vpop.f32.mrf.mxu0
      %v451 = vpop.f32.mrf.mxu0
      %v452 = vadd.f32 0.0, %v451
      %v453 = vpop.f32.mrf.mxu0
      %454 = vmatprep.mubr.bf16.mxu0 0
      %455 = vmatmul.mubr.bf16.gmra.mxu0 %v310
      %v456 = vpop.f32.mrf.mxu0
      %v457 = vadd.f32 0.0, %v456
      %v458 = vpop.f32.mrf.mxu0
      %v459 = vpop.f32.mrf.mxu0
      %v460 = vadd.f32 0.0, %v459
      %v461 = vpop.f32.mrf.mxu0
      %462 = vmatprep.mubr.bf16.mxu0 0
      %463 = vmatmul.mubr.bf16.gmra.mxu0 %v313
      %v464 = vpop.f32.mrf.mxu0
      %v465 = vadd.f32 0.0, %v464
      %v466 = vpop.f32.mrf.mxu0
      %v467 = vpop.f32.mrf.mxu0
      %v468 = vadd.f32 0.0, %v467
      %v469 = vpop.f32.mrf.mxu0
      %470 = vmatprep.mubr.bf16.mxu0 0
      %471 = vmatmul.mubr.bf16.gmra.mxu0 %v316
      %v472 = vpop.f32.mrf.mxu0
      %v473 = vadd.f32 0.0, %v472
      %v474 = vpop.f32.mrf.mxu0
      %v475 = vpop.f32.mrf.mxu0
      %v476 = vadd.f32 0.0, %v475
      %v477 = vpop.f32.mrf.mxu0
      %478 = vmatprep.mubr.bf16.mxu0 0
      %479 = vmatmul.mubr.bf16.gmra.mxu0 %v319
      %v480 = vpop.f32.mrf.mxu0
      %v481 = vadd.f32 0.0, %v480
      %v482 = vpop.f32.mrf.mxu0
      %v483 = vpop.f32.mrf.mxu0
      %v484 = vadd.f32 0.0, %v483
      %v485 = vpop.f32.mrf.mxu0
      %486 = vmatprep.mubr.bf16.mxu0 0
      %487 = vmatmul.mubr.bf16.gmra.mxu0 %v322
      %v488 = vpop.f32.mrf.mxu0
      %v489 = vadd.f32 0.0, %v488
      %v490 = vpop.f32.mrf.mxu0
      %v491 = vpop.f32.mrf.mxu0
      %v492 = vadd.f32 0.0, %v491
      %v493 = vpop.f32.mrf.mxu0
      %494 = vmatprep.mubr.bf16.mxu0 0
      %495 = vmatmul.mubr.bf16.gmra.mxu0 %v325
      %v496 = vpop.f32.mrf.mxu0
      %v497 = vadd.f32 0.0, %v496
      %v498 = vpop.f32.mrf.mxu0
      %v499 = vpop.f32.mrf.mxu0
      %v500 = vadd.f32 0.0, %v499
      %v501 = vpop.f32.mrf.mxu0
      %502 = vmatprep.mubr.bf16.mxu0 0
      %503 = vmatmul.mubr.bf16.gmra.mxu0 %v328
      %v504 = vpop.f32.mrf.mxu0
      %v505 = vadd.f32 0.0, %v504
      %v506 = vpop.f32.mrf.mxu0
      %v507 = vpop.f32.mrf.mxu0
      %v508 = vadd.f32 0.0, %v507
      %v509 = vpop.f32.mrf.mxu0
      %510 = vmatprep.mubr.bf16.mxu0 0
      %511 = vmatmul.mubr.bf16.gmra.mxu0 %v331
      %v512 = vpop.f32.mrf.mxu0
      %v513 = vadd.f32 0.0, %v512
      %v514 = vpop.f32.mrf.mxu0
      %v515 = vpop.f32.mrf.mxu0
      %v516 = vadd.f32 0.0, %v515
      %v517 = vpop.f32.mrf.mxu0
      %518 = vmatprep.mubr.bf16.mxu0 0
      %519 = vmatmul.mubr.bf16.gmra.mxu0 %v334
      %v520 = vpop.f32.mrf.mxu0
      %v521 = vadd.f32 0.0, %v520
      %v522 = vpop.f32.mrf.mxu0
      %v523 = vpop.f32.mrf.mxu0
      %v524 = vadd.f32 0.0, %v523
      %v525 = vpop.f32.mrf.mxu0
      %526 = vmatprep.mubr.bf16.mxu0 0
      %527 = vmatmul.mubr.bf16.gmra.mxu0 %v337
      %v528 = vpop.f32.mrf.mxu0
      %v529 = vadd.f32 0.0, %v528
      %v530 = vpop.f32.mrf.mxu0
      %v531 = vpop.f32.mrf.mxu0
      %v532 = vadd.f32 0.0, %v531
      %v533 = vpop.f32.mrf.mxu0
      %534 = vmatprep.mubr.bf16.mxu0 0
      %535 = vmatmul.mubr.bf16.gmra.mxu0 %v340
      %v536 = vpop.f32.mrf.mxu0
      %v537 = vadd.f32 0.0, %v536
      %v538 = vpop.f32.mrf.mxu0
      %v539 = vpop.f32.mrf.mxu0
      %v540 = vadd.f32 0.0, %v539
      %v541 = vpop.f32.mrf.mxu0
      %542 = vmatprep.mubr.bf16.mxu0 0
      %543 = vmatmul.mubr.bf16.gmra.mxu0 %v343
      %v544 = vpop.f32.mrf.mxu0
      %v545 = vadd.f32 0.0, %v544
      %v546 = vpop.f32.mrf.mxu0
      %v547 = vpop.f32.mrf.mxu0
      %v548 = vadd.f32 0.0, %v547
      %v549 = vpop.f32.mrf.mxu0
      %550 = vmatprep.mubr.bf16.mxu0 0
      %551 = vmatmul.mubr.bf16.gmra.mxu0 %v346
      %v552 = vpop.f32.mrf.mxu0
      %v553 = vadd.f32 0.0, %v552
      %v554 = vpop.f32.mrf.mxu0
      %v555 = vpop.f32.mrf.mxu0
      %v556 = vadd.f32 0.0, %v555
      %v557 = vpop.f32.mrf.mxu0
      %558 = vmatprep.mubr.bf16.mxu0 0
      %559 = vmatmul.mubr.bf16.gmra.mxu0 %v349
      %v560 = vpop.f32.mrf.mxu0
      %v561 = vadd.f32 0.0, %v560
      %v562 = vpop.f32.mrf.mxu0
      %v563 = vpop.f32.mrf.mxu0
      %v564 = vadd.f32 0.0, %v563
      %v565 = vpop.f32.mrf.mxu0
      %566 = vmatprep.mubr.bf16.mxu0 0
      %567 = vmatmul.mubr.bf16.gmra.mxu0 %v352
      %v568 = vpop.f32.mrf.mxu0
      %v569 = vadd.f32 0.0, %v568
      %v570 = vpop.f32.mrf.mxu0
      %v571 = vpop.f32.mrf.mxu0
      %v572 = vadd.f32 0.0, %v571
      %v573 = vpop.f32.mrf.mxu0
      %574 = vmatprep.mubr.bf16.mxu0 0
      %575 = vmatmul.mubr.bf16.gmra.mxu0 %v355
      %v576 = vpop.f32.mrf.mxu0
      %v577 = vadd.f32 0.0, %v576
      %v578 = vpop.f32.mrf.mxu0
      %v579 = vpop.f32.mrf.mxu0
      %v580 = vadd.f32 0.0, %v579
      %v581 = vpop.f32.mrf.mxu0
      %582 = vmatprep.mubr.bf16.mxu0 0
      %583 = vmatmul.mubr.bf16.gmra.mxu0 %v358
      %v584 = vpop.f32.mrf.mxu0
      %v585 = vadd.f32 0.0, %v584
      %v586 = vpop.f32.mrf.mxu0
      %v587 = vpop.f32.mrf.mxu0
      %v588 = vadd.f32 0.0, %v587
      %v589 = vpop.f32.mrf.mxu0
      %590 = vmatprep.mubr.bf16.mxu0 0
      %591 = vmatmul.mubr.bf16.gmra.mxu0 %v361
      %v592 = vpop.f32.mrf.mxu0
      %v593 = vadd.f32 0.0, %v592
      %v594 = vpop.f32.mrf.mxu0
      %v595 = vpop.f32.mrf.mxu0
      %v596 = vadd.f32 0.0, %v595
      %v597 = vpop.f32.mrf.mxu0
      %598 = vmatprep.mubr.bf16.mxu0 0
      %599 = vmatmul.mubr.bf16.gmra.mxu0 %v364
      %v600 = vpop.f32.mrf.mxu0
      %v601 = vadd.f32 0.0, %v600
      %v602 = vpop.f32.mrf.mxu0
      %v603 = vpop.f32.mrf.mxu0
      %v604 = vadd.f32 0.0, %v603
      %v605 = vpop.f32.mrf.mxu0
      %606 = vmatprep.mubr.bf16.mxu0 0
      %607 = vmatmul.mubr.bf16.gmra.mxu0 %v367
      %v608 = vpop.f32.mrf.mxu0
      %v609 = vadd.f32 0.0, %v608
      %v610 = vpop.f32.mrf.mxu0
      %v611 = vpop.f32.mrf.mxu0
      %v612 = vadd.f32 0.0, %v611
      %v613 = vpop.f32.mrf.mxu0
      %614 = vmatprep.mubr.bf16.mxu0 0
      %615 = vmatmul.mubr.bf16.gmra.mxu0 %v370
      %v616 = vpop.f32.mrf.mxu0
      %v617 = vadd.f32 0.0, %v616
      %v618 = vpop.f32.mrf.mxu0
      %v619 = vpop.f32.mrf.mxu0
      %v620 = vadd.f32 0.0, %v619
      %v621 = vpop.f32.mrf.mxu0
      %622 = vmatprep.mubr.bf16.mxu0 0
      %623 = vmatmul.mubr.bf16.gmra.mxu0 %v373
      %v624 = vpop.f32.mrf.mxu0
      %v625 = vadd.f32 0.0, %v624
      %v626 = vpop.f32.mrf.mxu0
      %v627 = vpop.f32.mrf.mxu0
      %v628 = vadd.f32 0.0, %v627
      %v629 = vpop.f32.mrf.mxu0
      %630 = vmatprep.mubr.bf16.mxu0 0
      %631 = vmatmul.mubr.bf16.gmra.mxu0 %v376
      %v632 = vpop.f32.mrf.mxu0
      %v633 = vadd.f32 0.0, %v632
      %v634 = vpop.f32.mrf.mxu0
      %v635 = vpop.f32.mrf.mxu0
      %v636 = vadd.f32 0.0, %v635
      %v637 = vpop.f32.mrf.mxu0
      %638 = vmatprep.mubr.bf16.mxu0 0
      %639 = vmatmul.mubr.bf16.gmra.mxu0 %v379
      %v640 = vpop.f32.mrf.mxu0
      %v641 = vadd.f32 0.0, %v640
      %v642 = vpop.f32.mrf.mxu0
      %v643 = vpop.f32.mrf.mxu0
      %v644 = vadd.f32 0.0, %v643
      %v645 = vpop.f32.mrf.mxu0
      %646 = vmatprep.mubr.bf16.mxu0 0
      %647 = vmatmul.mubr.bf16.gmra.mxu0 %v382
      %v648 = vpop.f32.mrf.mxu0
      %v649 = vadd.f32 0.0, %v648
      %v650 = vpop.f32.mrf.mxu0
      %v651 = vpop.f32.mrf.mxu0
      %v652 = vadd.f32 0.0, %v651
      %v653 = vpop.f32.mrf.mxu0
      %654 = vmatprep.mubr.bf16.mxu0 0
      %655 = vmatmul.mubr.bf16.gmra.mxu0 %v385
      %v656 = vpop.f32.mrf.mxu0
      %v657 = vadd.f32 0.0, %v656
      %v658 = vpop.f32.mrf.mxu0
      %v659 = vpop.f32.mrf.mxu0
      %v660 = vadd.f32 0.0, %v659
      %v661 = vpop.f32.mrf.mxu0
      %662 = vmatprep.mubr.bf16.mxu0 0
      %663 = vmatmul.mubr.bf16.gmra.mxu0 %v388
      %v664 = vpop.f32.mrf.mxu0
      %v665 = vadd.f32 0.0, %v664
      %v666 = vpop.f32.mrf.mxu0
      %v667 = vpop.f32.mrf.mxu0
      %v668 = vadd.f32 0.0, %v667
      %v669 = vpop.f32.mrf.mxu0
      %670 = vmatprep.mubr.bf16.mxu0 0
      %671 = vmatmul.mubr.bf16.gmra.mxu0 %v391
      %v672 = vpop.f32.mrf.mxu0
      %v673 = vadd.f32 0.0, %v672
      %v674 = vpop.f32.mrf.mxu0
      %v675 = vpop.f32.mrf.mxu0
      %v676 = vadd.f32 0.0, %v675
      %v677 = vpop.f32.mrf.mxu0
      %678 = vmatprep.mubr.bf16.mxu0 0
      %679 = vmatmul.mubr.bf16.gmra.mxu0 %v394
      %v680 = vpop.f32.mrf.mxu0
      %v681 = vadd.f32 0.0, %v680
      %v682 = vpop.f32.mrf.mxu0
      %v683 = vpop.f32.mrf.mxu0
      %v684 = vadd.f32 0.0, %v683
      %v685 = vpop.f32.mrf.mxu0
      %686 = vmatprep.mubr.bf16.mxu0 0
      %687 = vmatmul.mubr.bf16.gmra.mxu0 %v397
      %v688 = vpop.f32.mrf.mxu0
      %v689 = vadd.f32 0.0, %v688
      %v690 = vpop.f32.mrf.mxu0
      %v691 = vpop.f32.mrf.mxu0
      %v692 = vadd.f32 0.0, %v691
      %v693 = vpop.f32.mrf.mxu0
      %694 = vdwg.mxu0
      %v695 = vld [vmem:[%s2] sm:$0x1]
      %v697 = vlaneseq
      %v698 = vshrl.u32 %v697, 7
      %v699 = vsub.s32 0, %v698
      %v700 = vrot.slane %v695, %v699
      %v702 = vmul.f32 %v441, %v700
      %v703 = vmul.f32 %v444, %v700
      %v704 = vmul.f32 %v449, %v700
      %v705 = vmul.f32 %v452, %v700
      %v706 = vmul.f32 %v457, %v700
      %v707 = vmul.f32 %v460, %v700
      %v708 = vmul.f32 %v465, %v700
      %v709 = vmul.f32 %v468, %v700
      %v710 = vmul.f32 %v473, %v700
      %v711 = vmul.f32 %v476, %v700
      %v712 = vmul.f32 %v481, %v700
      %v713 = vmul.f32 %v484, %v700
      %v714 = vmul.f32 %v489, %v700
      %v715 = vmul.f32 %v492, %v700
      %v716 = vmul.f32 %v497, %v700
      %v717 = vmul.f32 %v500, %v700
      %v718 = vmul.f32 %v505, %v700
      %v719 = vmul.f32 %v508, %v700
      %v720 = vmul.f32 %v513, %v700
      %v721 = vmul.f32 %v516, %v700
      %v722 = vmul.f32 %v521, %v700
      %v723 = vmul.f32 %v524, %v700
      %v724 = vmul.f32 %v529, %v700
      %v725 = vmul.f32 %v532, %v700
      %v726 = vmul.f32 %v537, %v700
      %v727 = vmul.f32 %v540, %v700
      %v728 = vmul.f32 %v545, %v700
      %v729 = vmul.f32 %v548, %v700
      %v730 = vmul.f32 %v553, %v700
      %v731 = vmul.f32 %v556, %v700
      %v732 = vmul.f32 %v561, %v700
      %v733 = vmul.f32 %v564, %v700
      %v734 = vmul.f32 %v569, %v700
      %v735 = vmul.f32 %v572, %v700
      %v736 = vmul.f32 %v577, %v700
      %v737 = vmul.f32 %v580, %v700
      %v738 = vmul.f32 %v585, %v700
      %v739 = vmul.f32 %v588, %v700
      %v740 = vmul.f32 %v593, %v700
      %v741 = vmul.f32 %v596, %v700
      %v742 = vmul.f32 %v601, %v700
      %v743 = vmul.f32 %v604, %v700
      %v744 = vmul.f32 %v609, %v700
      %v745 = vmul.f32 %v612, %v700
      %v746 = vmul.f32 %v617, %v700
      %v747 = vmul.f32 %v620, %v700
      %v748 = vmul.f32 %v625, %v700
      %v749 = vmul.f32 %v628, %v700
      %v750 = vmul.f32 %v633, %v700
      %v751 = vmul.f32 %v636, %v700
      %v752 = vmul.f32 %v641, %v700
      %v753 = vmul.f32 %v644, %v700
      %v754 = vmul.f32 %v649, %v700
      %v755 = vmul.f32 %v652, %v700
      %v756 = vmul.f32 %v657, %v700
      %v757 = vmul.f32 %v660, %v700
      %v758 = vmul.f32 %v665, %v700
      %v759 = vmul.f32 %v668, %v700
      %v760 = vmul.f32 %v673, %v700
      %v761 = vmul.f32 %v676, %v700
      %v762 = vmul.f32 %v681, %v700
      %v763 = vmul.f32 %v684, %v700
      %v764 = vmul.f32 %v689, %v700
      %v765 = vmul.f32 %v692, %v700
      %v766 = vld [vmem:[%s3] sm:$0x1]
      %v768 = vlaneseq
      %v769 = vshrl.u32 %v768, 7
      %v770 = vsub.s32 0, %v769
      %v771 = vrot.slane %v766, %v770
      %v773 = vadd.f32 %v702, %v771
      %v774 = vadd.f32 %v703, %v771
      %v775 = vadd.f32 %v704, %v771
      %v776 = vadd.f32 %v705, %v771
      %v777 = vadd.f32 %v706, %v771
      %v778 = vadd.f32 %v707, %v771
      %v779 = vadd.f32 %v708, %v771
      %v780 = vadd.f32 %v709, %v771
      %v781 = vadd.f32 %v710, %v771
      %v782 = vadd.f32 %v711, %v771
      %v783 = vadd.f32 %v712, %v771
      %v784 = vadd.f32 %v713, %v771
      %v785 = vadd.f32 %v714, %v771
      %v786 = vadd.f32 %v715, %v771
      %v787 = vadd.f32 %v716, %v771
      %v788 = vadd.f32 %v717, %v771
      %v789 = vadd.f32 %v718, %v771
      %v790 = vadd.f32 %v719, %v771
      %v791 = vadd.f32 %v720, %v771
      %v792 = vadd.f32 %v721, %v771
      %v793 = vadd.f32 %v722, %v771
      %v794 = vadd.f32 %v723, %v771
      %v795 = vadd.f32 %v724, %v771
      %v796 = vadd.f32 %v725, %v771
      %v797 = vadd.f32 %v726, %v771
      %v798 = vadd.f32 %v727, %v771
      %v799 = vadd.f32 %v728, %v771
      %v800 = vadd.f32 %v729, %v771
      %v801 = vadd.f32 %v730, %v771
      %v802 = vadd.f32 %v731, %v771
      %v803 = vadd.f32 %v732, %v771
      %v804 = vadd.f32 %v733, %v771
      %v805 = vadd.f32 %v734, %v771
      %v806 = vadd.f32 %v735, %v771
      %v807 = vadd.f32 %v736, %v771
      %v808 = vadd.f32 %v737, %v771
      %v809 = vadd.f32 %v738, %v771
      %v810 = vadd.f32 %v739, %v771
      %v811 = vadd.f32 %v740, %v771
      %v812 = vadd.f32 %v741, %v771
      %v813 = vadd.f32 %v742, %v771
      %v814 = vadd.f32 %v743, %v771
      %v815 = vadd.f32 %v744, %v771
      %v816 = vadd.f32 %v745, %v771
      %v817 = vadd.f32 %v746, %v771
      %v818 = vadd.f32 %v747, %v771
      %v819 = vadd.f32 %v748, %v771
      %v820 = vadd.f32 %v749, %v771
      %v821 = vadd.f32 %v750, %v771
      %v822 = vadd.f32 %v751, %v771
      %v823 = vadd.f32 %v752, %v771
      %v824 = vadd.f32 %v753, %v771
      %v825 = vadd.f32 %v754, %v771
      %v826 = vadd.f32 %v755, %v771
      %v827 = vadd.f32 %v756, %v771
      %v828 = vadd.f32 %v757, %v771
      %v829 = vadd.f32 %v758, %v771
      %v830 = vadd.f32 %v759, %v771
      %v831 = vadd.f32 %v760, %v771
      %v832 = vadd.f32 %v761, %v771
      %v833 = vadd.f32 %v762, %v771
      %v834 = vadd.f32 %v763, %v771
      %v835 = vadd.f32 %v764, %v771
      %v836 = vadd.f32 %v765, %v771
      %v837 = vmax.f32 %v773, 0.0
      %v838 = vmax.f32 %v774, 0.0
      %v839 = vmax.f32 %v775, 0.0
      %v840 = vmax.f32 %v776, 0.0
      %v841 = vmax.f32 %v777, 0.0
      %v842 = vmax.f32 %v778, 0.0
      %v843 = vmax.f32 %v779, 0.0
      %v844 = vmax.f32 %v780, 0.0
      %v845 = vmax.f32 %v781, 0.0
      %v846 = vmax.f32 %v782, 0.0
      %v847 = vmax.f32 %v783, 0.0
      %v848 = vmax.f32 %v784, 0.0
      %v849 = vmax.f32 %v785, 0.0
      %v850 = vmax.f32 %v786, 0.0
      %v851 = vmax.f32 %v787, 0.0
      %v852 = vmax.f32 %v788, 0.0
      %v853 = vmax.f32 %v789, 0.0
      %v854 = vmax.f32 %v790, 0.0
      %v855 = vmax.f32 %v791, 0.0
      %v856 = vmax.f32 %v792, 0.0
      %v857 = vmax.f32 %v793, 0.0
      %v858 = vmax.f32 %v794, 0.0
      %v859 = vmax.f32 %v795, 0.0
      %v860 = vmax.f32 %v796, 0.0
      %v861 = vmax.f32 %v797, 0.0
      %v862 = vmax.f32 %v798, 0.0
      %v863 = vmax.f32 %v799, 0.0
      %v864 = vmax.f32 %v800, 0.0
      %v865 = vmax.f32 %v801, 0.0
      %v866 = vmax.f32 %v802, 0.0
      %v867 = vmax.f32 %v803, 0.0
      %v868 = vmax.f32 %v804, 0.0
      %v869 = vmax.f32 %v805, 0.0
      %v870 = vmax.f32 %v806, 0.0
      %v871 = vmax.f32 %v807, 0.0
      %v872 = vmax.f32 %v808, 0.0
      %v873 = vmax.f32 %v809, 0.0
      %v874 = vmax.f32 %v810, 0.0
      %v875 = vmax.f32 %v811, 0.0
      %v876 = vmax.f32 %v812, 0.0
      %v877 = vmax.f32 %v813, 0.0
      %v878 = vmax.f32 %v814, 0.0
      %v879 = vmax.f32 %v815, 0.0
      %v880 = vmax.f32 %v816, 0.0
      %v881 = vmax.f32 %v817, 0.0
      %v882 = vmax.f32 %v818, 0.0
      %v883 = vmax.f32 %v819, 0.0
      %v884 = vmax.f32 %v820, 0.0
      %v885 = vmax.f32 %v821, 0.0
      %v886 = vmax.f32 %v822, 0.0
      %v887 = vmax.f32 %v823, 0.0
      %v888 = vmax.f32 %v824, 0.0
      %v889 = vmax.f32 %v825, 0.0
      %v890 = vmax.f32 %v826, 0.0
      %v891 = vmax.f32 %v827, 0.0
      %v892 = vmax.f32 %v828, 0.0
      %v893 = vmax.f32 %v829, 0.0
      %v894 = vmax.f32 %v830, 0.0
      %v895 = vmax.f32 %v831, 0.0
      %v896 = vmax.f32 %v832, 0.0
      %v897 = vmax.f32 %v833, 0.0
      %v898 = vmax.f32 %v834, 0.0
      %v899 = vmax.f32 %v835, 0.0
      %v900 = vmax.f32 %v836, 0.0
      %v901 = vmax.f32 %v837, %v841
      %v902 = vmax.f32 %v838, %v842
      %v903 = vmax.f32 %v839, %v843
      %v904 = vmax.f32 %v840, %v844
      %v905 = vmax.f32 %v845, %v849
      %v906 = vmax.f32 %v846, %v850
      %v907 = vmax.f32 %v847, %v851
      %v908 = vmax.f32 %v848, %v852
      %v909 = vmax.f32 %v853, %v857
      %v910 = vmax.f32 %v854, %v858
      %v911 = vmax.f32 %v855, %v859
      %v912 = vmax.f32 %v856, %v860
      %v913 = vmax.f32 %v861, %v865
      %v914 = vmax.f32 %v862, %v866
      %v915 = vmax.f32 %v863, %v867
      %v916 = vmax.f32 %v864, %v868
      %v917 = vmax.f32 %v869, %v873
      %v918 = vmax.f32 %v870, %v874
      %v919 = vmax.f32 %v871, %v875
      %v920 = vmax.f32 %v872, %v876
      %v921 = vmax.f32 %v877, %v881
      %v922 = vmax.f32 %v878, %v882
      %v923 = vmax.f32 %v879, %v883
      %v924 = vmax.f32 %v880, %v884
      %v925 = vmax.f32 %v885, %v889
      %v926 = vmax.f32 %v886, %v890
      %v927 = vmax.f32 %v887, %v891
      %v928 = vmax.f32 %v888, %v892
      %v929 = vmax.f32 %v893, %v897
      %v930 = vmax.f32 %v894, %v898
      %v931 = vmax.f32 %v895, %v899
      %v932 = vmax.f32 %v896, %v900
      %vm933 = vcmask 523264
      %934 = vst.msk [vmem:[#allocation2] sm:$0xff] %vm933, %v901
      %935 = vst.msk [vmem:[#allocation2 + $0x8] sm:$0xff] %vm933, %v902
      %936 = vst.msk [vmem:[#allocation2 + $0x10] sm:$0xff] %vm933, %v903
      %937 = vst.msk [vmem:[#allocation2 + $0x18] sm:$0xff] %vm933, %v904
      %938 = vst.msk [vmem:[#allocation2 + $0x20] sm:$0xff] %vm933, %v905
      %939 = vst.msk [vmem:[#allocation2 + $0x28] sm:$0xff] %vm933, %v906
      %940 = vst.msk [vmem:[#allocation2 + $0x30] sm:$0xff] %vm933, %v907
      %941 = vst.msk [vmem:[#allocation2 + $0x38] sm:$0xff] %vm933, %v908
      %942 = vst.msk [vmem:[#allocation2 + $0x40] sm:$0xff] %vm933, %v909
      %943 = vst.msk [vmem:[#allocation2 + $0x48] sm:$0xff] %vm933, %v910
      %944 = vst.msk [vmem:[#allocation2 + $0x50] sm:$0xff] %vm933, %v911
      %945 = vst.msk [vmem:[#allocation2 + $0x58] sm:$0xff] %vm933, %v912
      %946 = vst.msk [vmem:[#allocation2 + $0x60] sm:$0xff] %vm933, %v913
      %947 = vst.msk [vmem:[#allocation2 + $0x68] sm:$0xff] %vm933, %v914
      %948 = vst.msk [vmem:[#allocation2 + $0x70] sm:$0xff] %vm933, %v915
      %949 = vst.msk [vmem:[#allocation2 + $0x78] sm:$0xff] %vm933, %v916
      %950 = vst.msk [vmem:[#allocation2 + $0x80] sm:$0xff] %vm933, %v917
      %951 = vst.msk [vmem:[#allocation2 + $0x88] sm:$0xff] %vm933, %v918
      %952 = vst.msk [vmem:[#allocation2 + $0x90] sm:$0xff] %vm933, %v919
      %953 = vst.msk [vmem:[#allocation2 + $0x98] sm:$0xff] %vm933, %v920
      %954 = vst.msk [vmem:[#allocation2 + $0xa0] sm:$0xff] %vm933, %v921
      %955 = vst.msk [vmem:[#allocation2 + $0xa8] sm:$0xff] %vm933, %v922
      %956 = vst.msk [vmem:[#allocation2 + $0xb0] sm:$0xff] %vm933, %v923
      %957 = vst.msk [vmem:[#allocation2 + $0xb8] sm:$0xff] %vm933, %v924
      %958 = vst.msk [vmem:[#allocation2 + $0xc0] sm:$0xff] %vm933, %v925
      %959 = vst.msk [vmem:[#allocation2 + $0xc8] sm:$0xff] %vm933, %v926
      %960 = vst.msk [vmem:[#allocation2 + $0xd0] sm:$0xff] %vm933, %v927
      %961 = vst.msk [vmem:[#allocation2 + $0xd8] sm:$0xff] %vm933, %v928
      %962 = vst.msk [vmem:[#allocation2 + $0xe0] sm:$0xff] %vm933, %v929
      %963 = vst.msk [vmem:[#allocation2 + $0xe8] sm:$0xff] %vm933, %v930
      %964 = vst.msk [vmem:[#allocation2 + $0xf0] sm:$0xff] %vm933, %v931
      %965 = vst.msk [vmem:[#allocation2 + $0xf8] sm:$0xff] %vm933, %v932
      %v966 = vld [vmem:[#allocation2] ss:$2 sm:$0xff]
      %s967 = scalar_lea.vmem [#allocation2], 16
      %v968 = vld [vmem:[%s967] ss:$2 sm:$0xff]
      %s969 = scalar_lea.vmem [#allocation2], 32
      %v970 = vld [vmem:[%s969] ss:$2 sm:$0xff]
      %s971 = scalar_lea.vmem [#allocation2], 48
      %v972 = vld [vmem:[%s971] ss:$2 sm:$0xff]
      %s973 = scalar_lea.vmem [#allocation2], 64
      %v974 = vld [vmem:[%s973] ss:$2 sm:$0xff]
      %s975 = scalar_lea.vmem [#allocation2], 80
      %v976 = vld [vmem:[%s975] ss:$2 sm:$0xff]
      %s977 = scalar_lea.vmem [#allocation2], 96
      %v978 = vld [vmem:[%s977] ss:$2 sm:$0xff]
      %s979 = scalar_lea.vmem [#allocation2], 112
      %v980 = vld [vmem:[%s979] ss:$2 sm:$0xff]
      %s981 = scalar_lea.vmem [#allocation2], 128
      %v982 = vld [vmem:[%s981] ss:$2 sm:$0xff]
      %s983 = scalar_lea.vmem [#allocation2], 144
      %v984 = vld [vmem:[%s983] ss:$2 sm:$0xff]
      %s985 = scalar_lea.vmem [#allocation2], 160
      %v986 = vld [vmem:[%s985] ss:$2 sm:$0xff]
      %s987 = scalar_lea.vmem [#allocation2], 176
      %v988 = vld [vmem:[%s987] ss:$2 sm:$0xff]
      %s989 = scalar_lea.vmem [#allocation2], 192
      %v990 = vld [vmem:[%s989] ss:$2 sm:$0xff]
      %s991 = scalar_lea.vmem [#allocation2], 208
      %v992 = vld [vmem:[%s991] ss:$2 sm:$0xff]
      %s993 = scalar_lea.vmem [#allocation2], 224
      %v994 = vld [vmem:[%s993] ss:$2 sm:$0xff]
      %s995 = scalar_lea.vmem [#allocation2], 240
      %v996 = vld [vmem:[%s995] ss:$2 sm:$0xff]
      %s997 = scalar_lea.vmem [#allocation2], 1
      %v998 = vld [vmem:[%s997] ss:$2 sm:$0xff]
      %s999 = scalar_lea.vmem [#allocation2], 17
      %v1000 = vld [vmem:[%s999] ss:$2 sm:$0xff]
      %s1001 = scalar_lea.vmem [#allocation2], 33
      %v1002 = vld [vmem:[%s1001] ss:$2 sm:$0xff]
      %s1003 = scalar_lea.vmem [#allocation2], 49
      %v1004 = vld [vmem:[%s1003] ss:$2 sm:$0xff]
      %s1005 = scalar_lea.vmem [#allocation2], 65
      %v1006 = vld [vmem:[%s1005] ss:$2 sm:$0xff]
      %s1007 = scalar_lea.vmem [#allocation2], 81
      %v1008 = vld [vmem:[%s1007] ss:$2 sm:$0xff]
      %s1009 = scalar_lea.vmem [#allocation2], 97
      %v1010 = vld [vmem:[%s1009] ss:$2 sm:$0xff]
      %s1011 = scalar_lea.vmem [#allocation2], 113
      %v1012 = vld [vmem:[%s1011] ss:$2 sm:$0xff]
      %s1013 = scalar_lea.vmem [#allocation2], 129
      %v1014 = vld [vmem:[%s1013] ss:$2 sm:$0xff]
      %s1015 = scalar_lea.vmem [#allocation2], 145
      %v1016 = vld [vmem:[%s1015] ss:$2 sm:$0xff]
      %s1017 = scalar_lea.vmem [#allocation2], 161
      %v1018 = vld [vmem:[%s1017] ss:$2 sm:$0xff]
      %s1019 = scalar_lea.vmem [#allocation2], 177
      %v1020 = vld [vmem:[%s1019] ss:$2 sm:$0xff]
      %s1021 = scalar_lea.vmem [#allocation2], 193
      %v1022 = vld [vmem:[%s1021] ss:$2 sm:$0xff]
      %s1023 = scalar_lea.vmem [#allocation2], 209
      %v1024 = vld [vmem:[%s1023] ss:$2 sm:$0xff]
      %s1025 = scalar_lea.vmem [#allocation2], 225
      %v1026 = vld [vmem:[%s1025] ss:$2 sm:$0xff]
      %s1027 = scalar_lea.vmem [#allocation2], 241
      %v1028 = vld [vmem:[%s1027] ss:$2 sm:$0xff]
      %v1029 = vmax.f32 %v966, %v998
      %v1030 = vmax.f32 %v968, %v1000
      %v1031 = vmax.f32 %v970, %v1002
      %v1032 = vmax.f32 %v972, %v1004
      %v1033 = vmax.f32 %v974, %v1006
      %v1034 = vmax.f32 %v976, %v1008
      %v1035 = vmax.f32 %v978, %v1010
      %v1036 = vmax.f32 %v980, %v1012
      %v1037 = vmax.f32 %v982, %v1014
      %v1038 = vmax.f32 %v984, %v1016
      %v1039 = vmax.f32 %v986, %v1018
      %v1040 = vmax.f32 %v988, %v1020
      %v1041 = vmax.f32 %v990, %v1022
      %v1042 = vmax.f32 %v992, %v1024
      %v1043 = vmax.f32 %v994, %v1026
      %v1044 = vmax.f32 %v996, %v1028
      %1045 = vst.msk [vmem:[%s197] sm:$0xff] %vm933, 0.0
      %1046 = vst.msk [vmem:[%s197 + $0x8] sm:$0xff] %vm933, 0.0
      %vm1047 = vcmask 517120
      %1048 = vst.msk [vmem:[%s197 + $0x10] sm:$0x3] %vm1047, 0.0
      %1049 = vst.msk [vmem:[%s197 + $0x18] sm:$0xff] %vm933, 0.0
      %1050 = vst.msk [vmem:[%s197 + $0x20] sm:$0xff] %vm933, 0.0
      %1051 = vst.msk [vmem:[%s197 + $0x28] sm:$0x3] %vm1047, 0.0
      %1052 = vst.msk [vmem:[%s197 + $0x30] sm:$0xff] %vm933, 0.0
      %1053 = vst.msk [vmem:[%s197 + $0x38] sm:$0xff] %vm933, 0.0
      %1054 = vst.msk [vmem:[%s197 + $0x40] sm:$0x3] %vm1047, 0.0
      %1055 = vst.msk [vmem:[%s197 + $0x48] sm:$0xff] %vm933, 0.0
      %1056 = vst.msk [vmem:[%s197 + $0x50] sm:$0xff] %vm933, 0.0
      %1057 = vst.msk [vmem:[%s197 + $0x58] sm:$0x3] %vm1047, 0.0
      %1058 = vst.msk [vmem:[%s197 + $0x60] sm:$0xff] %vm933, 0.0
      %1059 = vst.msk [vmem:[%s197 + $0x68] sm:$0xff] %vm933, 0.0
      %1060 = vst.msk [vmem:[%s197 + $0x70] sm:$0x3] %vm1047, 0.0
      %1061 = vst.msk [vmem:[%s197 + $0x78] sm:$0xff] %vm933, 0.0
      %1062 = vst.msk [vmem:[%s197 + $0x80] sm:$0xff] %vm933, 0.0
      %1063 = vst.msk [vmem:[%s197 + $0x88] sm:$0x3] %vm1047, 0.0
      %1064 = vst.msk [vmem:[%s197 + $0x90] sm:$0xff] %vm933, 0.0
      %1065 = vst.msk [vmem:[%s197 + $0x98] sm:$0xff] %vm933, 0.0
      %1066 = vst.msk [vmem:[%s197 + $0xa0] sm:$0x3] %vm1047, 0.0
      %1067 = vst.msk [vmem:[%s197 + $0xa8] sm:$0xff] %vm933, 0.0
      %1068 = vst.msk [vmem:[%s197 + $0xb0] sm:$0xff] %vm933, 0.0
      %1069 = vst.msk [vmem:[%s197 + $0xb8] sm:$0x3] %vm1047, 0.0
      %1070 = vst.msk [vmem:[%s197 + $0xc0] sm:$0xff] %vm933, 0.0
      %1071 = vst.msk [vmem:[%s197 + $0xc8] sm:$0xff] %vm933, 0.0
      %1072 = vst.msk [vmem:[%s197 + $0xd0] sm:$0x3] %vm1047, 0.0
      %1073 = vst.msk [vmem:[%s197 + $0xd8] sm:$0xff] %vm933, 0.0
      %1074 = vst.msk [vmem:[%s197 + $0xe0] sm:$0xff] %vm933, 0.0
      %1075 = vst.msk [vmem:[%s197 + $0xe8] sm:$0x3] %vm1047, 0.0
      %s1076 = scalar_lea.vmem %s197, 24
      %1077 = vst.msk [vmem:[%s1076 + $0x1] sm:$0xff] %vm933, %v1029
      %1078 = vst.msk [vmem:[%s1076 + $0x9] sm:$0xff] %vm933, %v1030
      %1079 = vst.msk [vmem:[%s1076 + $0x19] sm:$0xff] %vm933, %v1031
      %1080 = vst.msk [vmem:[%s1076 + $0x21] sm:$0xff] %vm933, %v1032
      %1081 = vst.msk [vmem:[%s1076 + $0x31] sm:$0xff] %vm933, %v1033
      %1082 = vst.msk [vmem:[%s1076 + $0x39] sm:$0xff] %vm933, %v1034
      %1083 = vst.msk [vmem:[%s1076 + $0x49] sm:$0xff] %vm933, %v1035
      %1084 = vst.msk [vmem:[%s1076 + $0x51] sm:$0xff] %vm933, %v1036
      %1085 = vst.msk [vmem:[%s1076 + $0x61] sm:$0xff] %vm933, %v1037
      %1086 = vst.msk [vmem:[%s1076 + $0x69] sm:$0xff] %vm933, %v1038
      %1087 = vst.msk [vmem:[%s1076 + $0x79] sm:$0xff] %vm933, %v1039
      %1088 = vst.msk [vmem:[%s1076 + $0x81] sm:$0xff] %vm933, %v1040
      %1089 = vst.msk [vmem:[%s1076 + $0x91] sm:$0xff] %vm933, %v1041
      %1090 = vst.msk [vmem:[%s1076 + $0x99] sm:$0xff] %vm933, %v1042
      %1091 = vst.msk [vmem:[%s1076 + $0xa9] sm:$0xff] %vm933, %v1043
      %1092 = vst.msk [vmem:[%s1076 + $0xb1] sm:$0xff] %vm933, %v1044
      %p1093 = scmp.lt.s32.totalorder %s15, 1
      %s1094 = scalar_select %p1093, %s15, 1
      %s1095 = smul.addr %s1094, 30
      %s1096 = smul.addr %s1095, 8
      %s1097 = scalar_lea.vmem %s4, %s1096
      // Predicated region
      $region37: #{audio_ntt2020_forward.4} parent=35 // pred_check
        %p1098 = pneg %p122
      $region38: #{audio_ntt2020_forward.4} parent=35 // pred_check_branch
        %1100 = sbr.rel (%p1098) target = $region40
      $region39: #{audio_ntt2020_forward.4} parent=35 // pred_region
        _
      $region40: #{audio_ntt2020_forward.4} parent=35 // pred_fallthru
        _
    $region36: #{audio_ntt2020_forward.4} parent=5 // pred_fallthru
      _
    %p1101 = scmp.le.s32.totalorder 2, %s10
    // Predicated region
    $region41: #{audio_ntt2020_forward.4} parent=5 // pred_check
      %p1102 = pneg %p1101
    $region42: #{audio_ntt2020_forward.4} parent=5 // pred_check_branch
      %1104 = sbr.rel (%p1102) target = $region44
    $region43: #{audio_ntt2020_forward.4} parent=5 // pred_region
      %s1105 = ssub.s32 %s10, 2
      // Predicated region
      $region45: #{audio_ntt2020_forward.4} parent=43 // pred_check
        %p1106 = pneg %p128
      $region46: #{audio_ntt2020_forward.4} parent=43 // pred_check_branch
        %1108 = sbr.rel (%p1106) target = $region48
      $region47: #{audio_ntt2020_forward.4} parent=43 // pred_region
        %p1109 = scmp.lt.s32.totalorder %s16, 1
        %s1110 = scalar_select %p1109, %s16, 1
        %s1111 = smul.addr %s1110, 30
        %s1112 = smul.addr %s1111, 8
        %s1113 = scalar_lea.vmem %s4, %s1112
      $region48: #{audio_ntt2020_forward.4} parent=43 // pred_fallthru
        _
    $region44: #{audio_ntt2020_forward.4} parent=5 // pred_fallthru
      _
  $region6: #{audio_ntt2020_forward.4} parent=0 // loop_footer
    %s14 = sadd.s32 1, %s10
  $region7: #{audio_ntt2020_forward.4} parent=0 // loop_footer_branch
    %9 = sbr.rel target = $region3
  $region8: #{audio_ntt2020_forward.4} parent=0 // loop_exit
    _

// kernel: audio_ntt2020_forward.6
$region0: #{audio_ntt2020_forward.6}
  #allocation0 [shape = 'u32[]', space=smem, size = 0x4, offset = 0x4, fixed_abs, tag = 'smem constant byte address 0x4 - core index']
  #allocation1 [shape = 'u32[144,128]{1,0:T(1,128)}', space=vmem, size = 0x12000, scoped, tag = 'internal scratch']
  #allocation2 [shape = 'f32[1,2,8,64]{3,2,1,0:T(8,128)}', space=vmem, size = 0x2000, scoped, tag = 'scratch operand']
  %s0 = inlined_call_operand.vmem [shape: f32[2,6,10,64], index: 0, kind: input, shape index: {}]
  %s1 = inlined_call_operand.vmem [shape: bf16[3,192,64], index: 1, kind: input, shape index: {}]
  %s2 = inlined_call_operand.vmem [shape: f32[1,64], index: 2, kind: input, shape index: {}]
  %s3 = inlined_call_operand.vmem [shape: f32[1,64], index: 3, kind: input, shape index: {}]
  %s4 = inlined_call_operand.vmem [shape: f32[2,2,4,64], index: 4, kind: output, shape index: {}]
  %s5 = sld [smem:[#allocation0]]
  $region49: #{audio_ntt2020_forward.6} parent=0
    _
  %s7 = ssub.s32 1, %s5
  %s8 = scalar_select 0, %s7, %s5
  loop: start=0, step=1, limit=4
  $region2: #{audio_ntt2020_forward.6} parent=0 // loop_pre_header
    _
  $region3: #{audio_ntt2020_forward.6} parent=0 // loop_header
    %s10 = sphi 0, %s14
    %p11 = scmp.ge.s32.totalorder %s10, 4
    %s20 = sphi 0, %s22
    %s23 = sphi 0, %s20
    %s24 = sphi 0, %s23
    %s40 = sphi 0, %s24
    %s44 = sphi 0, %s44
    %s46 = sphi 0, %s44
    %s47 = sphi 0, %s46
    %s61 = sphi 0, %s47
    %s65 = sphi 0, %s65
    %s67 = sphi 0, %s65
    %s68 = sphi 0, %s67
    %s82 = sphi 0, %s68
    %s86 = sphi 0, %s86
    %s88 = sphi 0, %s86
    %s89 = sphi 0, %s88
    %s103 = sphi 0, %s89
    %s109 = sphi 0, %s111
    %s112 = sphi 0, %s109
    %s113 = sphi 0, %s112
    %s129 = sphi 0, %s113
  $region4: #{audio_ntt2020_forward.6} parent=0 // loop_header_branch
    %13 = sbr.rel (%p11) target = $region8
  $region5: #{audio_ntt2020_forward.6} parent=0 // loop_body
    %s15 = ssub.s32 %s10, 1
    %s16 = ssub.s32 %s10, 2
    %s17 = sadd.s32 %s10, 1
    %s18 = ssub.s32 %s10, %s17
    %p19 = scmp.eq.s32.totalorder %s18, 0
    %s21 = sadd.s32 %s20, 1
    %s22 = scalar_select %p19, %s20, %s21
    %p25 = pneg %p19
    %p26 = scmp.eq.s32.totalorder %s10, 1
    %p27 = por %p25, %p26
    %p28 = scmp.ne.s32.totalorder %s20, %s23
    %p29 = scmp.eq.s32.totalorder %s10, 0
    %p30 = por %p28, %p29
    %p31 = scmp.ne.s32.totalorder %s20, %s23
    %p32 = scmp.eq.s32.totalorder %s15, 1
    %p33 = por %p31, %p32
    %p34 = scmp.ne.s32.totalorder %s23, %s24
    %p35 = scmp.eq.s32.totalorder %s15, 0
    %p36 = por %p34, %p35
    %p37 = scmp.ne.s32.totalorder %s23, %s24
    %p38 = scmp.eq.s32.totalorder %s16, 1
    %p39 = por %p37, %p38
    %p41 = scmp.ne.s32.totalorder %s24, %s40
    %p42 = scmp.eq.s32.totalorder %s16, 0
    %p43 = por %p41, %p42
    %s45 = sadd.s32 %s44, 1
    %p48 = scmp.eq.s32.totalorder %s10, 1
    %p49 = scmp.ne.s32.totalorder %s44, %s46
    %p50 = scmp.eq.s32.totalorder %s10, 0
    %p51 = por %p49, %p50
    %p52 = scmp.ne.s32.totalorder %s44, %s46
    %p53 = scmp.eq.s32.totalorder %s15, 1
    %p54 = por %p52, %p53
    %p55 = scmp.ne.s32.totalorder %s46, %s47
    %p56 = scmp.eq.s32.totalorder %s15, 0
    %p57 = por %p55, %p56
    %p58 = scmp.ne.s32.totalorder %s46, %s47
    %p59 = scmp.eq.s32.totalorder %s16, 1
    %p60 = por %p58, %p59
    %p62 = scmp.ne.s32.totalorder %s47, %s61
    %p63 = scmp.eq.s32.totalorder %s16, 0
    %p64 = por %p62, %p63
    %s66 = sadd.s32 %s65, 1
    %p69 = scmp.eq.s32.totalorder %s10, 1
    %p70 = scmp.ne.s32.totalorder %s65, %s67
    %p71 = scmp.eq.s32.totalorder %s10, 0
    %p72 = por %p70, %p71
    %p73 = scmp.ne.s32.totalorder %s65, %s67
    %p74 = scmp.eq.s32.totalorder %s15, 1
    %p75 = por %p73, %p74
    %p76 = scmp.ne.s32.totalorder %s67, %s68
    %p77 = scmp.eq.s32.totalorder %s15, 0
    %p78 = por %p76, %p77
    %p79 = scmp.ne.s32.totalorder %s67, %s68
    %p80 = scmp.eq.s32.totalorder %s16, 1
    %p81 = por %p79, %p80
    %p83 = scmp.ne.s32.totalorder %s68, %s82
    %p84 = scmp.eq.s32.totalorder %s16, 0
    %p85 = por %p83, %p84
    %s87 = sadd.s32 %s86, 1
    %p90 = scmp.eq.s32.totalorder %s10, 1
    %p91 = scmp.ne.s32.totalorder %s86, %s88
    %p92 = scmp.eq.s32.totalorder %s10, 0
    %p93 = por %p91, %p92
    %p94 = scmp.ne.s32.totalorder %s86, %s88
    %p95 = scmp.eq.s32.totalorder %s15, 1
    %p96 = por %p94, %p95
    %p97 = scmp.ne.s32.totalorder %s88, %s89
    %p98 = scmp.eq.s32.totalorder %s15, 0
    %p99 = por %p97, %p98
    %p100 = scmp.ne.s32.totalorder %s88, %s89
    %p101 = scmp.eq.s32.totalorder %s16, 1
    %p102 = por %p100, %p101
    %p104 = scmp.ne.s32.totalorder %s89, %s103
    %p105 = scmp.eq.s32.totalorder %s16, 0
    %p106 = por %p104, %p105
    %s107 = ssub.s32 %s10, %s17
    %p108 = scmp.eq.s32.totalorder %s107, 0
    %s110 = sadd.s32 %s109, 1
    %s111 = scalar_select %p108, %s109, %s110
    %p114 = pneg %p108
    %p115 = scmp.eq.s32.totalorder %s10, 1
    %p116 = por %p114, %p115
    %p117 = scmp.ne.s32.totalorder %s109, %s112
    %p118 = scmp.eq.s32.totalorder %s10, 0
    %p119 = por %p117, %p118
    %p120 = scmp.ne.s32.totalorder %s109, %s112
    %p121 = scmp.eq.s32.totalorder %s15, 1
    %p122 = por %p120, %p121
    %p123 = scmp.ne.s32.totalorder %s112, %s113
    %p124 = scmp.eq.s32.totalorder %s15, 0
    %p125 = por %p123, %p124
    %p126 = scmp.ne.s32.totalorder %s112, %s113
    %p127 = scmp.eq.s32.totalorder %s16, 1
    %p128 = por %p126, %p127
    %p130 = scmp.ne.s32.totalorder %s113, %s129
    %p131 = scmp.eq.s32.totalorder %s16, 0
    %p132 = por %p130, %p131
    %p133 = scmp.le.s32.totalorder 1, %s10
    %p134 = scmp.lt.s32.totalorder %s10, 3
    %p135 = pnand %p133, %p134
    %p136 = pneg %p135
    // Predicated region
    $region9: #{audio_ntt2020_forward.6} parent=5 // pred_check
      _
    $region10: #{audio_ntt2020_forward.6} parent=5 // pred_check_branch
      %138 = sbr.rel (%p135) target = $region12
    $region11: #{audio_ntt2020_forward.6} parent=5 // pred_region
      %s139 = ssub.s32 %s10, 1
      // Predicated region
      $region13: #{audio_ntt2020_forward.6} parent=11 // pred_check
        %p140 = pneg %p57
      $region14: #{audio_ntt2020_forward.6} parent=11 // pred_check_branch
        %142 = sbr.rel (%p140) target = $region16
      $region15: #{audio_ntt2020_forward.6} parent=11 // pred_region
        _
      $region16: #{audio_ntt2020_forward.6} parent=11 // pred_fallthru
        _
      // Predicated region
      $region17: #{audio_ntt2020_forward.6} parent=11 // pred_check
        %p143 = pneg %p78
      $region18: #{audio_ntt2020_forward.6} parent=11 // pred_check_branch
        %145 = sbr.rel (%p143) target = $region20
      $region19: #{audio_ntt2020_forward.6} parent=11 // pred_region
        _
      $region20: #{audio_ntt2020_forward.6} parent=11 // pred_fallthru
        _
      // Predicated region
      $region21: #{audio_ntt2020_forward.6} parent=11 // pred_check
        %p146 = pneg %p99
      $region22: #{audio_ntt2020_forward.6} parent=11 // pred_check_branch
        %148 = sbr.rel (%p146) target = $region24
      $region23: #{audio_ntt2020_forward.6} parent=11 // pred_region
        _
      $region24: #{audio_ntt2020_forward.6} parent=11 // pred_fallthru
        _
    $region12: #{audio_ntt2020_forward.6} parent=5 // pred_fallthru
      _
    %p149 = scmp.lt.s32.totalorder %s10, 2
    // Predicated region
    $region25: #{audio_ntt2020_forward.6} parent=5 // pred_check
      %p150 = pneg %p149
    $region26: #{audio_ntt2020_forward.6} parent=5 // pred_check_branch
      %152 = sbr.rel (%p150) target = $region28
    $region27: #{audio_ntt2020_forward.6} parent=5 // pred_region
      // Predicated region
      $region29: #{audio_ntt2020_forward.6} parent=27 // pred_check
        %p153 = pneg %p30
      $region30: #{audio_ntt2020_forward.6} parent=27 // pred_check_branch
        %155 = sbr.rel (%p153) target = $region32
      $region31: #{audio_ntt2020_forward.6} parent=27 // pred_region
        %p156 = scmp.lt.s32.totalorder %s10, 1
        %s157 = scalar_select %p156, %s10, 1
        %s158 = smul.addr %s157, 12
        %s159 = smul.addr %s158, 8
        %s160 = scalar_lea.vmem %s0, %s159
      $region32: #{audio_ntt2020_forward.6} parent=27 // pred_fallthru
        _
    $region28: #{audio_ntt2020_forward.6} parent=5 // pred_fallthru
      _
    %p161 = scmp.le.s32.totalorder 1, %s10
    %p162 = scmp.lt.s32.totalorder %s10, 3
    %p163 = pnand %p161, %p162
    %p164 = pneg %p163
    // Predicated region
    $region33: #{audio_ntt2020_forward.6} parent=5 // pred_check
      _
    $region34: #{audio_ntt2020_forward.6} parent=5 // pred_check_branch
      %166 = sbr.rel (%p163) target = $region36
    $region35: #{audio_ntt2020_forward.6} parent=5 // pred_region
      %s167 = ssub.s32 %s10, 1
      %p168 = scmp.lt.s32.totalorder %s15, 1
      %s169 = scalar_select %p168, %s15, 1
      %s170 = smul.addr %s169, 12
      %s171 = smul.addr %s170, 8
      %s172 = scalar_lea.vmem %s0, %s171
      %p173 = pneg %p36
      %p174 = pneg %p33
      %p175 = pneg %p57
      %p176 = pneg %p54
      %p177 = pneg %p78
      %p178 = pneg %p75
      %p179 = pneg %p99
      %p180 = pneg %p96
      %p181 = pneg %p125
      %p182 = pneg %p122
      %p183 = scmp.lt.s32.totalorder %s15, 1
      %s184 = scalar_select %p183, %s15, 1
      %s185 = smul.addr %s184, 2
      %s186 = smul.addr %s185, 4
      %s187 = scalar_lea.vmem %s4, %s186
      %p188 = scmp.lt.s32.totalorder %s15, 1
      %s189 = scalar_select %p188, %s15, 1
      %s190 = smul.addr %s189, 12
      %s191 = smul.addr %s190, 8
      %s192 = scalar_lea.vmem %s0, %s191
      %p193 = scmp.lt.s32.totalorder %s15, 1
      %s194 = scalar_select %p193, %s15, 1
      %s195 = smul.addr %s194, 2
      %s196 = smul.addr %s195, 4
      %s197 = scalar_lea.vmem %s4, %s196
      %v199 = vld [vmem:[%s192] sm:$0xff]
      %v200 = vld [vmem:[%s192 + $0x10] sm:$0xff]
      %v201 = vld [vmem:[%s192 + $0x20] sm:$0xff]
      %v202 = vld [vmem:[%s192 + $0x30] sm:$0xff]
      %v203 = vld [vmem:[%s192 + $0x1] sm:$0xff]
      %v204 = vld [vmem:[%s192 + $0x11] sm:$0xff]
      %v205 = vld [vmem:[%s192 + $0x21] sm:$0xff]
      %v206 = vld [vmem:[%s192 + $0x31] sm:$0xff]
      %v207 = vld [vmem:[%s192 + $0x2] sm:$0xff]
      %v208 = vld [vmem:[%s192 + $0x12] sm:$0xff]
      %v209 = vld [vmem:[%s192 + $0x22] sm:$0xff]
      %v210 = vld [vmem:[%s192 + $0x32] sm:$0xff]
      %215 = vrot.lane.b32.xlu0 %v203, 64
      %v216 = vpop.permute.xlu0 %215
      %217 = vrot.lane.b32.xlu0 %v204, 64
      %v218 = vpop.permute.xlu0 %217
      %219 = vrot.lane.b32.xlu0 %v205, 64
      %v220 = vpop.permute.xlu0 %219
      %221 = vrot.lane.b32.xlu0 %v206, 64
      %v222 = vpop.permute.xlu0 %221
      %vm227 = vcmask 523264
      %v228 = vsel %vm227, %v199, %v216
      %v229 = vsel %vm227, %v200, %v218
      %v230 = vsel %vm227, %v201, %v220
      %v231 = vsel %vm227, %v202, %v222
      %v232 = vpack.c.bf16 %v228, %v228
      %v233 = vpack.c.bf16 %v207, %v207
      %v234 = vpack.c.bf16 %v229, %v229
      %v235 = vpack.c.bf16 %v208, %v208
      %v236 = vpack.c.bf16 %v230, %v230
      %v237 = vpack.c.bf16 %v209, %v209
      %v238 = vpack.c.bf16 %v231, %v231
      %v239 = vpack.c.bf16 %v210, %v210
      %v248 = vunpack.c.l.b16 %v232
      %v249 = vunpack.c.l.b16 %v233
      %v250 = vunpack.c.l.b16 %v234
      %v251 = vunpack.c.l.b16 %v235
      %v252 = vunpack.c.l.b16 %v236
      %v253 = vunpack.c.l.b16 %v237
      %v254 = vunpack.c.l.b16 %v238
      %v255 = vunpack.c.l.b16 %v239
      %v256 = vld [vmem:[%s1] sm:$0xf]
      %v257 = vld [vmem:[%s1 + $0x4] sm:$0xf]
      %v258 = vld [vmem:[%s1 + $0x8] sm:$0xf]
      %v259 = vld [vmem:[%s1 + $0xc] sm:$0xf]
      %v260 = vld [vmem:[%s1 + $0x10] sm:$0xf]
      %v261 = vld [vmem:[%s1 + $0x14] sm:$0xf]
      %v262 = vld [vmem:[%s1 + $0x18] sm:$0xf]
      %v263 = vld [vmem:[%s1 + $0x1c] sm:$0xf]
      %v264 = vld [vmem:[%s1 + $0x20] sm:$0xf]
      %v265 = vld [vmem:[%s1 + $0x24] sm:$0xf]
      %v266 = vld [vmem:[%s1 + $0x28] sm:$0xf]
      %v267 = vld [vmem:[%s1 + $0x2c] sm:$0xf]
      %v268 = vld [vmem:[%s1 + $0x30] sm:$0xf]
      %v269 = vld [vmem:[%s1 + $0x34] sm:$0xf]
      %v270 = vld [vmem:[%s1 + $0x38] sm:$0xf]
      %v271 = vld [vmem:[%s1 + $0x3c] sm:$0xf]
      %v272 = vld [vmem:[%s1 + $0x40] sm:$0xf]
      %v273 = vld [vmem:[%s1 + $0x44] sm:$0xf]
      %v274 = vld [vmem:[%s1 + $0x48] sm:$0xf]
      %v275 = vld [vmem:[%s1 + $0x4c] sm:$0xf]
      %v276 = vld [vmem:[%s1 + $0x50] sm:$0xf]
      %v277 = vld [vmem:[%s1 + $0x54] sm:$0xf]
      %v278 = vld [vmem:[%s1 + $0x58] sm:$0xf]
      %v279 = vld [vmem:[%s1 + $0x5c] sm:$0xf]
      %s280 = scalar_lea.vmem %s192, 16
      %v281 = vld [vmem:[%s280] sm:$0xff]
      %v282 = vld [vmem:[%s280 + $0x10] sm:$0xff]
      %v283 = vld [vmem:[%s280 + $0x20] sm:$0xff]
      %v284 = vld [vmem:[%s280 + $0x30] sm:$0xff]
      %v285 = vld [vmem:[%s280 + $0x1] sm:$0xff]
      %v286 = vld [vmem:[%s280 + $0x11] sm:$0xff]
      %v287 = vld [vmem:[%s280 + $0x21] sm:$0xff]
      %v288 = vld [vmem:[%s280 + $0x31] sm:$0xff]
      %v289 = vld [vmem:[%s280 + $0x2] sm:$0xff]
      %v290 = vld [vmem:[%s280 + $0x12] sm:$0xff]
      %v291 = vld [vmem:[%s280 + $0x22] sm:$0xff]
      %v292 = vld [vmem:[%s280 + $0x32] sm:$0xff]
      %297 = vrot.lane.b32.xlu0 %v285, 64
      %v298 = vpop.permute.xlu0 %297
      %299 = vrot.lane.b32.xlu0 %v286, 64
      %v300 = vpop.permute.xlu0 %299
      %301 = vrot.lane.b32.xlu0 %v287, 64
      %v302 = vpop.permute.xlu0 %301
      %303 = vrot.lane.b32.xlu0 %v288, 64
      %v304 = vpop.permute.xlu0 %303
      %v309 = vsel %vm227, %v281, %v298
      %v310 = vsel %vm227, %v282, %v300
      %v311 = vsel %vm227, %v283, %v302
      %v312 = vsel %vm227, %v284, %v304
      %v313 = vpack.c.bf16 %v309, %v309
      %v314 = vpack.c.bf16 %v289, %v289
      %v315 = vpack.c.bf16 %v310, %v310
      %v316 = vpack.c.bf16 %v290, %v290
      %v317 = vpack.c.bf16 %v311, %v311
      %v318 = vpack.c.bf16 %v291, %v291
      %v319 = vpack.c.bf16 %v312, %v312
      %v320 = vpack.c.bf16 %v292, %v292
      %v329 = vunpack.c.l.b16 %v313
      %v330 = vunpack.c.l.b16 %v314
      %v331 = vunpack.c.l.b16 %v315
      %v332 = vunpack.c.l.b16 %v316
      %v333 = vunpack.c.l.b16 %v317
      %v334 = vunpack.c.l.b16 %v318
      %v335 = vunpack.c.l.b16 %v319
      %v336 = vunpack.c.l.b16 %v320
      %s337 = scalar_lea.vmem %s1, 96
      %v338 = vld [vmem:[%s337] sm:$0xf]
      %v339 = vld [vmem:[%s337 + $0x4] sm:$0xf]
      %v340 = vld [vmem:[%s337 + $0x8] sm:$0xf]
      %v341 = vld [vmem:[%s337 + $0xc] sm:$0xf]
      %v342 = vld [vmem:[%s337 + $0x10] sm:$0xf]
      %v343 = vld [vmem:[%s337 + $0x14] sm:$0xf]
      %v344 = vld [vmem:[%s337 + $0x18] sm:$0xf]
      %v345 = vld [vmem:[%s337 + $0x1c] sm:$0xf]
      %v346 = vld [vmem:[%s337 + $0x20] sm:$0xf]
      %v347 = vld [vmem:[%s337 + $0x24] sm:$0xf]
      %v348 = vld [vmem:[%s337 + $0x28] sm:$0xf]
      %v349 = vld [vmem:[%s337 + $0x2c] sm:$0xf]
      %v350 = vld [vmem:[%s337 + $0x30] sm:$0xf]
      %v351 = vld [vmem:[%s337 + $0x34] sm:$0xf]
      %v352 = vld [vmem:[%s337 + $0x38] sm:$0xf]
      %v353 = vld [vmem:[%s337 + $0x3c] sm:$0xf]
      %v354 = vld [vmem:[%s337 + $0x40] sm:$0xf]
      %v355 = vld [vmem:[%s337 + $0x44] sm:$0xf]
      %v356 = vld [vmem:[%s337 + $0x48] sm:$0xf]
      %v357 = vld [vmem:[%s337 + $0x4c] sm:$0xf]
      %v358 = vld [vmem:[%s337 + $0x50] sm:$0xf]
      %v359 = vld [vmem:[%s337 + $0x54] sm:$0xf]
      %v360 = vld [vmem:[%s337 + $0x58] sm:$0xf]
      %v361 = vld [vmem:[%s337 + $0x5c] sm:$0xf]
      %v362 = vpack.c.b16 %v331, %v329
      %v363 = vpack.c.b16 %v332, %v330
      %v364 = vpack.c.b16 %v335, %v333
      %v365 = vpack.c.b16 %v336, %v334
      %v392 = vunpack.c.l.b16 %v338
      %v393 = vunpack.c.l.b16 %v339
      %v394 = vunpack.c.l.b16 %v340
      %v395 = vunpack.c.l.b16 %v341
      %v396 = vunpack.c.l.b16 %v342
      %v397 = vunpack.c.l.b16 %v343
      %v398 = vunpack.c.l.b16 %v344
      %v399 = vunpack.c.l.b16 %v345
      %v400 = vunpack.c.l.b16 %v346
      %v401 = vunpack.c.l.b16 %v347
      %v402 = vunpack.c.l.b16 %v348
      %v403 = vunpack.c.l.b16 %v349
      %v404 = vunpack.c.l.b16 %v350
      %v405 = vunpack.c.l.b16 %v351
      %v406 = vunpack.c.l.b16 %v352
      %v407 = vunpack.c.l.b16 %v353
      %v408 = vunpack.c.l.b16 %v354
      %v409 = vunpack.c.l.b16 %v355
      %v410 = vunpack.c.l.b16 %v356
      %v411 = vunpack.c.l.b16 %v357
      %v412 = vunpack.c.l.b16 %v358
      %v413 = vunpack.c.l.b16 %v359
      %v414 = vunpack.c.l.b16 %v360
      %v415 = vunpack.c.l.b16 %v361
      %v416 = vpack.c.b16 %v393, %v392
      %v417 = vpack.c.b16 %v395, %v394
      %v418 = vpack.c.b16 %v397, %v396
      %v419 = vpack.c.b16 %v399, %v398
      %v420 = vpack.c.b16 %v401, %v400
      %v421 = vpack.c.b16 %v403, %v402
      %v422 = vpack.c.b16 %v405, %v404
      %v423 = vpack.c.b16 %v407, %v406
      %v424 = vpack.c.b16 %v409, %v408
      %v425 = vpack.c.b16 %v411, %v410
      %v426 = vpack.c.b16 %v413, %v412
      %v427 = vpack.c.b16 %v415, %v414
      %v441 = vsel %vm227, %v363, 0
      %v444 = vsel %vm227, %v365, 0
      %446 = vmatprep.subr.bf16.mxu0 0
      %447 = vmatpush1.bf16.msra.mxu0 %v423
      %448 = vmatprep.subr.bf16.mxu0 0
      %449 = vmatpush1.bf16.msra.mxu0 %v422
      %450 = vmatprep.subr.bf16.mxu0 0
      %451 = vmatpush1.bf16.msra.mxu0 %v421
      %452 = vmatprep.subr.bf16.mxu0 0
      %453 = vmatpush1.bf16.msra.mxu0 %v420
      %454 = vmatprep.subr.bf16.mxu0 0
      %455 = vmatpush1.bf16.msra.mxu0 %v419
      %456 = vmatprep.subr.bf16.mxu0 0
      %457 = vmatpush1.bf16.msra.mxu0 %v418
      %458 = vmatprep.subr.bf16.mxu0 0
      %459 = vmatpush1.bf16.msra.mxu0 %v417
      %460 = vmatprep.subr.bf16.mxu0 0
      %461 = vmatpush1.bf16.msra.mxu0 %v416
      %462 = vmatprep.subr.bf16.mxu0 0
      %463 = vmatpush2.bf16.msra.mxu0 0
      %464 = vmatprep.subr.bf16.mxu0 0
      %465 = vmatpush2.bf16.msra.mxu0 0
      %466 = vmatprep.subr.bf16.mxu0 0
      %467 = vmatpush2.bf16.msra.mxu0 0
      %468 = vmatprep.subr.bf16.mxu0 0
      %469 = vmatpush2.bf16.msra.mxu0 0
      %470 = vmatprep.subr.bf16.mxu0 0
      %471 = vmatpush2.bf16.msra.mxu0 %v427
      %472 = vmatprep.subr.bf16.mxu0 0
      %473 = vmatpush2.bf16.msra.mxu0 %v426
      %474 = vmatprep.subr.bf16.mxu0 0
      %475 = vmatpush2.bf16.msra.mxu0 %v425
      %476 = vmatprep.subr.bf16.mxu0 0
      %477 = vmatpush2.bf16.msra.mxu0 %v424
      %478 = vmatprep.mubr.bf16.mxu0 %v441
      %479 = vmatmul.mubr.bf16.gmra.mxu0 %v362
      %v480 = vpop.f32.mrf.mxu0
      %v481 = vadd.f32 0.0, %v480
      %v482 = vpop.f32.mrf.mxu0
      %v483 = vpop.f32.mrf.mxu0
      %v484 = vadd.f32 0.0, %v483
      %v485 = vpop.f32.mrf.mxu0
      %486 = vmatprep.mubr.bf16.mxu0 %v444
      %487 = vmatmul.mubr.bf16.gmra.mxu0 %v364
      %v488 = vpop.f32.mrf.mxu0
      %v489 = vadd.f32 0.0, %v488
      %v490 = vpop.f32.mrf.mxu0
      %v491 = vpop.f32.mrf.mxu0
      %v492 = vadd.f32 0.0, %v491
      %v493 = vpop.f32.mrf.mxu0
      %494 = vdwg.mxu0
      %v495 = vpack.c.b16 %v250, %v248
      %v496 = vpack.c.b16 %v251, %v249
      %v497 = vpack.c.b16 %v254, %v252
      %v498 = vpack.c.b16 %v255, %v253
      %v525 = vunpack.c.l.b16 %v256
      %v526 = vunpack.c.l.b16 %v257
      %v527 = vunpack.c.l.b16 %v258
      %v528 = vunpack.c.l.b16 %v259
      %v529 = vunpack.c.l.b16 %v260
      %v530 = vunpack.c.l.b16 %v261
      %v531 = vunpack.c.l.b16 %v262
      %v532 = vunpack.c.l.b16 %v263
      %v533 = vunpack.c.l.b16 %v264
      %v534 = vunpack.c.l.b16 %v265
      %v535 = vunpack.c.l.b16 %v266
      %v536 = vunpack.c.l.b16 %v267
      %v537 = vunpack.c.l.b16 %v268
      %v538 = vunpack.c.l.b16 %v269
      %v539 = vunpack.c.l.b16 %v270
      %v540 = vunpack.c.l.b16 %v271
      %v541 = vunpack.c.l.b16 %v272
      %v542 = vunpack.c.l.b16 %v273
      %v543 = vunpack.c.l.b16 %v274
      %v544 = vunpack.c.l.b16 %v275
      %v545 = vunpack.c.l.b16 %v276
      %v546 = vunpack.c.l.b16 %v277
      %v547 = vunpack.c.l.b16 %v278
      %v548 = vunpack.c.l.b16 %v279
      %v549 = vpack.c.b16 %v526, %v525
      %v550 = vpack.c.b16 %v528, %v527
      %v551 = vpack.c.b16 %v530, %v529
      %v552 = vpack.c.b16 %v532, %v531
      %v553 = vpack.c.b16 %v534, %v533
      %v554 = vpack.c.b16 %v536, %v535
      %v555 = vpack.c.b16 %v538, %v537
      %v556 = vpack.c.b16 %v540, %v539
      %v557 = vpack.c.b16 %v542, %v541
      %v558 = vpack.c.b16 %v544, %v543
      %v559 = vpack.c.b16 %v546, %v545
      %v560 = vpack.c.b16 %v548, %v547
      %v574 = vsel %vm227, %v496, 0
      %v577 = vsel %vm227, %v498, 0
      %579 = vmatprep.subr.bf16.mxu0 0
      %580 = vmatpush1.bf16.msra.mxu0 %v556
      %581 = vmatprep.subr.bf16.mxu0 0
      %582 = vmatpush1.bf16.msra.mxu0 %v555
      %583 = vmatprep.subr.bf16.mxu0 0
      %584 = vmatpush1.bf16.msra.mxu0 %v554
      %585 = vmatprep.subr.bf16.mxu0 0
      %586 = vmatpush1.bf16.msra.mxu0 %v553
      %587 = vmatprep.subr.bf16.mxu0 0
      %588 = vmatpush1.bf16.msra.mxu0 %v552
      %589 = vmatprep.subr.bf16.mxu0 0
      %590 = vmatpush1.bf16.msra.mxu0 %v551
      %591 = vmatprep.subr.bf16.mxu0 0
      %592 = vmatpush1.bf16.msra.mxu0 %v550
      %593 = vmatprep.subr.bf16.mxu0 0
      %594 = vmatpush1.bf16.msra.mxu0 %v549
      %595 = vmatprep.subr.bf16.mxu0 0
      %596 = vmatpush2.bf16.msra.mxu0 0
      %597 = vmatprep.subr.bf16.mxu0 0
      %598 = vmatpush2.bf16.msra.mxu0 0
      %599 = vmatprep.subr.bf16.mxu0 0
      %600 = vmatpush2.bf16.msra.mxu0 0
      %601 = vmatprep.subr.bf16.mxu0 0
      %602 = vmatpush2.bf16.msra.mxu0 0
      %603 = vmatprep.subr.bf16.mxu0 0
      %604 = vmatpush2.bf16.msra.mxu0 %v560
      %605 = vmatprep.subr.bf16.mxu0 0
      %606 = vmatpush2.bf16.msra.mxu0 %v559
      %607 = vmatprep.subr.bf16.mxu0 0
      %608 = vmatpush2.bf16.msra.mxu0 %v558
      %609 = vmatprep.subr.bf16.mxu0 0
      %610 = vmatpush2.bf16.msra.mxu0 %v557
      %611 = vmatprep.mubr.bf16.mxu0 %v574
      %612 = vmatmul.mubr.bf16.gmra.mxu0 %v495
      %v613 = vpop.f32.mrf.mxu0
      %v614 = vadd.f32 %v481, %v613
      %v615 = vpop.f32.mrf.mxu0
      %v616 = vpop.f32.mrf.mxu0
      %v617 = vadd.f32 %v484, %v616
      %v618 = vpop.f32.mrf.mxu0
      %619 = vmatprep.mubr.bf16.mxu0 %v577
      %620 = vmatmul.mubr.bf16.gmra.mxu0 %v497
      %v621 = vpop.f32.mrf.mxu0
      %v622 = vadd.f32 %v489, %v621
      %v623 = vpop.f32.mrf.mxu0
      %v624 = vpop.f32.mrf.mxu0
      %v625 = vadd.f32 %v492, %v624
      %v626 = vpop.f32.mrf.mxu0
      %627 = vdwg.mxu0
      %s628 = scalar_lea.vmem %s192, 32
      %v629 = vld [vmem:[%s628] sm:$0xff]
      %v630 = vld [vmem:[%s628 + $0x10] sm:$0xff]
      %v631 = vld [vmem:[%s628 + $0x20] sm:$0xff]
      %v632 = vld [vmem:[%s628 + $0x30] sm:$0xff]
      %v633 = vld [vmem:[%s628 + $0x1] sm:$0xff]
      %v634 = vld [vmem:[%s628 + $0x11] sm:$0xff]
      %v635 = vld [vmem:[%s628 + $0x21] sm:$0xff]
      %v636 = vld [vmem:[%s628 + $0x31] sm:$0xff]
      %v637 = vld [vmem:[%s628 + $0x2] sm:$0xff]
      %v638 = vld [vmem:[%s628 + $0x12] sm:$0xff]
      %v639 = vld [vmem:[%s628 + $0x22] sm:$0xff]
      %v640 = vld [vmem:[%s628 + $0x32] sm:$0xff]
      %645 = vrot.lane.b32.xlu0 %v633, 64
      %v646 = vpop.permute.xlu0 %645
      %647 = vrot.lane.b32.xlu0 %v634, 64
      %v648 = vpop.permute.xlu0 %647
      %649 = vrot.lane.b32.xlu0 %v635, 64
      %v650 = vpop.permute.xlu0 %649
      %651 = vrot.lane.b32.xlu0 %v636, 64
      %v652 = vpop.permute.xlu0 %651
      %v657 = vsel %vm227, %v629, %v646
      %v658 = vsel %vm227, %v630, %v648
      %v659 = vsel %vm227, %v631, %v650
      %v660 = vsel %vm227, %v632, %v652
      %v661 = vpack.c.bf16 %v657, %v657
      %v662 = vpack.c.bf16 %v637, %v637
      %v663 = vpack.c.bf16 %v658, %v658
      %v664 = vpack.c.bf16 %v638, %v638
      %v665 = vpack.c.bf16 %v659, %v659
      %v666 = vpack.c.bf16 %v639, %v639
      %v667 = vpack.c.bf16 %v660, %v660
      %v668 = vpack.c.bf16 %v640, %v640
      %v677 = vunpack.c.l.b16 %v661
      %v678 = vunpack.c.l.b16 %v662
      %v679 = vunpack.c.l.b16 %v663
      %v680 = vunpack.c.l.b16 %v664
      %v681 = vunpack.c.l.b16 %v665
      %v682 = vunpack.c.l.b16 %v666
      %v683 = vunpack.c.l.b16 %v667
      %v684 = vunpack.c.l.b16 %v668
      %s685 = scalar_lea.vmem %s1, 192
      %v686 = vld [vmem:[%s685] sm:$0xf]
      %v687 = vld [vmem:[%s685 + $0x4] sm:$0xf]
      %v688 = vld [vmem:[%s685 + $0x8] sm:$0xf]
      %v689 = vld [vmem:[%s685 + $0xc] sm:$0xf]
      %v690 = vld [vmem:[%s685 + $0x10] sm:$0xf]
      %v691 = vld [vmem:[%s685 + $0x14] sm:$0xf]
      %v692 = vld [vmem:[%s685 + $0x18] sm:$0xf]
      %v693 = vld [vmem:[%s685 + $0x1c] sm:$0xf]
      %v694 = vld [vmem:[%s685 + $0x20] sm:$0xf]
      %v695 = vld [vmem:[%s685 + $0x24] sm:$0xf]
      %v696 = vld [vmem:[%s685 + $0x28] sm:$0xf]
      %v697 = vld [vmem:[%s685 + $0x2c] sm:$0xf]
      %v698 = vld [vmem:[%s685 + $0x30] sm:$0xf]
      %v699 = vld [vmem:[%s685 + $0x34] sm:$0xf]
      %v700 = vld [vmem:[%s685 + $0x38] sm:$0xf]
      %v701 = vld [vmem:[%s685 + $0x3c] sm:$0xf]
      %v702 = vld [vmem:[%s685 + $0x40] sm:$0xf]
      %v703 = vld [vmem:[%s685 + $0x44] sm:$0xf]
      %v704 = vld [vmem:[%s685 + $0x48] sm:$0xf]
      %v705 = vld [vmem:[%s685 + $0x4c] sm:$0xf]
      %v706 = vld [vmem:[%s685 + $0x50] sm:$0xf]
      %v707 = vld [vmem:[%s685 + $0x54] sm:$0xf]
      %v708 = vld [vmem:[%s685 + $0x58] sm:$0xf]
      %v709 = vld [vmem:[%s685 + $0x5c] sm:$0xf]
      %v710 = vpack.c.b16 %v679, %v677
      %v711 = vpack.c.b16 %v680, %v678
      %v712 = vpack.c.b16 %v683, %v681
      %v713 = vpack.c.b16 %v684, %v682
      %v740 = vunpack.c.l.b16 %v686
      %v741 = vunpack.c.l.b16 %v687
      %v742 = vunpack.c.l.b16 %v688
      %v743 = vunpack.c.l.b16 %v689
      %v744 = vunpack.c.l.b16 %v690
      %v745 = vunpack.c.l.b16 %v691
      %v746 = vunpack.c.l.b16 %v692
      %v747 = vunpack.c.l.b16 %v693
      %v748 = vunpack.c.l.b16 %v694
      %v749 = vunpack.c.l.b16 %v695
      %v750 = vunpack.c.l.b16 %v696
      %v751 = vunpack.c.l.b16 %v697
      %v752 = vunpack.c.l.b16 %v698
      %v753 = vunpack.c.l.b16 %v699
      %v754 = vunpack.c.l.b16 %v700
      %v755 = vunpack.c.l.b16 %v701
      %v756 = vunpack.c.l.b16 %v702
      %v757 = vunpack.c.l.b16 %v703
      %v758 = vunpack.c.l.b16 %v704
      %v759 = vunpack.c.l.b16 %v705
      %v760 = vunpack.c.l.b16 %v706
      %v761 = vunpack.c.l.b16 %v707
      %v762 = vunpack.c.l.b16 %v708
      %v763 = vunpack.c.l.b16 %v709
      %v764 = vpack.c.b16 %v741, %v740
      %v765 = vpack.c.b16 %v743, %v742
      %v766 = vpack.c.b16 %v745, %v744
      %v767 = vpack.c.b16 %v747, %v746
      %v768 = vpack.c.b16 %v749, %v748
      %v769 = vpack.c.b16 %v751, %v750
      %v770 = vpack.c.b16 %v753, %v752
      %v771 = vpack.c.b16 %v755, %v754
      %v772 = vpack.c.b16 %v757, %v756
      %v773 = vpack.c.b16 %v759, %v758
      %v774 = vpack.c.b16 %v761, %v760
      %v775 = vpack.c.b16 %v763, %v762
      %v789 = vsel %vm227, %v711, 0
      %v792 = vsel %vm227, %v713, 0
      %794 = vmatprep.subr.bf16.mxu0 0
      %795 = vmatpush1.bf16.msra.mxu0 %v771
      %796 = vmatprep.subr.bf16.mxu0 0
      %797 = vmatpush1.bf16.msra.mxu0 %v770
      %798 = vmatprep.subr.bf16.mxu0 0
      %799 = vmatpush1.bf16.msra.mxu0 %v769
      %800 = vmatprep.subr.bf16.mxu0 0
      %801 = vmatpush1.bf16.msra.mxu0 %v768
      %802 = vmatprep.subr.bf16.mxu0 0
      %803 = vmatpush1.bf16.msra.mxu0 %v767
      %804 = vmatprep.subr.bf16.mxu0 0
      %805 = vmatpush1.bf16.msra.mxu0 %v766
      %806 = vmatprep.subr.bf16.mxu0 0
      %807 = vmatpush1.bf16.msra.mxu0 %v765
      %808 = vmatprep.subr.bf16.mxu0 0
      %809 = vmatpush1.bf16.msra.mxu0 %v764
      %810 = vmatprep.subr.bf16.mxu0 0
      %811 = vmatpush2.bf16.msra.mxu0 0
      %812 = vmatprep.subr.bf16.mxu0 0
      %813 = vmatpush2.bf16.msra.mxu0 0
      %814 = vmatprep.subr.bf16.mxu0 0
      %815 = vmatpush2.bf16.msra.mxu0 0
      %816 = vmatprep.subr.bf16.mxu0 0
      %817 = vmatpush2.bf16.msra.mxu0 0
      %818 = vmatprep.subr.bf16.mxu0 0
      %819 = vmatpush2.bf16.msra.mxu0 %v775
      %820 = vmatprep.subr.bf16.mxu0 0
      %821 = vmatpush2.bf16.msra.mxu0 %v774
      %822 = vmatprep.subr.bf16.mxu0 0
      %823 = vmatpush2.bf16.msra.mxu0 %v773
      %824 = vmatprep.subr.bf16.mxu0 0
      %825 = vmatpush2.bf16.msra.mxu0 %v772
      %826 = vmatprep.mubr.bf16.mxu0 %v789
      %827 = vmatmul.mubr.bf16.gmra.mxu0 %v710
      %v828 = vpop.f32.mrf.mxu0
      %v829 = vadd.f32 0.0, %v828
      %v830 = vpop.f32.mrf.mxu0
      %v831 = vpop.f32.mrf.mxu0
      %v832 = vadd.f32 0.0, %v831
      %v833 = vpop.f32.mrf.mxu0
      %834 = vmatprep.mubr.bf16.mxu0 %v792
      %835 = vmatmul.mubr.bf16.gmra.mxu0 %v712
      %v836 = vpop.f32.mrf.mxu0
      %v837 = vadd.f32 0.0, %v836
      %v838 = vpop.f32.mrf.mxu0
      %v839 = vpop.f32.mrf.mxu0
      %v840 = vadd.f32 0.0, %v839
      %v841 = vpop.f32.mrf.mxu0
      %842 = vdwg.mxu0
      %v843 = vadd.f32 %v614, %v829
      %v844 = vadd.f32 %v617, %v832
      %v845 = vadd.f32 %v622, %v837
      %v846 = vadd.f32 %v625, %v840
      %v847 = vld [vmem:[%s2] sm:$0x1]
      %v849 = vlaneseq
      %v850 = vshrl.u32 %v849, 7
      %v851 = vsub.s32 0, %v850
      %v852 = vrot.slane %v847, %v851
      %v854 = vmul.f32 %v843, %v852
      %v855 = vmul.f32 %v844, %v852
      %v856 = vmul.f32 %v845, %v852
      %v857 = vmul.f32 %v846, %v852
      %v858 = vld [vmem:[%s3] sm:$0x1]
      %v860 = vlaneseq
      %v861 = vshrl.u32 %v860, 7
      %v862 = vsub.s32 0, %v861
      %v863 = vrot.slane %v858, %v862
      %v865 = vadd.f32 %v854, %v863
      %v866 = vadd.f32 %v855, %v863
      %v867 = vadd.f32 %v856, %v863
      %v868 = vadd.f32 %v857, %v863
      %v869 = vmax.f32 %v865, 0.0
      %v870 = vmax.f32 %v866, 0.0
      %v871 = vmax.f32 %v867, 0.0
      %v872 = vmax.f32 %v868, 0.0
      %v873 = vmax.f32 %v869, %v870
      %v874 = vmax.f32 %v871, %v872
      %875 = vst.msk [vmem:[#allocation2] sm:$0xff] %vm227, %v873
      %876 = vst.msk [vmem:[#allocation2 + $0x8] sm:$0xff] %vm227, %v874
      %v877 = vld [vmem:[#allocation2] ss:$2 sm:$0xf]
      %s878 = scalar_lea.vmem [#allocation2], 8
      %v879 = vld [vmem:[%s878] ss:$2 sm:$0xf]
      %s880 = scalar_lea.vmem [#allocation2], 1
      %v881 = vld [vmem:[%s880] ss:$2 sm:$0xf]
      %s882 = scalar_lea.vmem [#allocation2], 9
      %v883 = vld [vmem:[%s882] ss:$2 sm:$0xf]
      %v884 = vmax.f32 %v877, %v881
      %v885 = vmax.f32 %v879, %v883
      %vm886 = vcmask 519168
      %887 = vst.msk [vmem:[%s197] sm:$0xf] %vm886, %v884
      %888 = vst.msk [vmem:[%s197 + $0x4] sm:$0xf] %vm886, %v885
      %p889 = scmp.lt.s32.totalorder %s15, 1
      %s890 = scalar_select %p889, %s15, 1
      %s891 = smul.addr %s890, 2
      %s892 = smul.addr %s891, 4
      %s893 = scalar_lea.vmem %s4, %s892
      // Predicated region
      $region37: #{audio_ntt2020_forward.6} parent=35 // pred_check
        %p894 = pneg %p122
      $region38: #{audio_ntt2020_forward.6} parent=35 // pred_check_branch
        %896 = sbr.rel (%p894) target = $region40
      $region39: #{audio_ntt2020_forward.6} parent=35 // pred_region
        _
      $region40: #{audio_ntt2020_forward.6} parent=35 // pred_fallthru
        _
    $region36: #{audio_ntt2020_forward.6} parent=5 // pred_fallthru
      _
    %p897 = scmp.le.s32.totalorder 2, %s10
    // Predicated region
    $region41: #{audio_ntt2020_forward.6} parent=5 // pred_check
      %p898 = pneg %p897
    $region42: #{audio_ntt2020_forward.6} parent=5 // pred_check_branch
      %900 = sbr.rel (%p898) target = $region44
    $region43: #{audio_ntt2020_forward.6} parent=5 // pred_region
      %s901 = ssub.s32 %s10, 2
      // Predicated region
      $region45: #{audio_ntt2020_forward.6} parent=43 // pred_check
        %p902 = pneg %p128
      $region46: #{audio_ntt2020_forward.6} parent=43 // pred_check_branch
        %904 = sbr.rel (%p902) target = $region48
      $region47: #{audio_ntt2020_forward.6} parent=43 // pred_region
        %p905 = scmp.lt.s32.totalorder %s16, 1
        %s906 = scalar_select %p905, %s16, 1
        %s907 = smul.addr %s906, 2
        %s908 = smul.addr %s907, 4
        %s909 = scalar_lea.vmem %s4, %s908
      $region48: #{audio_ntt2020_forward.6} parent=43 // pred_fallthru
        _
    $region44: #{audio_ntt2020_forward.6} parent=5 // pred_fallthru
      _
  $region6: #{audio_ntt2020_forward.6} parent=0 // loop_footer
    %s14 = sadd.s32 1, %s10
  $region7: #{audio_ntt2020_forward.6} parent=0 // loop_footer_branch
    %9 = sbr.rel target = $region3
  $region8: #{audio_ntt2020_forward.6} parent=0 // loop_exit
    _

// kernel: audio_ntt2020_forward.5
$region0: #{audio_ntt2020_forward.5}
  #allocation0 [shape = 'u32[]', space=smem, size = 0x4, offset = 0x4, fixed_abs, tag = 'smem constant byte address 0x4 - core index']
  #allocation1 [shape = 'u32[144,128]{1,0:T(1,128)}', space=vmem, size = 0x12000, scoped, tag = 'internal scratch']
  #allocation2 [shape = 'f32[1,4,16,64]{3,2,1,0:T(8,128)}', space=vmem, size = 0x8000, scoped, tag = 'scratch operand']
  %s0 = inlined_call_operand.vmem [shape: f32[2,10,18,64], index: 0, kind: input, shape index: {}]
  %s1 = inlined_call_operand.vmem [shape: bf16[3,192,64], index: 1, kind: input, shape index: {}]
  %s2 = inlined_call_operand.vmem [shape: f32[1,64], index: 2, kind: input, shape index: {}]
  %s3 = inlined_call_operand.vmem [shape: f32[1,64], index: 3, kind: input, shape index: {}]
  %s4 = inlined_call_operand.vmem [shape: f32[2,6,10,64], index: 4, kind: output, shape index: {}]
  %s5 = sld [smem:[#allocation0]]
  $region49: #{audio_ntt2020_forward.5} parent=0
    _
  %s7 = ssub.s32 1, %s5
  %s8 = scalar_select 0, %s7, %s5
  loop: start=0, step=1, limit=4
  $region2: #{audio_ntt2020_forward.5} parent=0 // loop_pre_header
    _
  $region3: #{audio_ntt2020_forward.5} parent=0 // loop_header
    %s10 = sphi 0, %s14
    %p11 = scmp.ge.s32.totalorder %s10, 4
    %s20 = sphi 0, %s22
    %s23 = sphi 0, %s20
    %s24 = sphi 0, %s23
    %s40 = sphi 0, %s24
    %s44 = sphi 0, %s44
    %s46 = sphi 0, %s44
    %s47 = sphi 0, %s46
    %s61 = sphi 0, %s47
    %s65 = sphi 0, %s65
    %s67 = sphi 0, %s65
    %s68 = sphi 0, %s67
    %s82 = sphi 0, %s68
    %s86 = sphi 0, %s86
    %s88 = sphi 0, %s86
    %s89 = sphi 0, %s88
    %s103 = sphi 0, %s89
    %s109 = sphi 0, %s111
    %s112 = sphi 0, %s109
    %s113 = sphi 0, %s112
    %s129 = sphi 0, %s113
  $region4: #{audio_ntt2020_forward.5} parent=0 // loop_header_branch
    %13 = sbr.rel (%p11) target = $region8
  $region5: #{audio_ntt2020_forward.5} parent=0 // loop_body
    %s15 = ssub.s32 %s10, 1
    %s16 = ssub.s32 %s10, 2
    %s17 = sadd.s32 %s10, 1
    %s18 = ssub.s32 %s10, %s17
    %p19 = scmp.eq.s32.totalorder %s18, 0
    %s21 = sadd.s32 %s20, 1
    %s22 = scalar_select %p19, %s20, %s21
    %p25 = pneg %p19
    %p26 = scmp.eq.s32.totalorder %s10, 1
    %p27 = por %p25, %p26
    %p28 = scmp.ne.s32.totalorder %s20, %s23
    %p29 = scmp.eq.s32.totalorder %s10, 0
    %p30 = por %p28, %p29
    %p31 = scmp.ne.s32.totalorder %s20, %s23
    %p32 = scmp.eq.s32.totalorder %s15, 1
    %p33 = por %p31, %p32
    %p34 = scmp.ne.s32.totalorder %s23, %s24
    %p35 = scmp.eq.s32.totalorder %s15, 0
    %p36 = por %p34, %p35
    %p37 = scmp.ne.s32.totalorder %s23, %s24
    %p38 = scmp.eq.s32.totalorder %s16, 1
    %p39 = por %p37, %p38
    %p41 = scmp.ne.s32.totalorder %s24, %s40
    %p42 = scmp.eq.s32.totalorder %s16, 0
    %p43 = por %p41, %p42
    %s45 = sadd.s32 %s44, 1
    %p48 = scmp.eq.s32.totalorder %s10, 1
    %p49 = scmp.ne.s32.totalorder %s44, %s46
    %p50 = scmp.eq.s32.totalorder %s10, 0
    %p51 = por %p49, %p50
    %p52 = scmp.ne.s32.totalorder %s44, %s46
    %p53 = scmp.eq.s32.totalorder %s15, 1
    %p54 = por %p52, %p53
    %p55 = scmp.ne.s32.totalorder %s46, %s47
    %p56 = scmp.eq.s32.totalorder %s15, 0
    %p57 = por %p55, %p56
    %p58 = scmp.ne.s32.totalorder %s46, %s47
    %p59 = scmp.eq.s32.totalorder %s16, 1
    %p60 = por %p58, %p59
    %p62 = scmp.ne.s32.totalorder %s47, %s61
    %p63 = scmp.eq.s32.totalorder %s16, 0
    %p64 = por %p62, %p63
    %s66 = sadd.s32 %s65, 1
    %p69 = scmp.eq.s32.totalorder %s10, 1
    %p70 = scmp.ne.s32.totalorder %s65, %s67
    %p71 = scmp.eq.s32.totalorder %s10, 0
    %p72 = por %p70, %p71
    %p73 = scmp.ne.s32.totalorder %s65, %s67
    %p74 = scmp.eq.s32.totalorder %s15, 1
    %p75 = por %p73, %p74
    %p76 = scmp.ne.s32.totalorder %s67, %s68
    %p77 = scmp.eq.s32.totalorder %s15, 0
    %p78 = por %p76, %p77
    %p79 = scmp.ne.s32.totalorder %s67, %s68
    %p80 = scmp.eq.s32.totalorder %s16, 1
    %p81 = por %p79, %p80
    %p83 = scmp.ne.s32.totalorder %s68, %s82
    %p84 = scmp.eq.s32.totalorder %s16, 0
    %p85 = por %p83, %p84
    %s87 = sadd.s32 %s86, 1
    %p90 = scmp.eq.s32.totalorder %s10, 1
    %p91 = scmp.ne.s32.totalorder %s86, %s88
    %p92 = scmp.eq.s32.totalorder %s10, 0
    %p93 = por %p91, %p92
    %p94 = scmp.ne.s32.totalorder %s86, %s88
    %p95 = scmp.eq.s32.totalorder %s15, 1
    %p96 = por %p94, %p95
    %p97 = scmp.ne.s32.totalorder %s88, %s89
    %p98 = scmp.eq.s32.totalorder %s15, 0
    %p99 = por %p97, %p98
    %p100 = scmp.ne.s32.totalorder %s88, %s89
    %p101 = scmp.eq.s32.totalorder %s16, 1
    %p102 = por %p100, %p101
    %p104 = scmp.ne.s32.totalorder %s89, %s103
    %p105 = scmp.eq.s32.totalorder %s16, 0
    %p106 = por %p104, %p105
    %s107 = ssub.s32 %s10, %s17
    %p108 = scmp.eq.s32.totalorder %s107, 0
    %s110 = sadd.s32 %s109, 1
    %s111 = scalar_select %p108, %s109, %s110
    %p114 = pneg %p108
    %p115 = scmp.eq.s32.totalorder %s10, 1
    %p116 = por %p114, %p115
    %p117 = scmp.ne.s32.totalorder %s109, %s112
    %p118 = scmp.eq.s32.totalorder %s10, 0
    %p119 = por %p117, %p118
    %p120 = scmp.ne.s32.totalorder %s109, %s112
    %p121 = scmp.eq.s32.totalorder %s15, 1
    %p122 = por %p120, %p121
    %p123 = scmp.ne.s32.totalorder %s112, %s113
    %p124 = scmp.eq.s32.totalorder %s15, 0
    %p125 = por %p123, %p124
    %p126 = scmp.ne.s32.totalorder %s112, %s113
    %p127 = scmp.eq.s32.totalorder %s16, 1
    %p128 = por %p126, %p127
    %p130 = scmp.ne.s32.totalorder %s113, %s129
    %p131 = scmp.eq.s32.totalorder %s16, 0
    %p132 = por %p130, %p131
    %p133 = scmp.le.s32.totalorder 1, %s10
    %p134 = scmp.lt.s32.totalorder %s10, 3
    %p135 = pnand %p133, %p134
    %p136 = pneg %p135
    // Predicated region
    $region9: #{audio_ntt2020_forward.5} parent=5 // pred_check
      _
    $region10: #{audio_ntt2020_forward.5} parent=5 // pred_check_branch
      %138 = sbr.rel (%p135) target = $region12
    $region11: #{audio_ntt2020_forward.5} parent=5 // pred_region
      %s139 = ssub.s32 %s10, 1
      // Predicated region
      $region13: #{audio_ntt2020_forward.5} parent=11 // pred_check
        %p140 = pneg %p57
      $region14: #{audio_ntt2020_forward.5} parent=11 // pred_check_branch
        %142 = sbr.rel (%p140) target = $region16
      $region15: #{audio_ntt2020_forward.5} parent=11 // pred_region
        _
      $region16: #{audio_ntt2020_forward.5} parent=11 // pred_fallthru
        _
      // Predicated region
      $region17: #{audio_ntt2020_forward.5} parent=11 // pred_check
        %p143 = pneg %p78
      $region18: #{audio_ntt2020_forward.5} parent=11 // pred_check_branch
        %145 = sbr.rel (%p143) target = $region20
      $region19: #{audio_ntt2020_forward.5} parent=11 // pred_region
        _
      $region20: #{audio_ntt2020_forward.5} parent=11 // pred_fallthru
        _
      // Predicated region
      $region21: #{audio_ntt2020_forward.5} parent=11 // pred_check
        %p146 = pneg %p99
      $region22: #{audio_ntt2020_forward.5} parent=11 // pred_check_branch
        %148 = sbr.rel (%p146) target = $region24
      $region23: #{audio_ntt2020_forward.5} parent=11 // pred_region
        _
      $region24: #{audio_ntt2020_forward.5} parent=11 // pred_fallthru
        _
    $region12: #{audio_ntt2020_forward.5} parent=5 // pred_fallthru
      _
    %p149 = scmp.lt.s32.totalorder %s10, 2
    // Predicated region
    $region25: #{audio_ntt2020_forward.5} parent=5 // pred_check
      %p150 = pneg %p149
    $region26: #{audio_ntt2020_forward.5} parent=5 // pred_check_branch
      %152 = sbr.rel (%p150) target = $region28
    $region27: #{audio_ntt2020_forward.5} parent=5 // pred_region
      // Predicated region
      $region29: #{audio_ntt2020_forward.5} parent=27 // pred_check
        %p153 = pneg %p30
      $region30: #{audio_ntt2020_forward.5} parent=27 // pred_check_branch
        %155 = sbr.rel (%p153) target = $region32
      $region31: #{audio_ntt2020_forward.5} parent=27 // pred_region
        %p156 = scmp.lt.s32.totalorder %s10, 1
        %s157 = scalar_select %p156, %s10, 1
        %s158 = smul.addr %s157, 30
        %s159 = smul.addr %s158, 8
        %s160 = scalar_lea.vmem %s0, %s159
      $region32: #{audio_ntt2020_forward.5} parent=27 // pred_fallthru
        _
    $region28: #{audio_ntt2020_forward.5} parent=5 // pred_fallthru
      _
    %p161 = scmp.le.s32.totalorder 1, %s10
    %p162 = scmp.lt.s32.totalorder %s10, 3
    %p163 = pnand %p161, %p162
    %p164 = pneg %p163
    // Predicated region
    $region33: #{audio_ntt2020_forward.5} parent=5 // pred_check
      _
    $region34: #{audio_ntt2020_forward.5} parent=5 // pred_check_branch
      %166 = sbr.rel (%p163) target = $region36
    $region35: #{audio_ntt2020_forward.5} parent=5 // pred_region
      %s167 = ssub.s32 %s10, 1
      %p168 = scmp.lt.s32.totalorder %s15, 1
      %s169 = scalar_select %p168, %s15, 1
      %s170 = smul.addr %s169, 30
      %s171 = smul.addr %s170, 8
      %s172 = scalar_lea.vmem %s0, %s171
      %p173 = pneg %p36
      %p174 = pneg %p33
      %p175 = pneg %p57
      %p176 = pneg %p54
      %p177 = pneg %p78
      %p178 = pneg %p75
      %p179 = pneg %p99
      %p180 = pneg %p96
      %p181 = pneg %p125
      %p182 = pneg %p122
      %p183 = scmp.lt.s32.totalorder %s15, 1
      %s184 = scalar_select %p183, %s15, 1
      %s185 = smul.addr %s184, 12
      %s186 = smul.addr %s185, 8
      %s187 = scalar_lea.vmem %s4, %s186
      %p188 = scmp.lt.s32.totalorder %s15, 1
      %s189 = scalar_select %p188, %s15, 1
      %s190 = smul.addr %s189, 30
      %s191 = smul.addr %s190, 8
      %s192 = scalar_lea.vmem %s0, %s191
      %p193 = scmp.lt.s32.totalorder %s15, 1
      %s194 = scalar_select %p193, %s15, 1
      %s195 = smul.addr %s194, 12
      %s196 = smul.addr %s195, 8
      %s197 = scalar_lea.vmem %s4, %s196
      %v199 = vld [vmem:[%s192] sm:$0xff]
      %v200 = vld [vmem:[%s192 + $0x8] sm:$0xff]
      %v201 = vld [vmem:[%s192 + $0x18] sm:$0xff]
      %v202 = vld [vmem:[%s192 + $0x20] sm:$0xff]
      %v203 = vld [vmem:[%s192 + $0x30] sm:$0xff]
      %v204 = vld [vmem:[%s192 + $0x38] sm:$0xff]
      %v205 = vld [vmem:[%s192 + $0x48] sm:$0xff]
      %v206 = vld [vmem:[%s192 + $0x50] sm:$0xff]
      %v207 = vld [vmem:[%s192 + $0x60] sm:$0xff]
      %v208 = vld [vmem:[%s192 + $0x68] sm:$0xff]
      %v209 = vld [vmem:[%s192 + $0x78] sm:$0xff]
      %v210 = vld [vmem:[%s192 + $0x80] sm:$0xff]
      %v211 = vld [vmem:[%s192 + $0x90] sm:$0xff]
      %v212 = vld [vmem:[%s192 + $0x98] sm:$0xff]
      %v213 = vld [vmem:[%s192 + $0xa8] sm:$0xff]
      %v214 = vld [vmem:[%s192 + $0xb0] sm:$0xff]
      %v215 = vld [vmem:[%s192 + $0x1] sm:$0xff]
      %v216 = vld [vmem:[%s192 + $0x9] sm:$0xff]
      %v217 = vld [vmem:[%s192 + $0x19] sm:$0xff]
      %v218 = vld [vmem:[%s192 + $0x21] sm:$0xff]
      %v219 = vld [vmem:[%s192 + $0x31] sm:$0xff]
      %v220 = vld [vmem:[%s192 + $0x39] sm:$0xff]
      %v221 = vld [vmem:[%s192 + $0x49] sm:$0xff]
      %v222 = vld [vmem:[%s192 + $0x51] sm:$0xff]
      %v223 = vld [vmem:[%s192 + $0x61] sm:$0xff]
      %v224 = vld [vmem:[%s192 + $0x69] sm:$0xff]
      %v225 = vld [vmem:[%s192 + $0x79] sm:$0xff]
      %v226 = vld [vmem:[%s192 + $0x81] sm:$0xff]
      %v227 = vld [vmem:[%s192 + $0x91] sm:$0xff]
      %v228 = vld [vmem:[%s192 + $0x99] sm:$0xff]
      %v229 = vld [vmem:[%s192 + $0xa9] sm:$0xff]
      %v230 = vld [vmem:[%s192 + $0xb1] sm:$0xff]
      %v231 = vld [vmem:[%s192 + $0x2] sm:$0xff]
      %v232 = vld [vmem:[%s192 + $0xa] sm:$0xff]
      %v233 = vld [vmem:[%s192 + $0x1a] sm:$0xff]
      %v234 = vld [vmem:[%s192 + $0x22] sm:$0xff]
      %v235 = vld [vmem:[%s192 + $0x32] sm:$0xff]
      %v236 = vld [vmem:[%s192 + $0x3a] sm:$0xff]
      %v237 = vld [vmem:[%s192 + $0x4a] sm:$0xff]
      %v238 = vld [vmem:[%s192 + $0x52] sm:$0xff]
      %v239 = vld [vmem:[%s192 + $0x62] sm:$0xff]
      %v240 = vld [vmem:[%s192 + $0x6a] sm:$0xff]
      %v241 = vld [vmem:[%s192 + $0x7a] sm:$0xff]
      %v242 = vld [vmem:[%s192 + $0x82] sm:$0xff]
      %v243 = vld [vmem:[%s192 + $0x92] sm:$0xff]
      %v244 = vld [vmem:[%s192 + $0x9a] sm:$0xff]
      %v245 = vld [vmem:[%s192 + $0xaa] sm:$0xff]
      %v246 = vld [vmem:[%s192 + $0xb2] sm:$0xff]
      %263 = vrot.lane.b32.xlu0 %v215, 64
      %v264 = vpop.permute.xlu0 %263
      %265 = vrot.lane.b32.xlu0 %v216, 64
      %v266 = vpop.permute.xlu0 %265
      %267 = vrot.lane.b32.xlu0 %v217, 64
      %v268 = vpop.permute.xlu0 %267
      %269 = vrot.lane.b32.xlu0 %v218, 64
      %v270 = vpop.permute.xlu0 %269
      %271 = vrot.lane.b32.xlu0 %v219, 64
      %v272 = vpop.permute.xlu0 %271
      %273 = vrot.lane.b32.xlu0 %v220, 64
      %v274 = vpop.permute.xlu0 %273
      %275 = vrot.lane.b32.xlu0 %v221, 64
      %v276 = vpop.permute.xlu0 %275
      %277 = vrot.lane.b32.xlu0 %v222, 64
      %v278 = vpop.permute.xlu0 %277
      %279 = vrot.lane.b32.xlu0 %v223, 64
      %v280 = vpop.permute.xlu0 %279
      %281 = vrot.lane.b32.xlu0 %v224, 64
      %v282 = vpop.permute.xlu0 %281
      %283 = vrot.lane.b32.xlu0 %v225, 64
      %v284 = vpop.permute.xlu0 %283
      %285 = vrot.lane.b32.xlu0 %v226, 64
      %v286 = vpop.permute.xlu0 %285
      %287 = vrot.lane.b32.xlu0 %v227, 64
      %v288 = vpop.permute.xlu0 %287
      %289 = vrot.lane.b32.xlu0 %v228, 64
      %v290 = vpop.permute.xlu0 %289
      %291 = vrot.lane.b32.xlu0 %v229, 64
      %v292 = vpop.permute.xlu0 %291
      %293 = vrot.lane.b32.xlu0 %v230, 64
      %v294 = vpop.permute.xlu0 %293
      %vm311 = vcmask 523264
      %v312 = vsel %vm311, %v199, %v264
      %v313 = vsel %vm311, %v200, %v266
      %v314 = vsel %vm311, %v201, %v268
      %v315 = vsel %vm311, %v202, %v270
      %v316 = vsel %vm311, %v203, %v272
      %v317 = vsel %vm311, %v204, %v274
      %v318 = vsel %vm311, %v205, %v276
      %v319 = vsel %vm311, %v206, %v278
      %v320 = vsel %vm311, %v207, %v280
      %v321 = vsel %vm311, %v208, %v282
      %v322 = vsel %vm311, %v209, %v284
      %v323 = vsel %vm311, %v210, %v286
      %v324 = vsel %vm311, %v211, %v288
      %v325 = vsel %vm311, %v212, %v290
      %v326 = vsel %vm311, %v213, %v292
      %v327 = vsel %vm311, %v214, %v294
      %v328 = vpack.c.bf16 %v313, %v312
      %v329 = vpack.c.bf16 %v232, %v231
      %v330 = vpack.c.bf16 %v315, %v314
      %v331 = vpack.c.bf16 %v234, %v233
      %v332 = vpack.c.bf16 %v317, %v316
      %v333 = vpack.c.bf16 %v236, %v235
      %v334 = vpack.c.bf16 %v319, %v318
      %v335 = vpack.c.bf16 %v238, %v237
      %v336 = vpack.c.bf16 %v321, %v320
      %v337 = vpack.c.bf16 %v240, %v239
      %v338 = vpack.c.bf16 %v323, %v322
      %v339 = vpack.c.bf16 %v242, %v241
      %v340 = vpack.c.bf16 %v325, %v324
      %v341 = vpack.c.bf16 %v244, %v243
      %v342 = vpack.c.bf16 %v327, %v326
      %v343 = vpack.c.bf16 %v246, %v245
      %v344 = vld [vmem:[%s1] sm:$0xf]
      %v345 = vld [vmem:[%s1 + $0x4] sm:$0xf]
      %v346 = vld [vmem:[%s1 + $0x8] sm:$0xf]
      %v347 = vld [vmem:[%s1 + $0xc] sm:$0xf]
      %v348 = vld [vmem:[%s1 + $0x10] sm:$0xf]
      %v349 = vld [vmem:[%s1 + $0x14] sm:$0xf]
      %v350 = vld [vmem:[%s1 + $0x18] sm:$0xf]
      %v351 = vld [vmem:[%s1 + $0x1c] sm:$0xf]
      %v352 = vld [vmem:[%s1 + $0x20] sm:$0xf]
      %v353 = vld [vmem:[%s1 + $0x24] sm:$0xf]
      %v354 = vld [vmem:[%s1 + $0x28] sm:$0xf]
      %v355 = vld [vmem:[%s1 + $0x2c] sm:$0xf]
      %v356 = vld [vmem:[%s1 + $0x30] sm:$0xf]
      %v357 = vld [vmem:[%s1 + $0x34] sm:$0xf]
      %v358 = vld [vmem:[%s1 + $0x38] sm:$0xf]
      %v359 = vld [vmem:[%s1 + $0x3c] sm:$0xf]
      %v360 = vld [vmem:[%s1 + $0x40] sm:$0xf]
      %v361 = vld [vmem:[%s1 + $0x44] sm:$0xf]
      %v362 = vld [vmem:[%s1 + $0x48] sm:$0xf]
      %v363 = vld [vmem:[%s1 + $0x4c] sm:$0xf]
      %v364 = vld [vmem:[%s1 + $0x50] sm:$0xf]
      %v365 = vld [vmem:[%s1 + $0x54] sm:$0xf]
      %v366 = vld [vmem:[%s1 + $0x58] sm:$0xf]
      %v367 = vld [vmem:[%s1 + $0x5c] sm:$0xf]
      %s368 = scalar_lea.vmem %s192, 24
      %v369 = vld [vmem:[%s368] sm:$0xff]
      %v370 = vld [vmem:[%s368 + $0x8] sm:$0xff]
      %v371 = vld [vmem:[%s368 + $0x18] sm:$0xff]
      %v372 = vld [vmem:[%s368 + $0x20] sm:$0xff]
      %v373 = vld [vmem:[%s368 + $0x30] sm:$0xff]
      %v374 = vld [vmem:[%s368 + $0x38] sm:$0xff]
      %v375 = vld [vmem:[%s368 + $0x48] sm:$0xff]
      %v376 = vld [vmem:[%s368 + $0x50] sm:$0xff]
      %v377 = vld [vmem:[%s368 + $0x60] sm:$0xff]
      %v378 = vld [vmem:[%s368 + $0x68] sm:$0xff]
      %v379 = vld [vmem:[%s368 + $0x78] sm:$0xff]
      %v380 = vld [vmem:[%s368 + $0x80] sm:$0xff]
      %v381 = vld [vmem:[%s368 + $0x90] sm:$0xff]
      %v382 = vld [vmem:[%s368 + $0x98] sm:$0xff]
      %v383 = vld [vmem:[%s368 + $0xa8] sm:$0xff]
      %v384 = vld [vmem:[%s368 + $0xb0] sm:$0xff]
      %v385 = vld [vmem:[%s368 + $0x1] sm:$0xff]
      %v386 = vld [vmem:[%s368 + $0x9] sm:$0xff]
      %v387 = vld [vmem:[%s368 + $0x19] sm:$0xff]
      %v388 = vld [vmem:[%s368 + $0x21] sm:$0xff]
      %v389 = vld [vmem:[%s368 + $0x31] sm:$0xff]
      %v390 = vld [vmem:[%s368 + $0x39] sm:$0xff]
      %v391 = vld [vmem:[%s368 + $0x49] sm:$0xff]
      %v392 = vld [vmem:[%s368 + $0x51] sm:$0xff]
      %v393 = vld [vmem:[%s368 + $0x61] sm:$0xff]
      %v394 = vld [vmem:[%s368 + $0x69] sm:$0xff]
      %v395 = vld [vmem:[%s368 + $0x79] sm:$0xff]
      %v396 = vld [vmem:[%s368 + $0x81] sm:$0xff]
      %v397 = vld [vmem:[%s368 + $0x91] sm:$0xff]
      %v398 = vld [vmem:[%s368 + $0x99] sm:$0xff]
      %v399 = vld [vmem:[%s368 + $0xa9] sm:$0xff]
      %v400 = vld [vmem:[%s368 + $0xb1] sm:$0xff]
      %v401 = vld [vmem:[%s368 + $0x2] sm:$0xff]
      %v402 = vld [vmem:[%s368 + $0xa] sm:$0xff]
      %v403 = vld [vmem:[%s368 + $0x1a] sm:$0xff]
      %v404 = vld [vmem:[%s368 + $0x22] sm:$0xff]
      %v405 = vld [vmem:[%s368 + $0x32] sm:$0xff]
      %v406 = vld [vmem:[%s368 + $0x3a] sm:$0xff]
      %v407 = vld [vmem:[%s368 + $0x4a] sm:$0xff]
      %v408 = vld [vmem:[%s368 + $0x52] sm:$0xff]
      %v409 = vld [vmem:[%s368 + $0x62] sm:$0xff]
      %v410 = vld [vmem:[%s368 + $0x6a] sm:$0xff]
      %v411 = vld [vmem:[%s368 + $0x7a] sm:$0xff]
      %v412 = vld [vmem:[%s368 + $0x82] sm:$0xff]
      %v413 = vld [vmem:[%s368 + $0x92] sm:$0xff]
      %v414 = vld [vmem:[%s368 + $0x9a] sm:$0xff]
      %v415 = vld [vmem:[%s368 + $0xaa] sm:$0xff]
      %v416 = vld [vmem:[%s368 + $0xb2] sm:$0xff]
      %433 = vrot.lane.b32.xlu0 %v385, 64
      %v434 = vpop.permute.xlu0 %433
      %435 = vrot.lane.b32.xlu0 %v386, 64
      %v436 = vpop.permute.xlu0 %435
      %437 = vrot.lane.b32.xlu0 %v387, 64
      %v438 = vpop.permute.xlu0 %437
      %439 = vrot.lane.b32.xlu0 %v388, 64
      %v440 = vpop.permute.xlu0 %439
      %441 = vrot.lane.b32.xlu0 %v389, 64
      %v442 = vpop.permute.xlu0 %441
      %443 = vrot.lane.b32.xlu0 %v390, 64
      %v444 = vpop.permute.xlu0 %443
      %445 = vrot.lane.b32.xlu0 %v391, 64
      %v446 = vpop.permute.xlu0 %445
      %447 = vrot.lane.b32.xlu0 %v392, 64
      %v448 = vpop.permute.xlu0 %447
      %449 = vrot.lane.b32.xlu0 %v393, 64
      %v450 = vpop.permute.xlu0 %449
      %451 = vrot.lane.b32.xlu0 %v394, 64
      %v452 = vpop.permute.xlu0 %451
      %453 = vrot.lane.b32.xlu0 %v395, 64
      %v454 = vpop.permute.xlu0 %453
      %455 = vrot.lane.b32.xlu0 %v396, 64
      %v456 = vpop.permute.xlu0 %455
      %457 = vrot.lane.b32.xlu0 %v397, 64
      %v458 = vpop.permute.xlu0 %457
      %459 = vrot.lane.b32.xlu0 %v398, 64
      %v460 = vpop.permute.xlu0 %459
      %461 = vrot.lane.b32.xlu0 %v399, 64
      %v462 = vpop.permute.xlu0 %461
      %463 = vrot.lane.b32.xlu0 %v400, 64
      %v464 = vpop.permute.xlu0 %463
      %v481 = vsel %vm311, %v369, %v434
      %v482 = vsel %vm311, %v370, %v436
      %v483 = vsel %vm311, %v371, %v438
      %v484 = vsel %vm311, %v372, %v440
      %v485 = vsel %vm311, %v373, %v442
      %v486 = vsel %vm311, %v374, %v444
      %v487 = vsel %vm311, %v375, %v446
      %v488 = vsel %vm311, %v376, %v448
      %v489 = vsel %vm311, %v377, %v450
      %v490 = vsel %vm311, %v378, %v452
      %v491 = vsel %vm311, %v379, %v454
      %v492 = vsel %vm311, %v380, %v456
      %v493 = vsel %vm311, %v381, %v458
      %v494 = vsel %vm311, %v382, %v460
      %v495 = vsel %vm311, %v383, %v462
      %v496 = vsel %vm311, %v384, %v464
      %v497 = vpack.c.bf16 %v482, %v481
      %v498 = vpack.c.bf16 %v402, %v401
      %v499 = vpack.c.bf16 %v484, %v483
      %v500 = vpack.c.bf16 %v404, %v403
      %v501 = vpack.c.bf16 %v486, %v485
      %v502 = vpack.c.bf16 %v406, %v405
      %v503 = vpack.c.bf16 %v488, %v487
      %v504 = vpack.c.bf16 %v408, %v407
      %v505 = vpack.c.bf16 %v490, %v489
      %v506 = vpack.c.bf16 %v410, %v409
      %v507 = vpack.c.bf16 %v492, %v491
      %v508 = vpack.c.bf16 %v412, %v411
      %v509 = vpack.c.bf16 %v494, %v493
      %v510 = vpack.c.bf16 %v414, %v413
      %v511 = vpack.c.bf16 %v496, %v495
      %v512 = vpack.c.bf16 %v416, %v415
      %s513 = scalar_lea.vmem %s1, 96
      %v514 = vld [vmem:[%s513] sm:$0xf]
      %v515 = vld [vmem:[%s513 + $0x4] sm:$0xf]
      %v516 = vld [vmem:[%s513 + $0x8] sm:$0xf]
      %v517 = vld [vmem:[%s513 + $0xc] sm:$0xf]
      %v518 = vld [vmem:[%s513 + $0x10] sm:$0xf]
      %v519 = vld [vmem:[%s513 + $0x14] sm:$0xf]
      %v520 = vld [vmem:[%s513 + $0x18] sm:$0xf]
      %v521 = vld [vmem:[%s513 + $0x1c] sm:$0xf]
      %v522 = vld [vmem:[%s513 + $0x20] sm:$0xf]
      %v523 = vld [vmem:[%s513 + $0x24] sm:$0xf]
      %v524 = vld [vmem:[%s513 + $0x28] sm:$0xf]
      %v525 = vld [vmem:[%s513 + $0x2c] sm:$0xf]
      %v526 = vld [vmem:[%s513 + $0x30] sm:$0xf]
      %v527 = vld [vmem:[%s513 + $0x34] sm:$0xf]
      %v528 = vld [vmem:[%s513 + $0x38] sm:$0xf]
      %v529 = vld [vmem:[%s513 + $0x3c] sm:$0xf]
      %v530 = vld [vmem:[%s513 + $0x40] sm:$0xf]
      %v531 = vld [vmem:[%s513 + $0x44] sm:$0xf]
      %v532 = vld [vmem:[%s513 + $0x48] sm:$0xf]
      %v533 = vld [vmem:[%s513 + $0x4c] sm:$0xf]
      %v534 = vld [vmem:[%s513 + $0x50] sm:$0xf]
      %v535 = vld [vmem:[%s513 + $0x54] sm:$0xf]
      %v536 = vld [vmem:[%s513 + $0x58] sm:$0xf]
      %v537 = vld [vmem:[%s513 + $0x5c] sm:$0xf]
      %v562 = vunpack.c.l.b16 %v514
      %v563 = vunpack.c.l.b16 %v515
      %v564 = vunpack.c.l.b16 %v516
      %v565 = vunpack.c.l.b16 %v517
      %v566 = vunpack.c.l.b16 %v518
      %v567 = vunpack.c.l.b16 %v519
      %v568 = vunpack.c.l.b16 %v520
      %v569 = vunpack.c.l.b16 %v521
      %v570 = vunpack.c.l.b16 %v522
      %v571 = vunpack.c.l.b16 %v523
      %v572 = vunpack.c.l.b16 %v524
      %v573 = vunpack.c.l.b16 %v525
      %v574 = vunpack.c.l.b16 %v526
      %v575 = vunpack.c.l.b16 %v527
      %v576 = vunpack.c.l.b16 %v528
      %v577 = vunpack.c.l.b16 %v529
      %v578 = vunpack.c.l.b16 %v530
      %v579 = vunpack.c.l.b16 %v531
      %v580 = vunpack.c.l.b16 %v532
      %v581 = vunpack.c.l.b16 %v533
      %v582 = vunpack.c.l.b16 %v534
      %v583 = vunpack.c.l.b16 %v535
      %v584 = vunpack.c.l.b16 %v536
      %v585 = vunpack.c.l.b16 %v537
      %v586 = vpack.c.b16 %v563, %v562
      %v587 = vpack.c.b16 %v565, %v564
      %v588 = vpack.c.b16 %v567, %v566
      %v589 = vpack.c.b16 %v569, %v568
      %v590 = vpack.c.b16 %v571, %v570
      %v591 = vpack.c.b16 %v573, %v572
      %v592 = vpack.c.b16 %v575, %v574
      %v593 = vpack.c.b16 %v577, %v576
      %v594 = vpack.c.b16 %v579, %v578
      %v595 = vpack.c.b16 %v581, %v580
      %v596 = vpack.c.b16 %v583, %v582
      %v597 = vpack.c.b16 %v585, %v584
      %v611 = vsel %vm311, %v498, 0
      %v614 = vsel %vm311, %v500, 0
      %v617 = vsel %vm311, %v502, 0
      %v620 = vsel %vm311, %v504, 0
      %v623 = vsel %vm311, %v506, 0
      %v626 = vsel %vm311, %v508, 0
      %v629 = vsel %vm311, %v510, 0
      %v632 = vsel %vm311, %v512, 0
      %634 = vmatprep.subr.bf16.mxu0 0
      %635 = vmatpush1.bf16.msra.mxu0 %v593
      %636 = vmatprep.subr.bf16.mxu0 0
      %637 = vmatpush1.bf16.msra.mxu0 %v592
      %638 = vmatprep.subr.bf16.mxu0 0
      %639 = vmatpush1.bf16.msra.mxu0 %v591
      %640 = vmatprep.subr.bf16.mxu0 0
      %641 = vmatpush1.bf16.msra.mxu0 %v590
      %642 = vmatprep.subr.bf16.mxu0 0
      %643 = vmatpush1.bf16.msra.mxu0 %v589
      %644 = vmatprep.subr.bf16.mxu0 0
      %645 = vmatpush1.bf16.msra.mxu0 %v588
      %646 = vmatprep.subr.bf16.mxu0 0
      %647 = vmatpush1.bf16.msra.mxu0 %v587
      %648 = vmatprep.subr.bf16.mxu0 0
      %649 = vmatpush1.bf16.msra.mxu0 %v586
      %650 = vmatprep.subr.bf16.mxu0 0
      %651 = vmatpush2.bf16.msra.mxu0 0
      %652 = vmatprep.subr.bf16.mxu0 0
      %653 = vmatpush2.bf16.msra.mxu0 0
      %654 = vmatprep.subr.bf16.mxu0 0
      %655 = vmatpush2.bf16.msra.mxu0 0
      %656 = vmatprep.subr.bf16.mxu0 0
      %657 = vmatpush2.bf16.msra.mxu0 0
      %658 = vmatprep.subr.bf16.mxu0 0
      %659 = vmatpush2.bf16.msra.mxu0 %v597
      %660 = vmatprep.subr.bf16.mxu0 0
      %661 = vmatpush2.bf16.msra.mxu0 %v596
      %662 = vmatprep.subr.bf16.mxu0 0
      %663 = vmatpush2.bf16.msra.mxu0 %v595
      %664 = vmatprep.subr.bf16.mxu0 0
      %665 = vmatpush2.bf16.msra.mxu0 %v594
      %666 = vmatprep.mubr.bf16.mxu0 %v611
      %667 = vmatmul.mubr.bf16.gmra.mxu0 %v497
      %v668 = vpop.f32.mrf.mxu0
      %v669 = vadd.f32 0.0, %v668
      %v670 = vpop.f32.mrf.mxu0
      %v671 = vpop.f32.mrf.mxu0
      %v672 = vadd.f32 0.0, %v671
      %v673 = vpop.f32.mrf.mxu0
      %674 = vmatprep.mubr.bf16.mxu0 %v614
      %675 = vmatmul.mubr.bf16.gmra.mxu0 %v499
      %v676 = vpop.f32.mrf.mxu0
      %v677 = vadd.f32 0.0, %v676
      %v678 = vpop.f32.mrf.mxu0
      %v679 = vpop.f32.mrf.mxu0
      %v680 = vadd.f32 0.0, %v679
      %v681 = vpop.f32.mrf.mxu0
      %682 = vmatprep.mubr.bf16.mxu0 %v617
      %683 = vmatmul.mubr.bf16.gmra.mxu0 %v501
      %v684 = vpop.f32.mrf.mxu0
      %v685 = vadd.f32 0.0, %v684
      %v686 = vpop.f32.mrf.mxu0
      %v687 = vpop.f32.mrf.mxu0
      %v688 = vadd.f32 0.0, %v687
      %v689 = vpop.f32.mrf.mxu0
      %690 = vmatprep.mubr.bf16.mxu0 %v620
      %691 = vmatmul.mubr.bf16.gmra.mxu0 %v503
      %v692 = vpop.f32.mrf.mxu0
      %v693 = vadd.f32 0.0, %v692
      %v694 = vpop.f32.mrf.mxu0
      %v695 = vpop.f32.mrf.mxu0
      %v696 = vadd.f32 0.0, %v695
      %v697 = vpop.f32.mrf.mxu0
      %698 = vmatprep.mubr.bf16.mxu0 %v623
      %699 = vmatmul.mubr.bf16.gmra.mxu0 %v505
      %v700 = vpop.f32.mrf.mxu0
      %v701 = vadd.f32 0.0, %v700
      %v702 = vpop.f32.mrf.mxu0
      %v703 = vpop.f32.mrf.mxu0
      %v704 = vadd.f32 0.0, %v703
      %v705 = vpop.f32.mrf.mxu0
      %706 = vmatprep.mubr.bf16.mxu0 %v626
      %707 = vmatmul.mubr.bf16.gmra.mxu0 %v507
      %v708 = vpop.f32.mrf.mxu0
      %v709 = vadd.f32 0.0, %v708
      %v710 = vpop.f32.mrf.mxu0
      %v711 = vpop.f32.mrf.mxu0
      %v712 = vadd.f32 0.0, %v711
      %v713 = vpop.f32.mrf.mxu0
      %714 = vmatprep.mubr.bf16.mxu0 %v629
      %715 = vmatmul.mubr.bf16.gmra.mxu0 %v509
      %v716 = vpop.f32.mrf.mxu0
      %v717 = vadd.f32 0.0, %v716
      %v718 = vpop.f32.mrf.mxu0
      %v719 = vpop.f32.mrf.mxu0
      %v720 = vadd.f32 0.0, %v719
      %v721 = vpop.f32.mrf.mxu0
      %722 = vmatprep.mubr.bf16.mxu0 %v632
      %723 = vmatmul.mubr.bf16.gmra.mxu0 %v511
      %v724 = vpop.f32.mrf.mxu0
      %v725 = vadd.f32 0.0, %v724
      %v726 = vpop.f32.mrf.mxu0
      %v727 = vpop.f32.mrf.mxu0
      %v728 = vadd.f32 0.0, %v727
      %v729 = vpop.f32.mrf.mxu0
      %730 = vdwg.mxu0
      %v755 = vunpack.c.l.b16 %v344
      %v756 = vunpack.c.l.b16 %v345
      %v757 = vunpack.c.l.b16 %v346
      %v758 = vunpack.c.l.b16 %v347
      %v759 = vunpack.c.l.b16 %v348
      %v760 = vunpack.c.l.b16 %v349
      %v761 = vunpack.c.l.b16 %v350
      %v762 = vunpack.c.l.b16 %v351
      %v763 = vunpack.c.l.b16 %v352
      %v764 = vunpack.c.l.b16 %v353
      %v765 = vunpack.c.l.b16 %v354
      %v766 = vunpack.c.l.b16 %v355
      %v767 = vunpack.c.l.b16 %v356
      %v768 = vunpack.c.l.b16 %v357
      %v769 = vunpack.c.l.b16 %v358
      %v770 = vunpack.c.l.b16 %v359
      %v771 = vunpack.c.l.b16 %v360
      %v772 = vunpack.c.l.b16 %v361
      %v773 = vunpack.c.l.b16 %v362
      %v774 = vunpack.c.l.b16 %v363
      %v775 = vunpack.c.l.b16 %v364
      %v776 = vunpack.c.l.b16 %v365
      %v777 = vunpack.c.l.b16 %v366
      %v778 = vunpack.c.l.b16 %v367
      %v779 = vpack.c.b16 %v756, %v755
      %v780 = vpack.c.b16 %v758, %v757
      %v781 = vpack.c.b16 %v760, %v759
      %v782 = vpack.c.b16 %v762, %v761
      %v783 = vpack.c.b16 %v764, %v763
      %v784 = vpack.c.b16 %v766, %v765
      %v785 = vpack.c.b16 %v768, %v767
      %v786 = vpack.c.b16 %v770, %v769
      %v787 = vpack.c.b16 %v772, %v771
      %v788 = vpack.c.b16 %v774, %v773
      %v789 = vpack.c.b16 %v776, %v775
      %v790 = vpack.c.b16 %v778, %v777
      %v804 = vsel %vm311, %v329, 0
      %v807 = vsel %vm311, %v331, 0
      %v810 = vsel %vm311, %v333, 0
      %v813 = vsel %vm311, %v335, 0
      %v816 = vsel %vm311, %v337, 0
      %v819 = vsel %vm311, %v339, 0
      %v822 = vsel %vm311, %v341, 0
      %v825 = vsel %vm311, %v343, 0
      %827 = vmatprep.subr.bf16.mxu0 0
      %828 = vmatpush1.bf16.msra.mxu0 %v786
      %829 = vmatprep.subr.bf16.mxu0 0
      %830 = vmatpush1.bf16.msra.mxu0 %v785
      %831 = vmatprep.subr.bf16.mxu0 0
      %832 = vmatpush1.bf16.msra.mxu0 %v784
      %833 = vmatprep.subr.bf16.mxu0 0
      %834 = vmatpush1.bf16.msra.mxu0 %v783
      %835 = vmatprep.subr.bf16.mxu0 0
      %836 = vmatpush1.bf16.msra.mxu0 %v782
      %837 = vmatprep.subr.bf16.mxu0 0
      %838 = vmatpush1.bf16.msra.mxu0 %v781
      %839 = vmatprep.subr.bf16.mxu0 0
      %840 = vmatpush1.bf16.msra.mxu0 %v780
      %841 = vmatprep.subr.bf16.mxu0 0
      %842 = vmatpush1.bf16.msra.mxu0 %v779
      %843 = vmatprep.subr.bf16.mxu0 0
      %844 = vmatpush2.bf16.msra.mxu0 0
      %845 = vmatprep.subr.bf16.mxu0 0
      %846 = vmatpush2.bf16.msra.mxu0 0
      %847 = vmatprep.subr.bf16.mxu0 0
      %848 = vmatpush2.bf16.msra.mxu0 0
      %849 = vmatprep.subr.bf16.mxu0 0
      %850 = vmatpush2.bf16.msra.mxu0 0
      %851 = vmatprep.subr.bf16.mxu0 0
      %852 = vmatpush2.bf16.msra.mxu0 %v790
      %853 = vmatprep.subr.bf16.mxu0 0
      %854 = vmatpush2.bf16.msra.mxu0 %v789
      %855 = vmatprep.subr.bf16.mxu0 0
      %856 = vmatpush2.bf16.msra.mxu0 %v788
      %857 = vmatprep.subr.bf16.mxu0 0
      %858 = vmatpush2.bf16.msra.mxu0 %v787
      %859 = vmatprep.mubr.bf16.mxu0 %v804
      %860 = vmatmul.mubr.bf16.gmra.mxu0 %v328
      %v861 = vpop.f32.mrf.mxu0
      %v862 = vadd.f32 %v669, %v861
      %v863 = vpop.f32.mrf.mxu0
      %v864 = vpop.f32.mrf.mxu0
      %v865 = vadd.f32 %v672, %v864
      %v866 = vpop.f32.mrf.mxu0
      %867 = vmatprep.mubr.bf16.mxu0 %v807
      %868 = vmatmul.mubr.bf16.gmra.mxu0 %v330
      %v869 = vpop.f32.mrf.mxu0
      %v870 = vadd.f32 %v677, %v869
      %v871 = vpop.f32.mrf.mxu0
      %v872 = vpop.f32.mrf.mxu0
      %v873 = vadd.f32 %v680, %v872
      %v874 = vpop.f32.mrf.mxu0
      %875 = vmatprep.mubr.bf16.mxu0 %v810
      %876 = vmatmul.mubr.bf16.gmra.mxu0 %v332
      %v877 = vpop.f32.mrf.mxu0
      %v878 = vadd.f32 %v685, %v877
      %v879 = vpop.f32.mrf.mxu0
      %v880 = vpop.f32.mrf.mxu0
      %v881 = vadd.f32 %v688, %v880
      %v882 = vpop.f32.mrf.mxu0
      %883 = vmatprep.mubr.bf16.mxu0 %v813
      %884 = vmatmul.mubr.bf16.gmra.mxu0 %v334
      %v885 = vpop.f32.mrf.mxu0
      %v886 = vadd.f32 %v693, %v885
      %v887 = vpop.f32.mrf.mxu0
      %v888 = vpop.f32.mrf.mxu0
      %v889 = vadd.f32 %v696, %v888
      %v890 = vpop.f32.mrf.mxu0
      %891 = vmatprep.mubr.bf16.mxu0 %v816
      %892 = vmatmul.mubr.bf16.gmra.mxu0 %v336
      %v893 = vpop.f32.mrf.mxu0
      %v894 = vadd.f32 %v701, %v893
      %v895 = vpop.f32.mrf.mxu0
      %v896 = vpop.f32.mrf.mxu0
      %v897 = vadd.f32 %v704, %v896
      %v898 = vpop.f32.mrf.mxu0
      %899 = vmatprep.mubr.bf16.mxu0 %v819
      %900 = vmatmul.mubr.bf16.gmra.mxu0 %v338
      %v901 = vpop.f32.mrf.mxu0
      %v902 = vadd.f32 %v709, %v901
      %v903 = vpop.f32.mrf.mxu0
      %v904 = vpop.f32.mrf.mxu0
      %v905 = vadd.f32 %v712, %v904
      %v906 = vpop.f32.mrf.mxu0
      %907 = vmatprep.mubr.bf16.mxu0 %v822
      %908 = vmatmul.mubr.bf16.gmra.mxu0 %v340
      %v909 = vpop.f32.mrf.mxu0
      %v910 = vadd.f32 %v717, %v909
      %v911 = vpop.f32.mrf.mxu0
      %v912 = vpop.f32.mrf.mxu0
      %v913 = vadd.f32 %v720, %v912
      %v914 = vpop.f32.mrf.mxu0
      %915 = vmatprep.mubr.bf16.mxu0 %v825
      %916 = vmatmul.mubr.bf16.gmra.mxu0 %v342
      %v917 = vpop.f32.mrf.mxu0
      %v918 = vadd.f32 %v725, %v917
      %v919 = vpop.f32.mrf.mxu0
      %v920 = vpop.f32.mrf.mxu0
      %v921 = vadd.f32 %v728, %v920
      %v922 = vpop.f32.mrf.mxu0
      %923 = vdwg.mxu0
      %s924 = scalar_lea.vmem %s192, 48
      %v925 = vld [vmem:[%s924] sm:$0xff]
      %v926 = vld [vmem:[%s924 + $0x8] sm:$0xff]
      %v927 = vld [vmem:[%s924 + $0x18] sm:$0xff]
      %v928 = vld [vmem:[%s924 + $0x20] sm:$0xff]
      %v929 = vld [vmem:[%s924 + $0x30] sm:$0xff]
      %v930 = vld [vmem:[%s924 + $0x38] sm:$0xff]
      %v931 = vld [vmem:[%s924 + $0x48] sm:$0xff]
      %v932 = vld [vmem:[%s924 + $0x50] sm:$0xff]
      %v933 = vld [vmem:[%s924 + $0x60] sm:$0xff]
      %v934 = vld [vmem:[%s924 + $0x68] sm:$0xff]
      %v935 = vld [vmem:[%s924 + $0x78] sm:$0xff]
      %v936 = vld [vmem:[%s924 + $0x80] sm:$0xff]
      %v937 = vld [vmem:[%s924 + $0x90] sm:$0xff]
      %v938 = vld [vmem:[%s924 + $0x98] sm:$0xff]
      %v939 = vld [vmem:[%s924 + $0xa8] sm:$0xff]
      %v940 = vld [vmem:[%s924 + $0xb0] sm:$0xff]
      %v941 = vld [vmem:[%s924 + $0x1] sm:$0xff]
      %v942 = vld [vmem:[%s924 + $0x9] sm:$0xff]
      %v943 = vld [vmem:[%s924 + $0x19] sm:$0xff]
      %v944 = vld [vmem:[%s924 + $0x21] sm:$0xff]
      %v945 = vld [vmem:[%s924 + $0x31] sm:$0xff]
      %v946 = vld [vmem:[%s924 + $0x39] sm:$0xff]
      %v947 = vld [vmem:[%s924 + $0x49] sm:$0xff]
      %v948 = vld [vmem:[%s924 + $0x51] sm:$0xff]
      %v949 = vld [vmem:[%s924 + $0x61] sm:$0xff]
      %v950 = vld [vmem:[%s924 + $0x69] sm:$0xff]
      %v951 = vld [vmem:[%s924 + $0x79] sm:$0xff]
      %v952 = vld [vmem:[%s924 + $0x81] sm:$0xff]
      %v953 = vld [vmem:[%s924 + $0x91] sm:$0xff]
      %v954 = vld [vmem:[%s924 + $0x99] sm:$0xff]
      %v955 = vld [vmem:[%s924 + $0xa9] sm:$0xff]
      %v956 = vld [vmem:[%s924 + $0xb1] sm:$0xff]
      %v957 = vld [vmem:[%s924 + $0x2] sm:$0xff]
      %v958 = vld [vmem:[%s924 + $0xa] sm:$0xff]
      %v959 = vld [vmem:[%s924 + $0x1a] sm:$0xff]
      %v960 = vld [vmem:[%s924 + $0x22] sm:$0xff]
      %v961 = vld [vmem:[%s924 + $0x32] sm:$0xff]
      %v962 = vld [vmem:[%s924 + $0x3a] sm:$0xff]
      %v963 = vld [vmem:[%s924 + $0x4a] sm:$0xff]
      %v964 = vld [vmem:[%s924 + $0x52] sm:$0xff]
      %v965 = vld [vmem:[%s924 + $0x62] sm:$0xff]
      %v966 = vld [vmem:[%s924 + $0x6a] sm:$0xff]
      %v967 = vld [vmem:[%s924 + $0x7a] sm:$0xff]
      %v968 = vld [vmem:[%s924 + $0x82] sm:$0xff]
      %v969 = vld [vmem:[%s924 + $0x92] sm:$0xff]
      %v970 = vld [vmem:[%s924 + $0x9a] sm:$0xff]
      %v971 = vld [vmem:[%s924 + $0xaa] sm:$0xff]
      %v972 = vld [vmem:[%s924 + $0xb2] sm:$0xff]
      %989 = vrot.lane.b32.xlu0 %v941, 64
      %v990 = vpop.permute.xlu0 %989
      %991 = vrot.lane.b32.xlu0 %v942, 64
      %v992 = vpop.permute.xlu0 %991
      %993 = vrot.lane.b32.xlu0 %v943, 64
      %v994 = vpop.permute.xlu0 %993
      %995 = vrot.lane.b32.xlu0 %v944, 64
      %v996 = vpop.permute.xlu0 %995
      %997 = vrot.lane.b32.xlu0 %v945, 64
      %v998 = vpop.permute.xlu0 %997
      %999 = vrot.lane.b32.xlu0 %v946, 64
      %v1000 = vpop.permute.xlu0 %999
      %1001 = vrot.lane.b32.xlu0 %v947, 64
      %v1002 = vpop.permute.xlu0 %1001
      %1003 = vrot.lane.b32.xlu0 %v948, 64
      %v1004 = vpop.permute.xlu0 %1003
      %1005 = vrot.lane.b32.xlu0 %v949, 64
      %v1006 = vpop.permute.xlu0 %1005
      %1007 = vrot.lane.b32.xlu0 %v950, 64
      %v1008 = vpop.permute.xlu0 %1007
      %1009 = vrot.lane.b32.xlu0 %v951, 64
      %v1010 = vpop.permute.xlu0 %1009
      %1011 = vrot.lane.b32.xlu0 %v952, 64
      %v1012 = vpop.permute.xlu0 %1011
      %1013 = vrot.lane.b32.xlu0 %v953, 64
      %v1014 = vpop.permute.xlu0 %1013
      %1015 = vrot.lane.b32.xlu0 %v954, 64
      %v1016 = vpop.permute.xlu0 %1015
      %1017 = vrot.lane.b32.xlu0 %v955, 64
      %v1018 = vpop.permute.xlu0 %1017
      %1019 = vrot.lane.b32.xlu0 %v956, 64
      %v1020 = vpop.permute.xlu0 %1019
      %v1037 = vsel %vm311, %v925, %v990
      %v1038 = vsel %vm311, %v926, %v992
      %v1039 = vsel %vm311, %v927, %v994
      %v1040 = vsel %vm311, %v928, %v996
      %v1041 = vsel %vm311, %v929, %v998
      %v1042 = vsel %vm311, %v930, %v1000
      %v1043 = vsel %vm311, %v931, %v1002
      %v1044 = vsel %vm311, %v932, %v1004
      %v1045 = vsel %vm311, %v933, %v1006
      %v1046 = vsel %vm311, %v934, %v1008
      %v1047 = vsel %vm311, %v935, %v1010
      %v1048 = vsel %vm311, %v936, %v1012
      %v1049 = vsel %vm311, %v937, %v1014
      %v1050 = vsel %vm311, %v938, %v1016
      %v1051 = vsel %vm311, %v939, %v1018
      %v1052 = vsel %vm311, %v940, %v1020
      %v1053 = vpack.c.bf16 %v1038, %v1037
      %v1054 = vpack.c.bf16 %v958, %v957
      %v1055 = vpack.c.bf16 %v1040, %v1039
      %v1056 = vpack.c.bf16 %v960, %v959
      %v1057 = vpack.c.bf16 %v1042, %v1041
      %v1058 = vpack.c.bf16 %v962, %v961
      %v1059 = vpack.c.bf16 %v1044, %v1043
      %v1060 = vpack.c.bf16 %v964, %v963
      %v1061 = vpack.c.bf16 %v1046, %v1045
      %v1062 = vpack.c.bf16 %v966, %v965
      %v1063 = vpack.c.bf16 %v1048, %v1047
      %v1064 = vpack.c.bf16 %v968, %v967
      %v1065 = vpack.c.bf16 %v1050, %v1049
      %v1066 = vpack.c.bf16 %v970, %v969
      %v1067 = vpack.c.bf16 %v1052, %v1051
      %v1068 = vpack.c.bf16 %v972, %v971
      %s1069 = scalar_lea.vmem %s1, 192
      %v1070 = vld [vmem:[%s1069] sm:$0xf]
      %v1071 = vld [vmem:[%s1069 + $0x4] sm:$0xf]
      %v1072 = vld [vmem:[%s1069 + $0x8] sm:$0xf]
      %v1073 = vld [vmem:[%s1069 + $0xc] sm:$0xf]
      %v1074 = vld [vmem:[%s1069 + $0x10] sm:$0xf]
      %v1075 = vld [vmem:[%s1069 + $0x14] sm:$0xf]
      %v1076 = vld [vmem:[%s1069 + $0x18] sm:$0xf]
      %v1077 = vld [vmem:[%s1069 + $0x1c] sm:$0xf]
      %v1078 = vld [vmem:[%s1069 + $0x20] sm:$0xf]
      %v1079 = vld [vmem:[%s1069 + $0x24] sm:$0xf]
      %v1080 = vld [vmem:[%s1069 + $0x28] sm:$0xf]
      %v1081 = vld [vmem:[%s1069 + $0x2c] sm:$0xf]
      %v1082 = vld [vmem:[%s1069 + $0x30] sm:$0xf]
      %v1083 = vld [vmem:[%s1069 + $0x34] sm:$0xf]
      %v1084 = vld [vmem:[%s1069 + $0x38] sm:$0xf]
      %v1085 = vld [vmem:[%s1069 + $0x3c] sm:$0xf]
      %v1086 = vld [vmem:[%s1069 + $0x40] sm:$0xf]
      %v1087 = vld [vmem:[%s1069 + $0x44] sm:$0xf]
      %v1088 = vld [vmem:[%s1069 + $0x48] sm:$0xf]
      %v1089 = vld [vmem:[%s1069 + $0x4c] sm:$0xf]
      %v1090 = vld [vmem:[%s1069 + $0x50] sm:$0xf]
      %v1091 = vld [vmem:[%s1069 + $0x54] sm:$0xf]
      %v1092 = vld [vmem:[%s1069 + $0x58] sm:$0xf]
      %v1093 = vld [vmem:[%s1069 + $0x5c] sm:$0xf]
      %v1118 = vunpack.c.l.b16 %v1070
      %v1119 = vunpack.c.l.b16 %v1071
      %v1120 = vunpack.c.l.b16 %v1072
      %v1121 = vunpack.c.l.b16 %v1073
      %v1122 = vunpack.c.l.b16 %v1074
      %v1123 = vunpack.c.l.b16 %v1075
      %v1124 = vunpack.c.l.b16 %v1076
      %v1125 = vunpack.c.l.b16 %v1077
      %v1126 = vunpack.c.l.b16 %v1078
      %v1127 = vunpack.c.l.b16 %v1079
      %v1128 = vunpack.c.l.b16 %v1080
      %v1129 = vunpack.c.l.b16 %v1081
      %v1130 = vunpack.c.l.b16 %v1082
      %v1131 = vunpack.c.l.b16 %v1083
      %v1132 = vunpack.c.l.b16 %v1084
      %v1133 = vunpack.c.l.b16 %v1085
      %v1134 = vunpack.c.l.b16 %v1086
      %v1135 = vunpack.c.l.b16 %v1087
      %v1136 = vunpack.c.l.b16 %v1088
      %v1137 = vunpack.c.l.b16 %v1089
      %v1138 = vunpack.c.l.b16 %v1090
      %v1139 = vunpack.c.l.b16 %v1091
      %v1140 = vunpack.c.l.b16 %v1092
      %v1141 = vunpack.c.l.b16 %v1093
      %v1142 = vpack.c.b16 %v1119, %v1118
      %v1143 = vpack.c.b16 %v1121, %v1120
      %v1144 = vpack.c.b16 %v1123, %v1122
      %v1145 = vpack.c.b16 %v1125, %v1124
      %v1146 = vpack.c.b16 %v1127, %v1126
      %v1147 = vpack.c.b16 %v1129, %v1128
      %v1148 = vpack.c.b16 %v1131, %v1130
      %v1149 = vpack.c.b16 %v1133, %v1132
      %v1150 = vpack.c.b16 %v1135, %v1134
      %v1151 = vpack.c.b16 %v1137, %v1136
      %v1152 = vpack.c.b16 %v1139, %v1138
      %v1153 = vpack.c.b16 %v1141, %v1140
      %v1167 = vsel %vm311, %v1054, 0
      %v1170 = vsel %vm311, %v1056, 0
      %v1173 = vsel %vm311, %v1058, 0
      %v1176 = vsel %vm311, %v1060, 0
      %v1179 = vsel %vm311, %v1062, 0
      %v1182 = vsel %vm311, %v1064, 0
      %v1185 = vsel %vm311, %v1066, 0
      %v1188 = vsel %vm311, %v1068, 0
      %1190 = vmatprep.subr.bf16.mxu0 0
      %1191 = vmatpush1.bf16.msra.mxu0 %v1149
      %1192 = vmatprep.subr.bf16.mxu0 0
      %1193 = vmatpush1.bf16.msra.mxu0 %v1148
      %1194 = vmatprep.subr.bf16.mxu0 0
      %1195 = vmatpush1.bf16.msra.mxu0 %v1147
      %1196 = vmatprep.subr.bf16.mxu0 0
      %1197 = vmatpush1.bf16.msra.mxu0 %v1146
      %1198 = vmatprep.subr.bf16.mxu0 0
      %1199 = vmatpush1.bf16.msra.mxu0 %v1145
      %1200 = vmatprep.subr.bf16.mxu0 0
      %1201 = vmatpush1.bf16.msra.mxu0 %v1144
      %1202 = vmatprep.subr.bf16.mxu0 0
      %1203 = vmatpush1.bf16.msra.mxu0 %v1143
      %1204 = vmatprep.subr.bf16.mxu0 0
      %1205 = vmatpush1.bf16.msra.mxu0 %v1142
      %1206 = vmatprep.subr.bf16.mxu0 0
      %1207 = vmatpush2.bf16.msra.mxu0 0
      %1208 = vmatprep.subr.bf16.mxu0 0
      %1209 = vmatpush2.bf16.msra.mxu0 0
      %1210 = vmatprep.subr.bf16.mxu0 0
      %1211 = vmatpush2.bf16.msra.mxu0 0
      %1212 = vmatprep.subr.bf16.mxu0 0
      %1213 = vmatpush2.bf16.msra.mxu0 0
      %1214 = vmatprep.subr.bf16.mxu0 0
      %1215 = vmatpush2.bf16.msra.mxu0 %v1153
      %1216 = vmatprep.subr.bf16.mxu0 0
      %1217 = vmatpush2.bf16.msra.mxu0 %v1152
      %1218 = vmatprep.subr.bf16.mxu0 0
      %1219 = vmatpush2.bf16.msra.mxu0 %v1151
      %1220 = vmatprep.subr.bf16.mxu0 0
      %1221 = vmatpush2.bf16.msra.mxu0 %v1150
      %1222 = vmatprep.mubr.bf16.mxu0 %v1167
      %1223 = vmatmul.mubr.bf16.gmra.mxu0 %v1053
      %v1224 = vpop.f32.mrf.mxu0
      %v1225 = vadd.f32 0.0, %v1224
      %v1226 = vpop.f32.mrf.mxu0
      %v1227 = vpop.f32.mrf.mxu0
      %v1228 = vadd.f32 0.0, %v1227
      %v1229 = vpop.f32.mrf.mxu0
      %1230 = vmatprep.mubr.bf16.mxu0 %v1170
      %1231 = vmatmul.mubr.bf16.gmra.mxu0 %v1055
      %v1232 = vpop.f32.mrf.mxu0
      %v1233 = vadd.f32 0.0, %v1232
      %v1234 = vpop.f32.mrf.mxu0
      %v1235 = vpop.f32.mrf.mxu0
      %v1236 = vadd.f32 0.0, %v1235
      %v1237 = vpop.f32.mrf.mxu0
      %1238 = vmatprep.mubr.bf16.mxu0 %v1173
      %1239 = vmatmul.mubr.bf16.gmra.mxu0 %v1057
      %v1240 = vpop.f32.mrf.mxu0
      %v1241 = vadd.f32 0.0, %v1240
      %v1242 = vpop.f32.mrf.mxu0
      %v1243 = vpop.f32.mrf.mxu0
      %v1244 = vadd.f32 0.0, %v1243
      %v1245 = vpop.f32.mrf.mxu0
      %1246 = vmatprep.mubr.bf16.mxu0 %v1176
      %1247 = vmatmul.mubr.bf16.gmra.mxu0 %v1059
      %v1248 = vpop.f32.mrf.mxu0
      %v1249 = vadd.f32 0.0, %v1248
      %v1250 = vpop.f32.mrf.mxu0
      %v1251 = vpop.f32.mrf.mxu0
      %v1252 = vadd.f32 0.0, %v1251
      %v1253 = vpop.f32.mrf.mxu0
      %1254 = vmatprep.mubr.bf16.mxu0 %v1179
      %1255 = vmatmul.mubr.bf16.gmra.mxu0 %v1061
      %v1256 = vpop.f32.mrf.mxu0
      %v1257 = vadd.f32 0.0, %v1256
      %v1258 = vpop.f32.mrf.mxu0
      %v1259 = vpop.f32.mrf.mxu0
      %v1260 = vadd.f32 0.0, %v1259
      %v1261 = vpop.f32.mrf.mxu0
      %1262 = vmatprep.mubr.bf16.mxu0 %v1182
      %1263 = vmatmul.mubr.bf16.gmra.mxu0 %v1063
      %v1264 = vpop.f32.mrf.mxu0
      %v1265 = vadd.f32 0.0, %v1264
      %v1266 = vpop.f32.mrf.mxu0
      %v1267 = vpop.f32.mrf.mxu0
      %v1268 = vadd.f32 0.0, %v1267
      %v1269 = vpop.f32.mrf.mxu0
      %1270 = vmatprep.mubr.bf16.mxu0 %v1185
      %1271 = vmatmul.mubr.bf16.gmra.mxu0 %v1065
      %v1272 = vpop.f32.mrf.mxu0
      %v1273 = vadd.f32 0.0, %v1272
      %v1274 = vpop.f32.mrf.mxu0
      %v1275 = vpop.f32.mrf.mxu0
      %v1276 = vadd.f32 0.0, %v1275
      %v1277 = vpop.f32.mrf.mxu0
      %1278 = vmatprep.mubr.bf16.mxu0 %v1188
      %1279 = vmatmul.mubr.bf16.gmra.mxu0 %v1067
      %v1280 = vpop.f32.mrf.mxu0
      %v1281 = vadd.f32 0.0, %v1280
      %v1282 = vpop.f32.mrf.mxu0
      %v1283 = vpop.f32.mrf.mxu0
      %v1284 = vadd.f32 0.0, %v1283
      %v1285 = vpop.f32.mrf.mxu0
      %1286 = vdwg.mxu0
      %v1287 = vadd.f32 %v862, %v1225
      %v1288 = vadd.f32 %v865, %v1228
      %v1289 = vadd.f32 %v870, %v1233
      %v1290 = vadd.f32 %v873, %v1236
      %v1291 = vadd.f32 %v878, %v1241
      %v1292 = vadd.f32 %v881, %v1244
      %v1293 = vadd.f32 %v886, %v1249
      %v1294 = vadd.f32 %v889, %v1252
      %v1295 = vadd.f32 %v894, %v1257
      %v1296 = vadd.f32 %v897, %v1260
      %v1297 = vadd.f32 %v902, %v1265
      %v1298 = vadd.f32 %v905, %v1268
      %v1299 = vadd.f32 %v910, %v1273
      %v1300 = vadd.f32 %v913, %v1276
      %v1301 = vadd.f32 %v918, %v1281
      %v1302 = vadd.f32 %v921, %v1284
      %v1303 = vld [vmem:[%s2] sm:$0x1]
      %v1305 = vlaneseq
      %v1306 = vshrl.u32 %v1305, 7
      %v1307 = vsub.s32 0, %v1306
      %v1308 = vrot.slane %v1303, %v1307
      %v1310 = vmul.f32 %v1287, %v1308
      %v1311 = vmul.f32 %v1288, %v1308
      %v1312 = vmul.f32 %v1289, %v1308
      %v1313 = vmul.f32 %v1290, %v1308
      %v1314 = vmul.f32 %v1291, %v1308
      %v1315 = vmul.f32 %v1292, %v1308
      %v1316 = vmul.f32 %v1293, %v1308
      %v1317 = vmul.f32 %v1294, %v1308
      %v1318 = vmul.f32 %v1295, %v1308
      %v1319 = vmul.f32 %v1296, %v1308
      %v1320 = vmul.f32 %v1297, %v1308
      %v1321 = vmul.f32 %v1298, %v1308
      %v1322 = vmul.f32 %v1299, %v1308
      %v1323 = vmul.f32 %v1300, %v1308
      %v1324 = vmul.f32 %v1301, %v1308
      %v1325 = vmul.f32 %v1302, %v1308
      %v1326 = vld [vmem:[%s3] sm:$0x1]
      %v1328 = vlaneseq
      %v1329 = vshrl.u32 %v1328, 7
      %v1330 = vsub.s32 0, %v1329
      %v1331 = vrot.slane %v1326, %v1330
      %v1333 = vadd.f32 %v1310, %v1331
      %v1334 = vadd.f32 %v1311, %v1331
      %v1335 = vadd.f32 %v1312, %v1331
      %v1336 = vadd.f32 %v1313, %v1331
      %v1337 = vadd.f32 %v1314, %v1331
      %v1338 = vadd.f32 %v1315, %v1331
      %v1339 = vadd.f32 %v1316, %v1331
      %v1340 = vadd.f32 %v1317, %v1331
      %v1341 = vadd.f32 %v1318, %v1331
      %v1342 = vadd.f32 %v1319, %v1331
      %v1343 = vadd.f32 %v1320, %v1331
      %v1344 = vadd.f32 %v1321, %v1331
      %v1345 = vadd.f32 %v1322, %v1331
      %v1346 = vadd.f32 %v1323, %v1331
      %v1347 = vadd.f32 %v1324, %v1331
      %v1348 = vadd.f32 %v1325, %v1331
      %v1349 = vmax.f32 %v1333, 0.0
      %v1350 = vmax.f32 %v1334, 0.0
      %v1351 = vmax.f32 %v1335, 0.0
      %v1352 = vmax.f32 %v1336, 0.0
      %v1353 = vmax.f32 %v1337, 0.0
      %v1354 = vmax.f32 %v1338, 0.0
      %v1355 = vmax.f32 %v1339, 0.0
      %v1356 = vmax.f32 %v1340, 0.0
      %v1357 = vmax.f32 %v1341, 0.0
      %v1358 = vmax.f32 %v1342, 0.0
      %v1359 = vmax.f32 %v1343, 0.0
      %v1360 = vmax.f32 %v1344, 0.0
      %v1361 = vmax.f32 %v1345, 0.0
      %v1362 = vmax.f32 %v1346, 0.0
      %v1363 = vmax.f32 %v1347, 0.0
      %v1364 = vmax.f32 %v1348, 0.0
      %v1365 = vmax.f32 %v1349, %v1351
      %v1366 = vmax.f32 %v1350, %v1352
      %v1367 = vmax.f32 %v1353, %v1355
      %v1368 = vmax.f32 %v1354, %v1356
      %v1369 = vmax.f32 %v1357, %v1359
      %v1370 = vmax.f32 %v1358, %v1360
      %v1371 = vmax.f32 %v1361, %v1363
      %v1372 = vmax.f32 %v1362, %v1364
      %1373 = vst.msk [vmem:[#allocation2] sm:$0xff] %vm311, %v1365
      %1374 = vst.msk [vmem:[#allocation2 + $0x8] sm:$0xff] %vm311, %v1366
      %1375 = vst.msk [vmem:[#allocation2 + $0x10] sm:$0xff] %vm311, %v1367
      %1376 = vst.msk [vmem:[#allocation2 + $0x18] sm:$0xff] %vm311, %v1368
      %1377 = vst.msk [vmem:[#allocation2 + $0x20] sm:$0xff] %vm311, %v1369
      %1378 = vst.msk [vmem:[#allocation2 + $0x28] sm:$0xff] %vm311, %v1370
      %1379 = vst.msk [vmem:[#allocation2 + $0x30] sm:$0xff] %vm311, %v1371
      %1380 = vst.msk [vmem:[#allocation2 + $0x38] sm:$0xff] %vm311, %v1372
      %v1381 = vld [vmem:[#allocation2] ss:$2 sm:$0xff]
      %s1382 = scalar_lea.vmem [#allocation2], 16
      %v1383 = vld [vmem:[%s1382] ss:$2 sm:$0xff]
      %s1384 = scalar_lea.vmem [#allocation2], 32
      %v1385 = vld [vmem:[%s1384] ss:$2 sm:$0xff]
      %s1386 = scalar_lea.vmem [#allocation2], 48
      %v1387 = vld [vmem:[%s1386] ss:$2 sm:$0xff]
      %s1388 = scalar_lea.vmem [#allocation2], 1
      %v1389 = vld [vmem:[%s1388] ss:$2 sm:$0xff]
      %s1390 = scalar_lea.vmem [#allocation2], 17
      %v1391 = vld [vmem:[%s1390] ss:$2 sm:$0xff]
      %s1392 = scalar_lea.vmem [#allocation2], 33
      %v1393 = vld [vmem:[%s1392] ss:$2 sm:$0xff]
      %s1394 = scalar_lea.vmem [#allocation2], 49
      %v1395 = vld [vmem:[%s1394] ss:$2 sm:$0xff]
      %v1396 = vmax.f32 %v1381, %v1389
      %v1397 = vmax.f32 %v1383, %v1391
      %v1398 = vmax.f32 %v1385, %v1393
      %v1399 = vmax.f32 %v1387, %v1395
      %1400 = vst.msk [vmem:[%s197] sm:$0xff] %vm311, 0.0
      %vm1401 = vcmask 517120
      %1402 = vst.msk [vmem:[%s197 + $0x8] sm:$0x3] %vm1401, 0.0
      %1403 = vst.msk [vmem:[%s197 + $0x10] sm:$0xff] %vm311, 0.0
      %1404 = vst.msk [vmem:[%s197 + $0x18] sm:$0x3] %vm1401, 0.0
      %1405 = vst.msk [vmem:[%s197 + $0x20] sm:$0xff] %vm311, 0.0
      %1406 = vst.msk [vmem:[%s197 + $0x28] sm:$0x3] %vm1401, 0.0
      %1407 = vst.msk [vmem:[%s197 + $0x30] sm:$0xff] %vm311, 0.0
      %1408 = vst.msk [vmem:[%s197 + $0x38] sm:$0x3] %vm1401, 0.0
      %1409 = vst.msk [vmem:[%s197 + $0x40] sm:$0xff] %vm311, 0.0
      %1410 = vst.msk [vmem:[%s197 + $0x48] sm:$0x3] %vm1401, 0.0
      %1411 = vst.msk [vmem:[%s197 + $0x50] sm:$0xff] %vm311, 0.0
      %1412 = vst.msk [vmem:[%s197 + $0x58] sm:$0x3] %vm1401, 0.0
      %s1413 = scalar_lea.vmem %s197, 16
      %1414 = vst.msk [vmem:[%s1413 + $0x1] sm:$0xff] %vm311, %v1396
      %1415 = vst.msk [vmem:[%s1413 + $0x11] sm:$0xff] %vm311, %v1397
      %1416 = vst.msk [vmem:[%s1413 + $0x21] sm:$0xff] %vm311, %v1398
      %1417 = vst.msk [vmem:[%s1413 + $0x31] sm:$0xff] %vm311, %v1399
      %p1418 = scmp.lt.s32.totalorder %s15, 1
      %s1419 = scalar_select %p1418, %s15, 1
      %s1420 = smul.addr %s1419, 12
      %s1421 = smul.addr %s1420, 8
      %s1422 = scalar_lea.vmem %s4, %s1421
      // Predicated region
      $region37: #{audio_ntt2020_forward.5} parent=35 // pred_check
        %p1423 = pneg %p122
      $region38: #{audio_ntt2020_forward.5} parent=35 // pred_check_branch
        %1425 = sbr.rel (%p1423) target = $region40
      $region39: #{audio_ntt2020_forward.5} parent=35 // pred_region
        _
      $region40: #{audio_ntt2020_forward.5} parent=35 // pred_fallthru
        _
    $region36: #{audio_ntt2020_forward.5} parent=5 // pred_fallthru
      _
    %p1426 = scmp.le.s32.totalorder 2, %s10
    // Predicated region
    $region41: #{audio_ntt2020_forward.5} parent=5 // pred_check
      %p1427 = pneg %p1426
    $region42: #{audio_ntt2020_forward.5} parent=5 // pred_check_branch
      %1429 = sbr.rel (%p1427) target = $region44
    $region43: #{audio_ntt2020_forward.5} parent=5 // pred_region
      %s1430 = ssub.s32 %s10, 2
      // Predicated region
      $region45: #{audio_ntt2020_forward.5} parent=43 // pred_check
        %p1431 = pneg %p128
      $region46: #{audio_ntt2020_forward.5} parent=43 // pred_check_branch
        %1433 = sbr.rel (%p1431) target = $region48
      $region47: #{audio_ntt2020_forward.5} parent=43 // pred_region
        %p1434 = scmp.lt.s32.totalorder %s16, 1
        %s1435 = scalar_select %p1434, %s16, 1
        %s1436 = smul.addr %s1435, 12
        %s1437 = smul.addr %s1436, 8
        %s1438 = scalar_lea.vmem %s4, %s1437
      $region48: #{audio_ntt2020_forward.5} parent=43 // pred_fallthru
        _
    $region44: #{audio_ntt2020_forward.5} parent=5 // pred_fallthru
      _
  $region6: #{audio_ntt2020_forward.5} parent=0 // loop_footer
    %s14 = sadd.s32 1, %s10
  $region7: #{audio_ntt2020_forward.5} parent=0 // loop_footer_branch
    %9 = sbr.rel target = $region3
  $region8: #{audio_ntt2020_forward.5} parent=0 // loop_exit
    _

// kernel: audio_ntt2020_forward.7
$region0: #{audio_ntt2020_forward.7}
  #allocation0 [shape = 'u32[]', space=smem, size = 0x4, offset = 0x4, fixed_abs, tag = 'smem constant byte address 0x4 - core index']
  #allocation1 [shape = 'u32[144,128]{1,0:T(1,128)}', space=vmem, size = 0x12000, scoped, tag = 'internal scratch']
  %s0 = inlined_call_operand.vmem [shape: f32[8,128], index: 0, kind: input, shape index: {}]
  %s1 = inlined_call_operand.vmem [shape: bf16[128,64], index: 1, kind: input, shape index: {}]
  %s2 = inlined_call_operand.vmem [shape: f32[1,64], index: 2, kind: input, shape index: {}]
  %s3 = inlined_call_operand.vmem [shape: bf16[64,64], index: 3, kind: input, shape index: {}]
  %s4 = inlined_call_operand.vmem [shape: f32[1,64], index: 4, kind: input, shape index: {}]
  %s5 = inlined_call_operand.hbm [shape: f32[2,64], index: 5, kind: output, shape index: {}]
  %s6 = sld [smem:[#allocation0]]
  $region30: #{audio_ntt2020_forward.7} parent=0
    _
  %s8 = ssub.s32 1, %s6
  %s9 = scalar_select 0, %s8, %s6
  $region1: #{audio_ntt2020_forward.7} parent=0
    #allocation2 [shape = 'u8[1024]{0}', space=vmem, size = 0x400, scoped, tag = 'output window, operand 0, single buffered']
    #allocation3 [shape = 's32[1]{0}', space=sflag, size = 0x4, scoped, tag = 'scoped memory for audio_ntt2020_forward.7']
    %10 = vsyncpa [#allocation3], 0
    // Predicated region
    $region2: #{audio_ntt2020_forward.7} parent=1 // pred_check
      _
    $region3: #{audio_ntt2020_forward.7} parent=1 // pred_check_branch
      %12 = sbr.rel (0) target = $region5
    $region4: #{audio_ntt2020_forward.7} parent=1 // pred_region
      _
    $region5: #{audio_ntt2020_forward.7} parent=1 // pred_fallthru
      _
    // Predicated region
    $region6: #{audio_ntt2020_forward.7} parent=1 // pred_check
      _
    $region7: #{audio_ntt2020_forward.7} parent=1 // pred_check_branch
      %14 = sbr.rel (0) target = $region9
    $region8: #{audio_ntt2020_forward.7} parent=1 // pred_region
      _
    $region9: #{audio_ntt2020_forward.7} parent=1 // pred_fallthru
      _
    // Predicated region
    $region10: #{audio_ntt2020_forward.7} parent=1 // pred_check
      _
    $region11: #{audio_ntt2020_forward.7} parent=1 // pred_check_branch
      %16 = sbr.rel (0) target = $region13
    $region12: #{audio_ntt2020_forward.7} parent=1 // pred_region
      _
    $region13: #{audio_ntt2020_forward.7} parent=1 // pred_fallthru
      _
    // Predicated region
    $region14: #{audio_ntt2020_forward.7} parent=1 // pred_check
      _
    $region15: #{audio_ntt2020_forward.7} parent=1 // pred_check_branch
      %18 = sbr.rel (0) target = $region17
    $region16: #{audio_ntt2020_forward.7} parent=1 // pred_region
      _
    $region17: #{audio_ntt2020_forward.7} parent=1 // pred_fallthru
      _
    // Predicated region
    $region18: #{audio_ntt2020_forward.7} parent=1 // pred_check
      _
    $region19: #{audio_ntt2020_forward.7} parent=1 // pred_check_branch
      %20 = sbr.rel (0) target = $region21
    $region20: #{audio_ntt2020_forward.7} parent=1 // pred_region
      _
    $region21: #{audio_ntt2020_forward.7} parent=1 // pred_fallthru
      _
    %v22 = vld [vmem:[%s0] sm:$0xff]
    %v23 = vpack.c.bf16 %v22, %v22
    %v24 = vld [vmem:[%s1] sm:$0xf]
    %v25 = vld [vmem:[%s1 + $0x4] sm:$0xf]
    %v26 = vld [vmem:[%s1 + $0x8] sm:$0xf]
    %v27 = vld [vmem:[%s1 + $0xc] sm:$0xf]
    %v28 = vld [vmem:[%s1 + $0x10] sm:$0xf]
    %v29 = vld [vmem:[%s1 + $0x14] sm:$0xf]
    %v30 = vld [vmem:[%s1 + $0x18] sm:$0xf]
    %v31 = vld [vmem:[%s1 + $0x1c] sm:$0xf]
    %v32 = vld [vmem:[%s1 + $0x20] sm:$0xf]
    %v33 = vld [vmem:[%s1 + $0x24] sm:$0xf]
    %v34 = vld [vmem:[%s1 + $0x28] sm:$0xf]
    %v35 = vld [vmem:[%s1 + $0x2c] sm:$0xf]
    %v36 = vld [vmem:[%s1 + $0x30] sm:$0xf]
    %v37 = vld [vmem:[%s1 + $0x34] sm:$0xf]
    %v38 = vld [vmem:[%s1 + $0x38] sm:$0xf]
    %v39 = vld [vmem:[%s1 + $0x3c] sm:$0xf]
    %v40 = vld [vmem:[%s2] sm:$0x1]
    %v42 = vlaneseq
    %v43 = vshrl.u32 %v42, 7
    %v44 = vsub.s32 0, %v43
    %v45 = vrot.slane %v40, %v44
    %v63 = vunpack.c.l.b16 %v24
    %v64 = vunpack.c.l.b16 %v25
    %v65 = vunpack.c.l.b16 %v26
    %v66 = vunpack.c.l.b16 %v27
    %v67 = vunpack.c.l.b16 %v28
    %v68 = vunpack.c.l.b16 %v29
    %v69 = vunpack.c.l.b16 %v30
    %v70 = vunpack.c.l.b16 %v31
    %v71 = vunpack.c.l.b16 %v32
    %v72 = vunpack.c.l.b16 %v33
    %v73 = vunpack.c.l.b16 %v34
    %v74 = vunpack.c.l.b16 %v35
    %v75 = vunpack.c.l.b16 %v36
    %v76 = vunpack.c.l.b16 %v37
    %v77 = vunpack.c.l.b16 %v38
    %v78 = vunpack.c.l.b16 %v39
    %v79 = vpack.c.b16 %v64, %v63
    %v80 = vpack.c.b16 %v66, %v65
    %v81 = vpack.c.b16 %v68, %v67
    %v82 = vpack.c.b16 %v70, %v69
    %v83 = vpack.c.b16 %v72, %v71
    %v84 = vpack.c.b16 %v74, %v73
    %v85 = vpack.c.b16 %v76, %v75
    %v86 = vpack.c.b16 %v78, %v77
    %95 = vmatprep.subr.bf16.mxu0 0
    %96 = vmatpush1.bf16.msra.mxu0 %v86
    %97 = vmatprep.subr.bf16.mxu0 0
    %98 = vmatpush1.bf16.msra.mxu0 %v85
    %99 = vmatprep.subr.bf16.mxu0 0
    %100 = vmatpush1.bf16.msra.mxu0 %v84
    %101 = vmatprep.subr.bf16.mxu0 0
    %102 = vmatpush1.bf16.msra.mxu0 %v83
    %103 = vmatprep.subr.bf16.mxu0 0
    %104 = vmatpush1.bf16.msra.mxu0 %v82
    %105 = vmatprep.subr.bf16.mxu0 0
    %106 = vmatpush1.bf16.msra.mxu0 %v81
    %107 = vmatprep.subr.bf16.mxu0 0
    %108 = vmatpush1.bf16.msra.mxu0 %v80
    %109 = vmatprep.subr.bf16.mxu0 0
    %110 = vmatpush1.bf16.msra.mxu0 %v79
    %111 = vmatprep.subr.bf16.mxu0 0
    %112 = vmatpush2.bf16.msra.mxu0 0
    %113 = vmatprep.subr.bf16.mxu0 0
    %114 = vmatpush2.bf16.msra.mxu0 0
    %115 = vmatprep.subr.bf16.mxu0 0
    %116 = vmatpush2.bf16.msra.mxu0 0
    %117 = vmatprep.subr.bf16.mxu0 0
    %118 = vmatpush2.bf16.msra.mxu0 0
    %119 = vmatprep.subr.bf16.mxu0 0
    %120 = vmatpush2.bf16.msra.mxu0 0
    %121 = vmatprep.subr.bf16.mxu0 0
    %122 = vmatpush2.bf16.msra.mxu0 0
    %123 = vmatprep.subr.bf16.mxu0 0
    %124 = vmatpush2.bf16.msra.mxu0 0
    %125 = vmatprep.subr.bf16.mxu0 0
    %126 = vmatpush2.bf16.msra.mxu0 0
    %127 = vmatprep.mubr.bf16.mxu0 0
    %128 = vmatmul.mubr.bf16.gmra.mxu0 %v23
    %v129 = vpop.f32.mrf.mxu0
    %v130 = vadd.f32 %v45, %v129
    %v131 = vpop.f32.mrf.mxu0
    %v132 = vpop.f32.mrf.mxu0
    %v133 = vpop.f32.mrf.mxu0
    %134 = vdwg.mxu0
    %v135 = vmax.f32 %v130, 0.0
    %v136 = vpack.c.bf16 %v135, %v135
    %v137 = vld [vmem:[%s3] sm:$0xf]
    %v138 = vld [vmem:[%s3 + $0x4] sm:$0xf]
    %v139 = vld [vmem:[%s3 + $0x8] sm:$0xf]
    %v140 = vld [vmem:[%s3 + $0xc] sm:$0xf]
    %v141 = vld [vmem:[%s3 + $0x10] sm:$0xf]
    %v142 = vld [vmem:[%s3 + $0x14] sm:$0xf]
    %v143 = vld [vmem:[%s3 + $0x18] sm:$0xf]
    %v144 = vld [vmem:[%s3 + $0x1c] sm:$0xf]
    %v145 = vld [vmem:[%s4] sm:$0x1]
    %v147 = vlaneseq
    %v148 = vshrl.u32 %v147, 7
    %v149 = vsub.s32 0, %v148
    %v150 = vrot.slane %v145, %v149
    %v160 = vunpack.c.l.b16 %v137
    %v161 = vunpack.c.l.b16 %v138
    %v162 = vunpack.c.l.b16 %v139
    %v163 = vunpack.c.l.b16 %v140
    %v164 = vunpack.c.l.b16 %v141
    %v165 = vunpack.c.l.b16 %v142
    %v166 = vunpack.c.l.b16 %v143
    %v167 = vunpack.c.l.b16 %v144
    %v168 = vpack.c.b16 %v161, %v160
    %v169 = vpack.c.b16 %v163, %v162
    %v170 = vpack.c.b16 %v165, %v164
    %v171 = vpack.c.b16 %v167, %v166
    %vm176 = vcmask 523264
    %v178 = vsel %vm176, %v136, 0
    %180 = vmatprep.subr.bf16.mxu0 0
    %181 = vmatpush1.bf16.msra.mxu0 0
    %182 = vmatprep.subr.bf16.mxu0 0
    %183 = vmatpush1.bf16.msra.mxu0 0
    %184 = vmatprep.subr.bf16.mxu0 0
    %185 = vmatpush1.bf16.msra.mxu0 0
    %186 = vmatprep.subr.bf16.mxu0 0
    %187 = vmatpush1.bf16.msra.mxu0 0
    %188 = vmatprep.subr.bf16.mxu0 0
    %189 = vmatpush1.bf16.msra.mxu0 %v171
    %190 = vmatprep.subr.bf16.mxu0 0
    %191 = vmatpush1.bf16.msra.mxu0 %v170
    %192 = vmatprep.subr.bf16.mxu0 0
    %193 = vmatpush1.bf16.msra.mxu0 %v169
    %194 = vmatprep.subr.bf16.mxu0 0
    %195 = vmatpush1.bf16.msra.mxu0 %v168
    %196 = vmatprep.subr.bf16.mxu0 0
    %197 = vmatpush2.bf16.msra.mxu0 0
    %198 = vmatprep.subr.bf16.mxu0 0
    %199 = vmatpush2.bf16.msra.mxu0 0
    %200 = vmatprep.subr.bf16.mxu0 0
    %201 = vmatpush2.bf16.msra.mxu0 0
    %202 = vmatprep.subr.bf16.mxu0 0
    %203 = vmatpush2.bf16.msra.mxu0 0
    %204 = vmatprep.subr.bf16.mxu0 0
    %205 = vmatpush2.bf16.msra.mxu0 0
    %206 = vmatprep.subr.bf16.mxu0 0
    %207 = vmatpush2.bf16.msra.mxu0 0
    %208 = vmatprep.subr.bf16.mxu0 0
    %209 = vmatpush2.bf16.msra.mxu0 0
    %210 = vmatprep.subr.bf16.mxu0 0
    %211 = vmatpush2.bf16.msra.mxu0 0
    %212 = vmatprep.mubr.bf16.mxu0 0
    %213 = vmatmul.mubr.bf16.gmra.mxu0 %v178
    %v214 = vpop.f32.mrf.mxu0
    %v215 = vadd.f32 %v150, %v214
    %v216 = vpop.f32.mrf.mxu0
    %v217 = vpop.f32.mrf.mxu0
    %v218 = vpop.f32.mrf.mxu0
    %219 = vdwg.mxu0
    %v220 = vmax.f32 %v215, 0.0
    %vm221 = vcmask 519168
    %v222 = vsel %vm221, %v220, 0.0
    %v223 = vrot.slane %v222, 4
    %v224 = vadd.f32 %v222, %v223
    %v225 = vrot.slane %v224, 2
    %v226 = vadd.f32 %v224, %v225
    %v227 = vrot.slane %v226, 1
    %v228 = vadd.f32 %v226, %v227
    %v229 = vrcp.pop 4.0
    %v230 = vmul.f32 %v228, %v229
    %v231 = vsel %vm221, %v220, -inf
    %v232 = vrot.slane %v231, 4
    %v233 = vmax.f32 %v231, %v232
    %v234 = vrot.slane %v233, 2
    %v235 = vmax.f32 %v233, %v234
    %v236 = vrot.slane %v235, 1
    %v237 = vmax.f32 %v235, %v236
    %v238 = vadd.f32 %v230, %v237
    %v240 = vrot.slane %v220, 4
    %v242 = vsel %vm221, %v240, 0.0
    %v243 = vrot.slane %v242, 4
    %v244 = vadd.f32 %v242, %v243
    %v245 = vrot.slane %v244, 2
    %v246 = vadd.f32 %v244, %v245
    %v247 = vrot.slane %v246, 1
    %v248 = vadd.f32 %v246, %v247
    %v249 = vmul.f32 %v248, %v229
    %vm250 = vcmask 523268
    %v251 = vsel %vm250, %v220, -inf
    %v252 = vrot.slane %v251, 4
    %v253 = vmax.f32 %v251, %v252
    %v254 = vrot.slane %v253, 2
    %v255 = vmax.f32 %v253, %v254
    %v256 = vrot.slane %v255, 1
    %v257 = vmax.f32 %v255, %v256
    %v258 = vadd.f32 %v249, %v257
    %vm259 = vcmask 1040384
    %v260 = vsel %vm259, %v238, %v258
    %vm261 = vcmask 517120
    %262 = vst.msk [vmem:[#allocation2] sm:$0x3] %vm261, %v260
    // Predicated region
    $region22: #{audio_ntt2020_forward.7} parent=1 // pred_check
      _
    $region23: #{audio_ntt2020_forward.7} parent=1 // pred_check_branch
      %264 = sbr.rel (0) target = $region25
    $region24: #{audio_ntt2020_forward.7} parent=1 // pred_region
      %s266 = ssub.s32 32, 32
      %267 = vsyncadd [#allocation3], %s266
      %s269 = sshll.u32 [#allocation2], 4
      %s270 = int_to_ptr.vmem [resolvable:$true] %s269
      %272 = dma.vmem_to_hbm [thread:$0]  %s270, 32, %s5, [#allocation3]
    $region25: #{audio_ntt2020_forward.7} parent=1 // pred_fallthru
      _
    // Predicated region
    $region26: #{audio_ntt2020_forward.7} parent=1 // pred_check
      _
    $region27: #{audio_ntt2020_forward.7} parent=1 // pred_check_branch
      %274 = sbr.rel (0) target = $region29
    $region28: #{audio_ntt2020_forward.7} parent=1 // pred_region
      %275 = dma.done [#allocation3], 32
    $region29: #{audio_ntt2020_forward.7} parent=1 // pred_fallthru
      _
    %276 = vsyncpa [#allocation3], 1

</llo_original>
